<compile_context>
chip_gen: v5e
topology: v5e:2x2
jax: 0.10.0
libtpu: 0.0.40
codegen_flags: <defaults>
</compile_context>

<pallas_src>
import math

import jax
import jax.numpy as jnp
import numpy as np
from jax import lax
from jax.experimental import pallas as pl
from jax.experimental.pallas import tpu as pltpu


# ----------------------------------------------------------------------------
# Generation-aware VMEM budgets + tiling helpers
# ----------------------------------------------------------------------------

def _vmem_config():
    """(vmem_limit_bytes, tile_budget_bytes) — big on v5e/v6e (128 MiB), lean on v7x (64 MiB)."""
    cap = None
    try:
        info = pltpu.get_tpu_info()
        cap = getattr(info, "vmem_capacity_bytes", None)
    except Exception:
        cap = None
    if cap is None:
        cap = 64 * 1024 * 1024                      # assume the smallest (v7x-like) if unknown
    if cap >= 96 * 1024 * 1024:                     # v5e / v6e: 128 MiB physical VMEM
        return 96 * 1024 * 1024, 40 * 1024 * 1024
    return 48 * 1024 * 1024, 18 * 1024 * 1024       # v7x: 64 MiB physical VMEM


_VMEM_LIMIT, _TILE_BUDGET = _vmem_config()


def _round_up(x, m):
    return int(-(-int(x) // int(m)) * int(m))


def _choose_tile_m(m, bytes_per_row, budget, cap=512):
    """Largest M tile (multiple of 16 for bf16 sublane packing) that fits the byte budget."""
    bytes_per_row = max(int(bytes_per_row), 1)
    t = min(int(budget) // bytes_per_row, cap, m)
    if t >= m:
        return int(m)
    return int(max(16, (t // 16) * 16))


# ----------------------------------------------------------------------------
# Fused (LayerNorm?) -> bf16 Linear -> (activation?) -> (residual?) kernel
# ----------------------------------------------------------------------------

def _make_linear_kernel(activation, has_ln, ln_eps, has_res):
    def kernel(*refs):
        i = 0
        x_ref = refs[i]; i += 1
        if has_ln:
            g_ref, bln_ref = refs[i], refs[i + 1]; i += 2
        w_ref, b_ref = refs[i], refs[i + 1]; i += 2
        if has_res:
            r_ref = refs[i]; i += 1
        o_ref = refs[i]

        if has_ln:
            x = x_ref[...].astype(jnp.float32)
            mean = jnp.mean(x, axis=-1, keepdims=True)
            xc = x - mean
            var = jnp.mean(xc * xc, axis=-1, keepdims=True)
            x = (xc * lax.rsqrt(var + ln_eps)) * g_ref[...] + bln_ref[...]
            xb = x.astype(jnp.bfloat16)
        else:
            xb = x_ref[...].astype(jnp.bfloat16)

        # bf16 MXU matmul, f32 accumulation
        y = jnp.dot(xb, w_ref[...], preferred_element_type=jnp.float32) + b_ref[...]
        if activation == "relu":
            y = jnp.maximum(y, 0.0)
        elif activation == "gelu":
            # tanh-approx GELU (EUP slot).  TODO(synk): torch nn.GELU default is exact erf.
            y = jax.nn.gelu(y, approximate=True)
        if has_res:
            y = y + r_ref[...].astype(jnp.float32)
        o_ref[...] = y.astype(o_ref.dtype)
    return kernel


def pallas_linear(x2d, w, b, *, activation=None, ln=None, residual=None,
                  out_dtype=jnp.bfloat16):
    """y = [res +] act( LN?(x) @ w + b ) — bf16 MXU, f32 accumulate, tiled over rows."""
    m, kin = x2d.shape
    nout = w.shape[1]
    has_ln = ln is not None
    has_res = residual is not None
    w = w.astype(jnp.bfloat16)
    b = b.astype(jnp.float32)

    # N tiling: keep the (kin, tn) bf16 weight resident across the inner M sweep; split N
    # (256-multiples for the 2x256^2 MXUs) only when the full weight won't fit the budget.
    w_bytes = kin * nout * 2
    if 2 * w_bytes <= _TILE_BUDGET // 2 or nout <= 256:
        tn = nout
    else:
        tn = ((_TILE_BUDGET // 2) // (2 * kin * 2)) // 256 * 256
        tn = int(max(256, min(tn, nout)))

    x_bytes = jnp.dtype(x2d.dtype).itemsize
    o_bytes = jnp.dtype(out_dtype).itemsize
    r_bytes = jnp.dtype(residual.dtype).itemsize if has_res else 0
    fixed = 2 * (kin * tn * 2 + tn * 4) + (4 * 4 * kin if has_ln else 0)
    per_row = 2 * (kin * x_bytes + tn * o_bytes + tn * r_bytes)
    tm = _choose_tile_m(m, per_row, max(_TILE_BUDGET - fixed, 16 * per_row))

    nn = pl.cdiv(nout, tn)
    nm = pl.cdiv(m, tm)

    in_specs = [pl.BlockSpec((tm, kin), lambda j, i: (i, 0))]
    args = [x2d]
    eps = 0.0
    if has_ln:
        gamma, beta, eps = ln
        in_specs += [pl.BlockSpec((1, kin), lambda j, i: (0, 0)),
                     pl.BlockSpec((1, kin), lambda j, i: (0, 0))]
        args += [gamma.reshape(1, kin).astype(jnp.float32),
                 beta.reshape(1, kin).astype(jnp.float32)]
    in_specs += [pl.BlockSpec((kin, tn), lambda j, i: (0, j)),
                 pl.BlockSpec((1, tn), lambda j, i: (0, j))]
    args += [w, b.reshape(1, nout)]
    if has_res:
        in_specs += [pl.BlockSpec((tm, tn), lambda j, i: (i, j))]
        args += [residual]

    kernel = _make_linear_kernel(activation, has_ln, float(eps), has_res)
    return pl.pallas_call(
        kernel,
        out_shape=jax.ShapeDtypeStruct((m, nout), out_dtype),
        grid=(nn, nm),
        in_specs=in_specs,
        out_specs=pl.BlockSpec((tm, tn), lambda j, i: (i, j)),
        compiler_params=pltpu.CompilerParams(
            dimension_semantics=("parallel", "parallel"),
            vmem_limit_bytes=_VMEM_LIMIT),
    )(*args)


# ----------------------------------------------------------------------------
# Spatial multi-head neighbor attention (all heads fused, online softmax over K tiles)
# ----------------------------------------------------------------------------

_NEG = -1e30  # finite "-inf" for masking (avoids inf-inf NaNs in the online softmax)


def _make_attn_kernel(head_dim, k_per_head, inv_sigma, kmax_pad):
    d = head_dim
    H = len(k_per_head)

    def kernel(q_ref, k_ref, v_ref, kn_ref, pr_ref, o_ref, m_sc, l_sc, acc_sc):
        j = pl.program_id(1)
        nk = pl.num_programs(1)

        @pl.when(j == 0)
        def _():
            m_sc[...] = jnp.full_like(m_sc, _NEG)
            l_sc[...] = jnp.zeros_like(l_sc)
            acc_sc[...] = jnp.zeros_like(acc_sc)

        q = q_ref[...]                                   # (tm, C) bf16
        ksel = k_ref[...]                                # (tm, tk, C) bf16
        vsel = v_ref[...]                                # (tm, tk, C) bf16
        knorm = kn_ref[...]                              # (tm, H, tk) f32 (precomputed ||k||^2)
        prior = pr_ref[...]                              # (tm, H, tk) f32 (precomputed decay prior)
        tm, tk = prior.shape[0], prior.shape[2]
        nbr = j * tk + lax.broadcasted_iota(jnp.int32, (tm, tk), 1)

        m_prev = m_sc[...]                               # (tm, H)
        l_prev = l_sc[...]
        acc_prev = acc_sc[...]                           # (tm, C)

        m_cols, l_cols, acc_cols = [], [], []
        for h, kh in enumerate(k_per_head):
            lo, hi = h * d, (h + 1) * d
            q_h = q[:, lo:hi].astype(jnp.float32)        # (tm, d)
            k_h = ksel[:, :, lo:hi].astype(jnp.float32)  # (tm, tk, d)
            v_h = vsel[:, :, lo:hi].astype(jnp.float32)

            # q . k / sigma  - 0.5*||k||^2/sigma + log(exp(-lam*d)+eps)
            # (the -0.5*||q||^2/sigma term of the reference is softmax-invariant → dropped)
            s = jnp.sum(q_h[:, None, :] * k_h, axis=-1) * inv_sigma
            s = s - 0.5 * inv_sigma * knorm[:, h, :]
            s = s + prior[:, h, :]
            if kh < kmax_pad:                            # per-head neighbor budget
                s = jnp.where(nbr < kh, s, _NEG)

            m_old = m_prev[:, h:h + 1]
            m_new = jnp.maximum(m_old, jnp.max(s, axis=-1, keepdims=True))
            alpha = jnp.exp(m_old - m_new)
            p = jnp.exp(s - m_new)
            l_cols.append(alpha * l_prev[:, h:h + 1] + jnp.sum(p, axis=-1, keepdims=True))
            acc_cols.append(alpha * acc_prev[:, lo:hi] + jnp.sum(p[:, :, None] * v_h, axis=1))
            m_cols.append(m_new)

        m_sc[...] = jnp.concatenate(m_cols, axis=-1)
        l_sc[...] = jnp.concatenate(l_cols, axis=-1)
        acc_sc[...] = jnp.concatenate(acc_cols, axis=-1)

        @pl.when(j == nk - 1)
        def _():
            inv_l = pl.reciprocal(l_sc[...], approx=True)          # (tm, H)
            outs = [acc_sc[:, h * d:(h + 1) * d] * inv_l[:, h:h + 1] for h in range(H)]
            o_ref[...] = jnp.concatenate(outs, axis=-1).astype(o_ref.dtype)
    return kernel


def pallas_spatial_attention(q2d, ksel, vsel, knorm, prior, *, head_dim, k_per_head,
                             sigma, tk):
    M, C = q2d.shape
    kmax_pad = ksel.shape[1]
    H = len(k_per_head)
    nk = kmax_pad // tk

    per_row = (2 * 2 * C * 2                 # q + out (bf16, double-buffered)
               + C * 4 + 2 * H * 4           # acc / m / l scratch
               + 2 * 2 * (tk * C * 2)        # ksel + vsel tiles (bf16, double-buffered)
               + 2 * 2 * (H * tk * 4))       # knorm + prior tiles (f32, double-buffered)
    tm = _choose_tile_m(M, per_row, _TILE_BUDGET)
    nm = pl.cdiv(M, tm)

    kernel = _make_attn_kernel(head_dim, tuple(int(k) for k in k_per_head),
                               1.0 / float(sigma), kmax_pad)
    return pl.pallas_call(
        kernel,
        out_shape=jax.ShapeDtypeStruct((M, C), jnp.bfloat16),
        grid=(nm, nk),
        in_specs=[pl.BlockSpec((tm, C), lambda i, j: (i, 0)),
                  pl.BlockSpec((tm, tk, C), lambda i, j: (i, j, 0)),
                  pl.BlockSpec((tm, tk, C), lambda i, j: (i, j, 0)),
                  pl.BlockSpec((tm, H, tk), lambda i, j: (i, 0, j)),
                  pl.BlockSpec((tm, H, tk), lambda i, j: (i, 0, j))],
        out_specs=pl.BlockSpec((tm, C), lambda i, j: (i, 0)),
        scratch_shapes=[pltpu.VMEM((tm, H), jnp.float32),
                        pltpu.VMEM((tm, H), jnp.float32),
                        pltpu.VMEM((tm, C), jnp.float32)],
        compiler_params=pltpu.CompilerParams(
            dimension_semantics=("parallel", "arbitrary"),
            vmem_limit_bytes=_VMEM_LIMIT),
    )(q2d, ksel, vsel, knorm, prior)


# ----------------------------------------------------------------------------
# Model (parameter setup + forward orchestration; compute lives in the kernels)
# ----------------------------------------------------------------------------

def _linear_init(key, fan_in, fan_out):
    kw, kb = jax.random.split(key)
    bound = 1.0 / math.sqrt(fan_in)
    w = jax.random.uniform(kw, (fan_in, fan_out), jnp.float32, -bound, bound)
    b = jax.random.uniform(kb, (fan_out,), jnp.float32, -bound, bound)
    return w.astype(jnp.bfloat16), b          # weights stored in bf16 (MXU dtype)


class SpatialMHAMILPallas:
    def __init__(self, key, num_classes, embed_dim, attn_dim, num_heads, depth,
                 num_layers_adapter, qkv_bias=True, reg_terms=None, mlp_ratio=4.0,
                 pool_type="cls_token"):
        reg_terms = reg_terms or {"DECAY_TYPE": "exp", "DECAY_CLIP": 0.3}
        dim = attn_dim * num_heads                    # attn_dim = attn_dim * num_heads (torch)
        self.dim = dim
        self.num_heads = num_heads
        self.head_dim = dim // num_heads
        self.depth = depth
        self.pool_type = pool_type
        hidden = int(dim * mlp_ratio)

        # TODO(synk): DecayNetwork / solve_for_local_k source not provided; implemented as a
        # per-head exponential decay exp(-lambda_h * distance) with lambda_h = softplus(lambda_p),
        # and local_k solved from exp(-lambda * r) = DECAY_CLIP, num_elements = round(pi*local_k^2).
        lambda_p = np.linspace(0.3, 1.2, num_heads).astype(np.float64)
        self.lam = np.log1p(np.exp(lambda_p))                      # softplus reparam
        decay_clip = float(reg_terms["DECAY_CLIP"])
        local_k = -np.log(decay_clip) / self.lam
        self.num_elements = np.round(np.pi * local_k ** 2).astype(np.int64)

        keys = iter(jax.random.split(key, 16 + 8 * depth))
        p = {}
        # TODO(synk): ResidualFullyConnected source not provided; implemented as
        # Linear(embed_dim->dim)+ReLU followed by numLayer_Res residual ReLU-linear blocks.
        p["adapter_in_w"], p["adapter_in_b"] = _linear_init(next(keys), embed_dim, dim)
        p["adapter_res"] = [_linear_init(next(keys), dim, dim) for _ in range(num_layers_adapter)]
        p["cls_token"] = jax.random.normal(next(keys), (1, 1, dim), jnp.float32) * 1e-6

        blocks = []
        for _ in range(depth):
            blk = {}
            blk["norm1_g"] = jnp.ones((dim,), jnp.float32)
            blk["norm1_b"] = jnp.zeros((dim,), jnp.float32)
            blk["qkv_w"], qkv_b = _linear_init(next(keys), dim, 3 * dim)
            blk["qkv_b"] = qkv_b if qkv_bias else jnp.zeros((3 * dim,), jnp.float32)
            blk["proj_w"], blk["proj_b"] = _linear_init(next(keys), dim, dim)
            blk["norm2_g"] = jnp.ones((dim,), jnp.float32)
            blk["norm2_b"] = jnp.zeros((dim,), jnp.float32)
            blk["fc1_w"], blk["fc1_b"] = _linear_init(next(keys), dim, hidden)
            blk["fc2_w"], blk["fc2_b"] = _linear_init(next(keys), hidden, dim)
            blocks.append(blk)
        p["blocks"] = blocks

        p["final_norm_g"] = jnp.ones((dim,), jnp.float32)
        p["final_norm_b"] = jnp.zeros((dim,), jnp.float32)
        p["head_w"], p["head_b"] = _linear_init(next(keys), dim, num_classes)
        self.params = p

    # ---- SpatialBlock ----
    def _block(self, p, x, idxk, prior, k_per_head, tk):
        B, Ntot, C = x.shape
        H, d = self.num_heads, self.head_dim
        M = B * Ntot
        sigma = math.sqrt(d)                                       # "sigma_sq" in the torch code
        x2d = x.reshape(M, C)

        # norm1 + qkv fused; columns laid out as (3, H, d) so we slice instead of transpose.
        qkv = pallas_linear(x2d, p["qkv_w"], p["qkv_b"],
                            ln=(p["norm1_g"], p["norm1_b"], 1e-5))
        q2d = qkv[:, :C]
        k3 = qkv[:, C:2 * C].reshape(B, Ntot, C)
        v3 = qkv[:, 2 * C:].reshape(B, Ntot, C)

        # ||k||^2 per token per head, computed once per token and gathered with the neighbors
        # (instead of re-normalizing every gathered key per query inside the kernel).
        k_norm = jnp.sum(jnp.square(k3.astype(jnp.float32)).reshape(B, Ntot, H, d), axis=-1)

        # One gather (shared by all heads) of the K_max nearest neighbors in bf16; indices are
        # NOT shifted after the cls-token prepend, exactly as in the torch reference.
        # TODO(synk): move this gather into the kernel via scalar-prefetched indices + manual DMA.
        bidx = jnp.arange(B)[:, None, None]
        ksel = k3[bidx, idxk]                                      # (B, Ntot, Kpad, C) bf16
        vsel = v3[bidx, idxk]
        knsel = jnp.moveaxis(k_norm[bidx, idxk], -1, -2)           # (B, Ntot, H, Kpad) f32

        kmax_pad = idxk.shape[-1]
        attn = pallas_spatial_attention(
            q2d, ksel.reshape(M, kmax_pad, C), vsel.reshape(M, kmax_pad, C),
            knsel.reshape(M, H, kmax_pad), prior,
            head_dim=d, k_per_head=k_per_head, sigma=sigma, tk=tk)

        # attention projection with the residual add fused into its epilogue
        x2d = pallas_linear(attn, p["proj_w"], p["proj_b"], residual=x2d)

        # MLP: norm2 fused into fc1 (GELU epilogue); residual add fused into fc2.
        h1 = pallas_linear(x2d, p["fc1_w"], p["fc1_b"],
                           ln=(p["norm2_g"], p["norm2_b"], 1e-5), activation="gelu")
        x2d = pallas_linear(h1, p["fc2_w"], p["fc2_b"], residual=x2d)
        return x2d.reshape(B, Ntot, C)

    # ---- full forward (dropouts / DropPath / LayerScale are identity: inference, rates=0) ----
    def forward(self, params, x, row, col, distance, indices):
        del row, col  # unused for pool_type == 'cls_token' (same as the torch module)
        B, N, E = x.shape
        dim = self.dim
        H = self.num_heads
        Ntot = N + 1
        M = B * Ntot

        # adapter (ResidualFullyConnected) — residual adds fused into each linear's epilogue
        h2d = pallas_linear(x.reshape(B * N, E), params["adapter_in_w"],
                            params["adapter_in_b"], activation="relu")
        for (w, b) in params["adapter_res"]:
            h2d = pallas_linear(h2d, w, b, activation="relu", residual=h2d)
        h = h2d.reshape(B, N, dim)

        # pos_embed: prepend cls token
        cls = jnp.broadcast_to(params["cls_token"].astype(h.dtype), (B, 1, dim))
        h = jnp.concatenate([cls, h], axis=1)

        # modify_distance_for_class_token: prepend a zero row and zero column (values unshifted,
        # matching the torch reference).
        dist_pad = jnp.pad(distance, ((0, 0), (1, 0), (1, 0)))
        idx_pad = jnp.pad(indices, ((0, 0), (1, 0), (1, 0)))

        # Per-head neighbor counts; pad Kmax to a K-tile multiple (padded slots are masked).
        k_per_head = [int(np.clip(self.num_elements[hh], 1, Ntot)) for hh in range(H)]
        kmax = max(k_per_head)
        kmax8 = _round_up(kmax, 8)
        tk = kmax8 if kmax8 <= 256 else 128
        kmax_pad = _round_up(kmax, tk)

        idxk = idx_pad[:, :, :kmax]
        if kmax_pad > kmax:
            idxk = jnp.pad(idxk, ((0, 0), (0, 0), (0, kmax_pad - kmax)))

        # Distance gather + per-head decay prior hoisted OUT of the depth loop (distance and
        # indices never change across layers).
        dsel = jnp.take_along_axis(dist_pad, idxk, axis=-1).astype(jnp.float32)   # (B,Ntot,Kpad)
        lam = jnp.asarray(self.lam, jnp.float32)                                  # (H,)
        prior = jnp.log(jnp.exp(-lam[None, None, :, None] * dsel[:, :, None, :]) + 1e-6)
        prior = prior.reshape(M, H, kmax_pad)

        for blk in params["blocks"]:
            h = self._block(blk, h, idxk, prior, k_per_head, tk)

        # Final LayerNorm is row-wise, so LN(pool(x)) == pool(LN(x)); pool first and fuse the
        # final LN into the classification-head matmul (one tiny kernel on (B, dim)).
        pooled = h[:, 0]                                            # cls_token pooling
        logits = pallas_linear(pooled, params["head_w"], params["head_b"],
                               ln=(params["final_norm_g"], params["final_norm_b"], 1e-6),
                               out_dtype=jnp.float32)
        return logits


# ----------------------------------------------------------------------------
# Demo / smoke test
# ----------------------------------------------------------------------------

if __name__ == "__main__":
    key = jax.random.PRNGKey(0)
    k_model, k_x, k_r, k_c = jax.random.split(key, 4)

    B, N = 2, 8                 # batch of bags, instances per bag
    embed_dim = 16              # input feature dim
    attn_dim_per_head = 8
    num_heads = 2               # -> attention dim = 16
    depth = 2
    num_classes = 3
    num_layers_adapter = 1

    model = SpatialMHAMILPallas(
        k_model, num_classes=num_classes, embed_dim=embed_dim, attn_dim=attn_dim_per_head,
        num_heads=num_heads, depth=depth, num_layers_adapter=num_layers_adapter,
        qkv_bias=True, reg_terms={"DECAY_TYPE": "exp", "DECAY_CLIP": 0.3},
        mlp_ratio=4.0, pool_type="cls_token")

    x = jax.random.normal(k_x, (B, N, embed_dim), jnp.float32)
    row = jax.random.randint(k_r, (B, N), 0, 32).astype(jnp.float32)
    col = jax.random.randint(k_c, (B, N), 0, 32).astype(jnp.float32)
    dr = row[:, :, None] - row[:, None, :]
    dc = col[:, :, None] - col[:, None, :]
    distance = jnp.sqrt(dr * dr + dc * dc)                          # (B, N, N)
    indices = jnp.argsort(distance, axis=-1).astype(jnp.int32)      # (B, N, N) sorted-by-distance

    fwd = jax.jit(lambda xx, dd, ii: model.forward(model.params, xx, row, col, dd, ii))
    out = fwd(x, distance, indices)
    out = jax.block_until_ready(out)

    assert out.shape == (B, num_classes), out.shape
    assert bool(jnp.all(jnp.isfinite(out)))
    print("KERNEL_OK")
</pallas_src>

<mosaic_0001>
module attributes {stable_mosaic.version = 11 : i64} {
  func.func @kernel(%arg0: i32, %arg1: i32, %arg2: memref<16x16xbf16, #tpu.memory_space<vmem>>, %arg3: memref<16x16xbf16, #tpu.memory_space<vmem>>, %arg4: memref<1x16xf32, #tpu.memory_space<vmem>>, %arg5: memref<16x16xbf16, #tpu.memory_space<vmem>>, %arg6: memref<16x16xbf16, #tpu.memory_space<vmem>>) attributes {dimension_semantics = [#tpu.dimension_semantics<parallel>, #tpu.dimension_semantics<parallel>], iteration_bounds = array<i64: 1, 1>, scalar_prefetch = 0 : i64, scratch_operands = 0 : i64, tpu.core_type = #tpu.core_type<tc>, window_params = [{transform_indices = @transform_0, window_bounds = array<i64: 16, 16>}, {transform_indices = @transform_1, window_bounds = array<i64: 16, 16>}, {transform_indices = @transform_2, window_bounds = array<i64: 1, 16>}, {transform_indices = @transform_3, window_bounds = array<i64: 16, 16>}, {transform_indices = @transform_4, window_bounds = array<i64: 16, 16>}]} {
    %c0 = arith.constant 0 : index
    %c0_0 = arith.constant 0 : index
    %0 = vector.load %arg2[%c0, %c0_0] : memref<16x16xbf16, #tpu.memory_space<vmem>>, vector<16x16xbf16>
    %c0_1 = arith.constant 0 : index
    %c0_2 = arith.constant 0 : index
    %1 = vector.load %arg3[%c0_1, %c0_2] : memref<16x16xbf16, #tpu.memory_space<vmem>>, vector<16x16xbf16>
    %cst = arith.constant dense<0.000000e+00> : vector<16x16xf32>
    %2 = tpu.matmul %0, %1, %cst {dimension_numbers = #tpu.dot_dimension_numbers<[1], [0], [0], [1], [0, 0, 1, 1], [], []>} : vector<16x16xbf16>, vector<16x16xbf16>, vector<16x16xf32> -> vector<16x16xf32>
    %c0_3 = arith.constant 0 : index
    %c0_4 = arith.constant 0 : index
    %3 = vector.load %arg4[%c0_3, %c0_4] : memref<1x16xf32, #tpu.memory_space<vmem>>, vector<1x16xf32>
    %4 = vector.broadcast %3 : vector<1x16xf32> to vector<16x16xf32>
    %5 = arith.addf %2, %4 : vector<16x16xf32>
    %cst_5 = arith.constant 0.000000e+00 : f32
    %6 = vector.broadcast %cst_5 : f32 to vector<16x16xf32>
    %7 = arith.maximumf %5, %6 : vector<16x16xf32>
    %c0_6 = arith.constant 0 : index
    %c0_7 = arith.constant 0 : index
    %8 = vector.load %arg5[%c0_6, %c0_7] : memref<16x16xbf16, #tpu.memory_space<vmem>>, vector<16x16xbf16>
    %9 = arith.extf %8 : vector<16x16xbf16> to vector<16x16xf32>
    %10 = arith.addf %7, %9 : vector<16x16xf32>
    %11 = arith.truncf %10 : vector<16x16xf32> to vector<16x16xbf16>
    %c0_8 = arith.constant 0 : index
    %c0_9 = arith.constant 0 : index
    %12 = vector.load %arg6[%c0_8, %c0_9] : memref<16x16xbf16, #tpu.memory_space<vmem>>, vector<16x16xbf16>
    tpu.vector_store %arg6[%c0_8, %c0_9], %11 {strides = array<i32>} : memref<16x16xbf16, #tpu.memory_space<vmem>>, vector<16x16xbf16>,
    return
  }
  func.func @transform_0(%arg0: i32, %arg1: i32) -> (i32, i32) {
    %c0_i32 = arith.constant 0 : i32
    %c0_i32_0 = arith.constant 0 : i32
    return %arg1, %c0_i32 : i32, i32
  }
  func.func @transform_1(%arg0: i32, %arg1: i32) -> (i32, i32) {
    %c0_i32 = arith.constant 0 : i32
    %c0_i32_0 = arith.constant 0 : i32
    return %c0_i32, %arg0 : i32, i32
  }
  func.func @transform_2(%arg0: i32, %arg1: i32) -> (i32, i32) {
    %c0_i32 = arith.constant 0 : i32
    %c0_i32_0 = arith.constant 0 : i32
    return %c0_i32, %arg0 : i32, i32
  }
  func.func @transform_3(%arg0: i32, %arg1: i32) -> (i32, i32) {
    %c0_i32 = arith.constant 0 : i32
    return %arg1, %arg0 : i32, i32
  }
  func.func @transform_4(%arg0: i32, %arg1: i32) -> (i32, i32) {
    %c0_i32 = arith.constant 0 : i32
    return %arg1, %arg0 : i32, i32
  }
}

module attributes {stable_mosaic.version = 11 : i64} {
  func.func @kernel(%arg0: i32, %arg1: i32, %arg2: memref<16x16xf32, #tpu.memory_space<vmem>>, %arg3: memref<16x16xbf16, #tpu.memory_space<vmem>>, %arg4: memref<1x16xf32, #tpu.memory_space<vmem>>, %arg5: memref<16x16xbf16, #tpu.memory_space<vmem>>) attributes {dimension_semantics = [#tpu.dimension_semantics<parallel>, #tpu.dimension_semantics<parallel>], iteration_bounds = array<i64: 1, 1>, scalar_prefetch = 0 : i64, scratch_operands = 0 : i64, tpu.core_type = #tpu.core_type<tc>, window_params = [{transform_indices = @transform_0, window_bounds = array<i64: 16, 16>}, {transform_indices = @transform_1, window_bounds = array<i64: 16, 16>}, {transform_indices = @transform_2, window_bounds = array<i64: 1, 16>}, {transform_indices = @transform_3, window_bounds = array<i64: 16, 16>}]} {
    %c0 = arith.constant 0 : index
    %c0_0 = arith.constant 0 : index
    %0 = vector.load %arg2[%c0, %c0_0] : memref<16x16xf32, #tpu.memory_space<vmem>>, vector<16x16xf32>
    %1 = arith.truncf %0 : vector<16x16xf32> to vector<16x16xbf16>
    %c0_1 = arith.constant 0 : index
    %c0_2 = arith.constant 0 : index
    %2 = vector.load %arg3[%c0_1, %c0_2] : memref<16x16xbf16, #tpu.memory_space<vmem>>, vector<16x16xbf16>
    %cst = arith.constant dense<0.000000e+00> : vector<16x16xf32>
    %3 = tpu.matmul %1, %2, %cst {dimension_numbers = #tpu.dot_dimension_numbers<[1], [0], [0], [1], [0, 0, 1, 1], [], []>} : vector<16x16xbf16>, vector<16x16xbf16>, vector<16x16xf32> -> vector<16x16xf32>
    %c0_3 = arith.constant 0 : index
    %c0_4 = arith.constant 0 : index
    %4 = vector.load %arg4[%c0_3, %c0_4] : memref<1x16xf32, #tpu.memory_space<vmem>>, vector<1x16xf32>
    %5 = vector.broadcast %4 : vector<1x16xf32> to vector<16x16xf32>
    %6 = arith.addf %3, %5 : vector<16x16xf32>
    %cst_5 = arith.constant 0.000000e+00 : f32
    %7 = vector.broadcast %cst_5 : f32 to vector<16x16xf32>
    %8 = arith.maximumf %6, %7 : vector<16x16xf32>
    %9 = arith.truncf %8 : vector<16x16xf32> to vector<16x16xbf16>
    %c0_6 = arith.constant 0 : index
    %c0_7 = arith.constant 0 : index
    %10 = vector.load %arg5[%c0_6, %c0_7] : memref<16x16xbf16, #tpu.memory_space<vmem>>, vector<16x16xbf16>
    tpu.vector_store %arg5[%c0_6, %c0_7], %9 {strides = array<i32>} : memref<16x16xbf16, #tpu.memory_space<vmem>>, vector<16x16xbf16>,
    return
  }
  func.func @transform_0(%arg0: i32, %arg1: i32) -> (i32, i32) {
    %c0_i32 = arith.constant 0 : i32
    %c0_i32_0 = arith.constant 0 : i32
    return %arg1, %c0_i32 : i32, i32
  }
  func.func @transform_1(%arg0: i32, %arg1: i32) -> (i32, i32) {
    %c0_i32 = arith.constant 0 : i32
    %c0_i32_0 = arith.constant 0 : i32
    return %c0_i32, %arg0 : i32, i32
  }
  func.func @transform_2(%arg0: i32, %arg1: i32) -> (i32, i32) {
    %c0_i32 = arith.constant 0 : i32
    %c0_i32_0 = arith.constant 0 : i32
    return %c0_i32, %arg0 : i32, i32
  }
  func.func @transform_3(%arg0: i32, %arg1: i32) -> (i32, i32) {
    %c0_i32 = arith.constant 0 : i32
    return %arg1, %arg0 : i32, i32
  }
}

module attributes {stable_mosaic.version = 11 : i64} {
  func.func @kernel(%arg0: i32, %arg1: i32, %arg2: memref<18x16xbf16, #tpu.memory_space<vmem>>, %arg3: memref<1x16xf32, #tpu.memory_space<vmem>>, %arg4: memref<1x16xf32, #tpu.memory_space<vmem>>, %arg5: memref<16x48xbf16, #tpu.memory_space<vmem>>, %arg6: memref<1x48xf32, #tpu.memory_space<vmem>>, %arg7: memref<18x48xbf16, #tpu.memory_space<vmem>>) attributes {dimension_semantics = [#tpu.dimension_semantics<parallel>, #tpu.dimension_semantics<parallel>], iteration_bounds = array<i64: 1, 1>, scalar_prefetch = 0 : i64, scratch_operands = 0 : i64, tpu.core_type = #tpu.core_type<tc>, window_params = [{transform_indices = @transform_0, window_bounds = array<i64: 18, 16>}, {pipeline_mode = #tpu.pipeline_mode<synchronous>, transform_indices = @transform_1, window_bounds = array<i64: 1, 16>}, {pipeline_mode = #tpu.pipeline_mode<synchronous>, transform_indices = @transform_2, window_bounds = array<i64: 1, 16>}, {transform_indices = @transform_3, window_bounds = array<i64: 16, 48>}, {transform_indices = @transform_4, window_bounds = array<i64: 1, 48>}, {transform_indices = @transform_5, window_bounds = array<i64: 18, 48>}]} {
    %c0 = arith.constant 0 : index
    %c0_0 = arith.constant 0 : index
    %0 = vector.load %arg2[%c0, %c0_0] : memref<18x16xbf16, #tpu.memory_space<vmem>>, vector<18x16xbf16>
    %1 = arith.extf %0 : vector<18x16xbf16> to vector<18x16xf32>
    %cst = arith.constant dense<0.000000e+00> : vector<18xf32>
    %2 = vector.multi_reduction <add>, %1, %cst [1] : vector<18x16xf32> to vector<18xf32>
    %3 = vector.shape_cast %2 : vector<18xf32> to vector<18x1xf32>
    %cst_1 = arith.constant 1.600000e+01 : f32
    %4 = vector.broadcast %cst_1 : f32 to vector<18x1xf32>
    %5 = arith.divf %3, %4 : vector<18x1xf32>
    %6 = vector.broadcast %5 : vector<18x1xf32> to vector<18x16xf32>
    %7 = arith.subf %1, %6 : vector<18x16xf32>
    %8 = arith.mulf %7, %7 : vector<18x16xf32>
    %cst_2 = arith.constant dense<0.000000e+00> : vector<18xf32>
    %9 = vector.multi_reduction <add>, %8, %cst_2 [1] : vector<18x16xf32> to vector<18xf32>
    %10 = vector.shape_cast %9 : vector<18xf32> to vector<18x1xf32>
    %cst_3 = arith.constant 1.600000e+01 : f32
    %11 = vector.broadcast %cst_3 : f32 to vector<18x1xf32>
    %12 = arith.divf %10, %11 : vector<18x1xf32>
    %cst_4 = arith.constant 9.99999974E-6 : f32
    %13 = vector.broadcast %cst_4 : f32 to vector<18x1xf32>
    %14 = arith.addf %12, %13 : vector<18x1xf32>
    %15 = math.rsqrt %14 : vector<18x1xf32>
    %16 = vector.broadcast %15 : vector<18x1xf32> to vector<18x16xf32>
    %17 = arith.mulf %7, %16 : vector<18x16xf32>
    %c0_5 = arith.constant 0 : index
    %c0_6 = arith.constant 0 : index
    %18 = vector.load %arg3[%c0_5, %c0_6] : memref<1x16xf32, #tpu.memory_space<vmem>>, vector<1x16xf32>
    %19 = vector.broadcast %18 : vector<1x16xf32> to vector<18x16xf32>
    %20 = arith.mulf %17, %19 : vector<18x16xf32>
    %c0_7 = arith.constant 0 : index
    %c0_8 = arith.constant 0 : index
    %21 = vector.load %arg4[%c0_7, %c0_8] : memref<1x16xf32, #tpu.memory_space<vmem>>, vector<1x16xf32>
    %22 = vector.broadcast %21 : vector<1x16xf32> to vector<18x16xf32>
    %23 = arith.addf %20, %22 : vector<18x16xf32>
    %24 = arith.truncf %23 : vector<18x16xf32> to vector<18x16xbf16>
    %c0_9 = arith.constant 0 : index
    %c0_10 = arith.constant 0 : index
    %25 = vector.load %arg5[%c0_9, %c0_10] : memref<16x48xbf16, #tpu.memory_space<vmem>>, vector<16x48xbf16>
    %cst_11 = arith.constant dense<0.000000e+00> : vector<18x48xf32>
    %26 = tpu.matmul %24, %25, %cst_11 {dimension_numbers = #tpu.dot_dimension_numbers<[1], [0], [0], [1], [0, 0, 1, 1], [], []>} : vector<18x16xbf16>, vector<16x48xbf16>, vector<18x48xf32> -> vector<18x48xf32>
    %c0_12 = arith.constant 0 : index
    %c0_13 = arith.constant 0 : index
    %27 = vector.load %arg6[%c0_12, %c0_13] : memref<1x48xf32, #tpu.memory_space<vmem>>, vector<1x48xf32>
    %28 = vector.broadcast %27 : vector<1x48xf32> to vector<18x48xf32>
    %29 = arith.addf %26, %28 : vector<18x48xf32>
    %30 = arith.truncf %29 : vector<18x48xf32> to vector<18x48xbf16>
    %c0_14 = arith.constant 0 : index
    %c0_15 = arith.constant 0 : index
    %31 = vector.load %arg7[%c0_14, %c0_15] : memref<18x48xbf16, #tpu.memory_space<vmem>>, vector<18x48xbf16>
    tpu.vector_store %arg7[%c0_14, %c0_15], %30 {strides = array<i32>} : memref<18x48xbf16, #tpu.memory_space<vmem>>, vector<18x48xbf16>,
    return
  }
  func.func @transform_0(%arg0: i32, %arg1: i32) -> (i32, i32) {
    %c0_i32 = arith.constant 0 : i32
    %c0_i32_0 = arith.constant 0 : i32
    return %arg1, %c0_i32 : i32, i32
  }
  func.func @transform_1(%arg0: i32, %arg1: i32) -> (i32, i32) {
    %c0_i32 = arith.constant 0 : i32
    %c0_i32_0 = arith.constant 0 : i32
    %c0_i32_1 = arith.constant 0 : i32
    return %c0_i32, %c0_i32_0 : i32, i32
  }
  func.func @transform_2(%arg0: i32, %arg1: i32) -> (i32, i32) {
    %c0_i32 = arith.constant 0 : i32
    %c0_i32_0 = arith.constant 0 : i32
    %c0_i32_1 = arith.constant 0 : i32
    return %c0_i32, %c0_i32_0 : i32, i32
  }
  func.func @transform_3(%arg0: i32, %arg1: i32) -> (i32, i32) {
    %c0_i32 = arith.constant 0 : i32
    %c0_i32_0 = arith.constant 0 : i32
    return %c0_i32, %arg0 : i32, i32
  }
  func.func @transform_4(%arg0: i32, %arg1: i32) -> (i32, i32) {
    %c0_i32 = arith.constant 0 : i32
    %c0_i32_0 = arith.constant 0 : i32
    return %c0_i32, %arg0 : i32, i32
  }
  func.func @transform_5(%arg0: i32, %arg1: i32) -> (i32, i32) {
    %c0_i32 = arith.constant 0 : i32
    return %arg1, %arg0 : i32, i32
  }
}

module attributes {stable_mosaic.version = 11 : i64} {
  func.func @kernel(%arg0: i32, %arg1: i32, %arg2: memref<18x16xbf16, #tpu.memory_space<vmem>>, %arg3: memref<18x8x16xbf16, #tpu.memory_space<vmem>>, %arg4: memref<18x8x16xbf16, #tpu.memory_space<vmem>>, %arg5: memref<18x2x8xf32, #tpu.memory_space<vmem>>, %arg6: memref<18x2x8xf32, #tpu.memory_space<vmem>>, %arg7: memref<18x16xbf16, #tpu.memory_space<vmem>>, %arg8: memref<18x2xf32, #tpu.memory_space<vmem>>, %arg9: memref<18x2xf32, #tpu.memory_space<vmem>>, %arg10: memref<18x16xf32, #tpu.memory_space<vmem>>) attributes {dimension_semantics = [#tpu.dimension_semantics<parallel>, #tpu.dimension_semantics<arbitrary>], iteration_bounds = array<i64: 1, 1>, scalar_prefetch = 0 : i64, scratch_operands = 3 : i64, tpu.core_type = #tpu.core_type<tc>, window_params = [{transform_indices = @transform_0, window_bounds = array<i64: 18, 16>}, {transform_indices = @transform_1, window_bounds = array<i64: 18, 8, 16>}, {transform_indices = @transform_2, window_bounds = array<i64: 18, 8, 16>}, {transform_indices = @transform_3, window_bounds = array<i64: 18, 2, 8>}, {transform_indices = @transform_4, window_bounds = array<i64: 18, 2, 8>}, {transform_indices = @transform_5, window_bounds = array<i64: 18, 16>}]} {
    %c0_i32 = arith.constant 0 : i32
    %0 = arith.cmpi eq, %arg1, %c0_i32 : i32
    %1 = arith.extui %0 : i1 to i32
    %c0_i32_0 = arith.constant 0 : i32
    %2 = arith.cmpi ne, %1, %c0_i32_0 : i32
    scf.if %2 {
      %cst_41 = arith.constant -1.000000e+30 : f32
      %116 = vector.broadcast %cst_41 : f32 to vector<18x2xf32>
      %c0_42 = arith.constant 0 : index
      %c0_43 = arith.constant 0 : index
      %117 = vector.load %arg8[%c0_42, %c0_43] : memref<18x2xf32, #tpu.memory_space<vmem>>, vector<18x2xf32>
      tpu.vector_store %arg8[%c0_42, %c0_43], %116 {strides = array<i32>} : memref<18x2xf32, #tpu.memory_space<vmem>>, vector<18x2xf32>,
      %cst_44 = arith.constant 0.000000e+00 : f32
      %118 = vector.broadcast %cst_44 : f32 to vector<18x2xf32>
      %c0_45 = arith.constant 0 : index
      %c0_46 = arith.constant 0 : index
      %119 = vector.load %arg9[%c0_45, %c0_46] : memref<18x2xf32, #tpu.memory_space<vmem>>, vector<18x2xf32>
      tpu.vector_store %arg9[%c0_45, %c0_46], %118 {strides = array<i32>} : memref<18x2xf32, #tpu.memory_space<vmem>>, vector<18x2xf32>,
      %cst_47 = arith.constant 0.000000e+00 : f32
      %120 = vector.broadcast %cst_47 : f32 to vector<18x16xf32>
      %c0_48 = arith.constant 0 : index
      %c0_49 = arith.constant 0 : index
      %121 = vector.load %arg10[%c0_48, %c0_49] : memref<18x16xf32, #tpu.memory_space<vmem>>, vector<18x16xf32>
      tpu.vector_store %arg10[%c0_48, %c0_49], %120 {strides = array<i32>} : memref<18x16xf32, #tpu.memory_space<vmem>>, vector<18x16xf32>,
    } else {
    }
    %c0 = arith.constant 0 : index
    %c0_1 = arith.constant 0 : index
    %3 = vector.load %arg2[%c0, %c0_1] : memref<18x16xbf16, #tpu.memory_space<vmem>>, vector<18x16xbf16>
    %c0_2 = arith.constant 0 : index
    %c0_3 = arith.constant 0 : index
    %c0_4 = arith.constant 0 : index
    %4 = vector.load %arg3[%c0_2, %c0_3, %c0_4] : memref<18x8x16xbf16, #tpu.memory_space<vmem>>, vector<18x8x16xbf16>
    %c0_5 = arith.constant 0 : index
    %c0_6 = arith.constant 0 : index
    %c0_7 = arith.constant 0 : index
    %5 = vector.load %arg4[%c0_5, %c0_6, %c0_7] : memref<18x8x16xbf16, #tpu.memory_space<vmem>>, vector<18x8x16xbf16>
    %c0_8 = arith.constant 0 : index
    %c0_9 = arith.constant 0 : index
    %c0_10 = arith.constant 0 : index
    %6 = vector.load %arg5[%c0_8, %c0_9, %c0_10] : memref<18x2x8xf32, #tpu.memory_space<vmem>>, vector<18x2x8xf32>
    %c0_11 = arith.constant 0 : index
    %c0_12 = arith.constant 0 : index
    %c0_13 = arith.constant 0 : index
    %7 = vector.load %arg6[%c0_11, %c0_12, %c0_13] : memref<18x2x8xf32, #tpu.memory_space<vmem>>, vector<18x2x8xf32>
    %c8_i32 = arith.constant 8 : i32
    %8 = arith.muli %arg1, %c8_i32 : i32
    %9 = tpu.iota {dimensions = array<i32: 1>} : vector<18x8xi32>
    %10 = vector.broadcast %8 : i32 to vector<18x8xi32>
    %11 = arith.addi %10, %9 : vector<18x8xi32>
    %c0_14 = arith.constant 0 : index
    %c0_15 = arith.constant 0 : index
    %12 = vector.load %arg8[%c0_14, %c0_15] : memref<18x2xf32, #tpu.memory_space<vmem>>, vector<18x2xf32>
    %c0_16 = arith.constant 0 : index
    %c0_17 = arith.constant 0 : index
    %13 = vector.load %arg9[%c0_16, %c0_17] : memref<18x2xf32, #tpu.memory_space<vmem>>, vector<18x2xf32>
    %c0_18 = arith.constant 0 : index
    %c0_19 = arith.constant 0 : index
    %14 = vector.load %arg10[%c0_18, %c0_19] : memref<18x16xf32, #tpu.memory_space<vmem>>, vector<18x16xf32>
    %15 = vector.extract_strided_slice %3 {offsets = [0, 0], sizes = [18, 8], strides = [1, 1]} : vector<18x16xbf16> to vector<18x8xbf16>
    %16 = arith.extf %15 : vector<18x8xbf16> to vector<18x8xf32>
    %17 = vector.extract_strided_slice %4 {offsets = [0, 0, 0], sizes = [18, 8, 8], strides = [1, 1, 1]} : vector<18x8x16xbf16> to vector<18x8x8xbf16>
    %18 = arith.extf %17 : vector<18x8x8xbf16> to vector<18x8x8xf32>
    %19 = vector.extract_strided_slice %5 {offsets = [0, 0, 0], sizes = [18, 8, 8], strides = [1, 1, 1]} : vector<18x8x16xbf16> to vector<18x8x8xbf16>
    %20 = arith.extf %19 : vector<18x8x8xbf16> to vector<18x8x8xf32>
    %21 = vector.shape_cast %16 : vector<18x8xf32> to vector<18x1x8xf32>
    %22 = vector.broadcast %21 : vector<18x1x8xf32> to vector<18x8x8xf32>
    %23 = arith.mulf %22, %18 : vector<18x8x8xf32>
    %cst = arith.constant dense<0.000000e+00> : vector<18x8xf32>
    %24 = vector.multi_reduction <add>, %23, %cst [2] : vector<18x8x8xf32> to vector<18x8xf32>
    %cst_20 = arith.constant 0.353553385 : f32
    %25 = vector.broadcast %cst_20 : f32 to vector<18x8xf32>
    %26 = arith.mulf %24, %25 : vector<18x8xf32>
    %27 = vector.extract_strided_slice %6 {offsets = [0, 0, 0], sizes = [18, 1, 8], strides = [1, 1, 1]} : vector<18x2x8xf32> to vector<18x1x8xf32>
    %28 = vector.shape_cast %27 : vector<18x1x8xf32> to vector<18x8xf32>
    %cst_21 = arith.constant 0.176776692 : f32
    %29 = vector.broadcast %cst_21 : f32 to vector<18x8xf32>
    %30 = arith.mulf %29, %28 : vector<18x8xf32>
    %31 = arith.subf %26, %30 : vector<18x8xf32>
    %32 = vector.extract_strided_slice %7 {offsets = [0, 0, 0], sizes = [18, 1, 8], strides = [1, 1, 1]} : vector<18x2x8xf32> to vector<18x1x8xf32>
    %33 = vector.shape_cast %32 : vector<18x1x8xf32> to vector<18x8xf32>
    %34 = arith.addf %31, %33 : vector<18x8xf32>
    %c6_i32 = arith.constant 6 : i32
    %35 = vector.broadcast %c6_i32 : i32 to vector<18x8xi32>
    %36 = arith.cmpi slt, %11, %35 : vector<18x8xi32>
    %cst_22 = arith.constant -1.000000e+30 : f32
    %37 = vector.broadcast %cst_22 : f32 to vector<18x8xf32>
    %38 = arith.select %36, %34, %37 : vector<18x8xi1>, vector<18x8xf32>
    %39 = vector.extract_strided_slice %12 {offsets = [0, 0], sizes = [18, 1], strides = [1, 1]} : vector<18x2xf32> to vector<18x1xf32>
    %cst_23 = arith.constant dense<0xFF800000> : vector<18xf32>
    %40 = vector.multi_reduction <maximumf>, %38, %cst_23 [1] : vector<18x8xf32> to vector<18xf32>
    %41 = vector.shape_cast %40 : vector<18xf32> to vector<18x1xf32>
    %42 = arith.maximumf %39, %41 : vector<18x1xf32>
    %43 = arith.subf %39, %42 : vector<18x1xf32>
    %44 = math.exp %43 : vector<18x1xf32>
    %45 = vector.broadcast %42 : vector<18x1xf32> to vector<18x8xf32>
    %46 = arith.subf %38, %45 : vector<18x8xf32>
    %47 = math.exp %46 : vector<18x8xf32>
    %48 = vector.extract_strided_slice %13 {offsets = [0, 0], sizes = [18, 1], strides = [1, 1]} : vector<18x2xf32> to vector<18x1xf32>
    %49 = arith.mulf %44, %48 : vector<18x1xf32>
    %cst_24 = arith.constant dense<0.000000e+00> : vector<18xf32>
    %50 = vector.multi_reduction <add>, %47, %cst_24 [1] : vector<18x8xf32> to vector<18xf32>
    %51 = vector.shape_cast %50 : vector<18xf32> to vector<18x1xf32>
    %52 = arith.addf %49, %51 : vector<18x1xf32>
    %53 = vector.extract_strided_slice %14 {offsets = [0, 0], sizes = [18, 8], strides = [1, 1]} : vector<18x16xf32> to vector<18x8xf32>
    %54 = vector.broadcast %44 : vector<18x1xf32> to vector<18x8xf32>
    %55 = arith.mulf %54, %53 : vector<18x8xf32>
    %56 = vector.shape_cast %47 : vector<18x8xf32> to vector<18x8x1xf32>
    %57 = vector.broadcast %56 : vector<18x8x1xf32> to vector<18x8x8xf32>
    %58 = arith.mulf %57, %20 : vector<18x8x8xf32>
    %cst_25 = arith.constant dense<0.000000e+00> : vector<18x8xf32>
    %59 = vector.multi_reduction <add>, %58, %cst_25 [1] : vector<18x8x8xf32> to vector<18x8xf32>
    %60 = arith.addf %55, %59 : vector<18x8xf32>
    %61 = vector.extract_strided_slice %3 {offsets = [0, 8], sizes = [18, 8], strides = [1, 1]} : vector<18x16xbf16> to vector<18x8xbf16>
    %62 = arith.extf %61 : vector<18x8xbf16> to vector<18x8xf32>
    %63 = vector.extract_strided_slice %4 {offsets = [0, 0, 8], sizes = [18, 8, 8], strides = [1, 1, 1]} : vector<18x8x16xbf16> to vector<18x8x8xbf16>
    %64 = arith.extf %63 : vector<18x8x8xbf16> to vector<18x8x8xf32>
    %65 = vector.extract_strided_slice %5 {offsets = [0, 0, 8], sizes = [18, 8, 8], strides = [1, 1, 1]} : vector<18x8x16xbf16> to vector<18x8x8xbf16>
    %66 = arith.extf %65 : vector<18x8x8xbf16> to vector<18x8x8xf32>
    %67 = vector.shape_cast %62 : vector<18x8xf32> to vector<18x1x8xf32>
    %68 = vector.broadcast %67 : vector<18x1x8xf32> to vector<18x8x8xf32>
    %69 = arith.mulf %68, %64 : vector<18x8x8xf32>
    %cst_26 = arith.constant dense<0.000000e+00> : vector<18x8xf32>
    %70 = vector.multi_reduction <add>, %69, %cst_26 [2] : vector<18x8x8xf32> to vector<18x8xf32>
    %cst_27 = arith.constant 0.353553385 : f32
    %71 = vector.broadcast %cst_27 : f32 to vector<18x8xf32>
    %72 = arith.mulf %70, %71 : vector<18x8xf32>
    %73 = vector.extract_strided_slice %6 {offsets = [0, 1, 0], sizes = [18, 1, 8], strides = [1, 1, 1]} : vector<18x2x8xf32> to vector<18x1x8xf32>
    %74 = vector.shape_cast %73 : vector<18x1x8xf32> to vector<18x8xf32>
    %cst_28 = arith.constant 0.176776692 : f32
    %75 = vector.broadcast %cst_28 : f32 to vector<18x8xf32>
    %76 = arith.mulf %75, %74 : vector<18x8xf32>
    %77 = arith.subf %72, %76 : vector<18x8xf32>
    %78 = vector.extract_strided_slice %7 {offsets = [0, 1, 0], sizes = [18, 1, 8], strides = [1, 1, 1]} : vector<18x2x8xf32> to vector<18x1x8xf32>
    %79 = vector.shape_cast %78 : vector<18x1x8xf32> to vector<18x8xf32>
    %80 = arith.addf %77, %79 : vector<18x8xf32>
    %c2_i32 = arith.constant 2 : i32
    %81 = vector.broadcast %c2_i32 : i32 to vector<18x8xi32>
    %82 = arith.cmpi slt, %11, %81 : vector<18x8xi32>
    %cst_29 = arith.constant -1.000000e+30 : f32
    %83 = vector.broadcast %cst_29 : f32 to vector<18x8xf32>
    %84 = arith.select %82, %80, %83 : vector<18x8xi1>, vector<18x8xf32>
    %85 = vector.extract_strided_slice %12 {offsets = [0, 1], sizes = [18, 1], strides = [1, 1]} : vector<18x2xf32> to vector<18x1xf32>
    %cst_30 = arith.constant dense<0xFF800000> : vector<18xf32>
    %86 = vector.multi_reduction <maximumf>, %84, %cst_30 [1] : vector<18x8xf32> to vector<18xf32>
    %87 = vector.shape_cast %86 : vector<18xf32> to vector<18x1xf32>
    %88 = arith.maximumf %85, %87 : vector<18x1xf32>
    %89 = arith.subf %85, %88 : vector<18x1xf32>
    %90 = math.exp %89 : vector<18x1xf32>
    %91 = vector.broadcast %88 : vector<18x1xf32> to vector<18x8xf32>
    %92 = arith.subf %84, %91 : vector<18x8xf32>
    %93 = math.exp %92 : vector<18x8xf32>
    %94 = vector.extract_strided_slice %13 {offsets = [0, 1], sizes = [18, 1], strides = [1, 1]} : vector<18x2xf32> to vector<18x1xf32>
    %95 = arith.mulf %90, %94 : vector<18x1xf32>
    %cst_31 = arith.constant dense<0.000000e+00> : vector<18xf32>
    %96 = vector.multi_reduction <add>, %93, %cst_31 [1] : vector<18x8xf32> to vector<18xf32>
    %97 = vector.shape_cast %96 : vector<18xf32> to vector<18x1xf32>
    %98 = arith.addf %95, %97 : vector<18x1xf32>
    %99 = vector.extract_strided_slice %14 {offsets = [0, 8], sizes = [18, 8], strides = [1, 1]} : vector<18x16xf32> to vector<18x8xf32>
    %100 = vector.broadcast %90 : vector<18x1xf32> to vector<18x8xf32>
    %101 = arith.mulf %100, %99 : vector<18x8xf32>
    %102 = vector.shape_cast %93 : vector<18x8xf32> to vector<18x8x1xf32>
    %103 = vector.broadcast %102 : vector<18x8x1xf32> to vector<18x8x8xf32>
    %104 = arith.mulf %103, %66 : vector<18x8x8xf32>
    %cst_32 = arith.constant dense<0.000000e+00> : vector<18x8xf32>
    %105 = vector.multi_reduction <add>, %104, %cst_32 [1] : vector<18x8x8xf32> to vector<18x8xf32>
    %106 = arith.addf %101, %105 : vector<18x8xf32>
    %107 = tpu.concatenate %42, %88 in 1 : vector<18x1xf32>, vector<18x1xf32> -> vector<18x2xf32>
    %c0_33 = arith.constant 0 : index
    %c0_34 = arith.constant 0 : index
    %108 = vector.load %arg8[%c0_33, %c0_34] : memref<18x2xf32, #tpu.memory_space<vmem>>, vector<18x2xf32>
    tpu.vector_store %arg8[%c0_33, %c0_34], %107 {strides = array<i32>} : memref<18x2xf32, #tpu.memory_space<vmem>>, vector<18x2xf32>,
    %109 = tpu.concatenate %52, %98 in 1 : vector<18x1xf32>, vector<18x1xf32> -> vector<18x2xf32>
    %c0_35 = arith.constant 0 : index
    %c0_36 = arith.constant 0 : index
    %110 = vector.load %arg9[%c0_35, %c0_36] : memref<18x2xf32, #tpu.memory_space<vmem>>, vector<18x2xf32>
    tpu.vector_store %arg9[%c0_35, %c0_36], %109 {strides = array<i32>} : memref<18x2xf32, #tpu.memory_space<vmem>>, vector<18x2xf32>,
    %111 = tpu.concatenate %60, %106 in 1 : vector<18x8xf32>, vector<18x8xf32> -> vector<18x16xf32>
    %c0_37 = arith.constant 0 : index
    %c0_38 = arith.constant 0 : index
    %112 = vector.load %arg10[%c0_37, %c0_38] : memref<18x16xf32, #tpu.memory_space<vmem>>, vector<18x16xf32>
    tpu.vector_store %arg10[%c0_37, %c0_38], %111 {strides = array<i32>} : memref<18x16xf32, #tpu.memory_space<vmem>>, vector<18x16xf32>,
    %c0_i32_39 = arith.constant 0 : i32
    %113 = arith.cmpi eq, %arg1, %c0_i32_39 : i32
    %114 = arith.extui %113 : i1 to i32
    %c0_i32_40 = arith.constant 0 : i32
    %115 = arith.cmpi ne, %114, %c0_i32_40 : i32
    scf.if %115 {
      %c0_41 = arith.constant 0 : index
      %c0_42 = arith.constant 0 : index
      %116 = vector.load %arg9[%c0_41, %c0_42] : memref<18x2xf32, #tpu.memory_space<vmem>>, vector<18x2xf32>
      %117 = tpu.reciprocal %116 {approx = true} : vector<18x2xf32> -> vector<18x2xf32>
      %c0_43 = arith.constant 0 : index
      %c0_44 = arith.constant 0 : index
      %118 = vector.load %arg10[%c0_43, %c0_44] : memref<18x16xf32, #tpu.memory_space<vmem>>, vector<18x8xf32>
      %119 = vector.extract_strided_slice %117 {offsets = [0, 0], sizes = [18, 1], strides = [1, 1]} : vector<18x2xf32> to vector<18x1xf32>
      %120 = vector.broadcast %119 : vector<18x1xf32> to vector<18x8xf32>
      %121 = arith.mulf %118, %120 : vector<18x8xf32>
      %c0_45 = arith.constant 0 : index
      %c8 = arith.constant 8 : index
      %122 = vector.load %arg10[%c0_45, %c8] : memref<18x16xf32, #tpu.memory_space<vmem>>, vector<18x8xf32>
      %123 = vector.extract_strided_slice %117 {offsets = [0, 1], sizes = [18, 1], strides = [1, 1]} : vector<18x2xf32> to vector<18x1xf32>
      %124 = vector.broadcast %123 : vector<18x1xf32> to vector<18x8xf32>
      %125 = arith.mulf %122, %124 : vector<18x8xf32>
      %126 = tpu.concatenate %121, %125 in 1 : vector<18x8xf32>, vector<18x8xf32> -> vector<18x16xf32>
      %127 = arith.truncf %126 : vector<18x16xf32> to vector<18x16xbf16>
      %c0_46 = arith.constant 0 : index
      %c0_47 = arith.constant 0 : index
      %128 = vector.load %arg7[%c0_46, %c0_47] : memref<18x16xbf16, #tpu.memory_space<vmem>>, vector<18x16xbf16>
      tpu.vector_store %arg7[%c0_46, %c0_47], %127 {strides = array<i32>} : memref<18x16xbf16, #tpu.memory_space<vmem>>, vector<18x16xbf16>,
    } else {
    }
    return
  }
  func.func @transform_0(%arg0: i32, %arg1: i32) -> (i32, i32) {
    %c0_i32 = arith.constant 0 : i32
    %c0_i32_0 = arith.constant 0 : i32
    return %arg0, %c0_i32 : i32, i32
  }
  func.func @transform_1(%arg0: i32, %arg1: i32) -> (i32, i32, i32) {
    %c0_i32 = arith.constant 0 : i32
    %c0_i32_0 = arith.constant 0 : i32
    return %arg0, %arg1, %c0_i32 : i32, i32, i32
  }
  func.func @transform_2(%arg0: i32, %arg1: i32) -> (i32, i32, i32) {
    %c0_i32 = arith.constant 0 : i32
    %c0_i32_0 = arith.constant 0 : i32
    return %arg0, %arg1, %c0_i32 : i32, i32, i32
  }
  func.func @transform_3(%arg0: i32, %arg1: i32) -> (i32, i32, i32) {
    %c0_i32 = arith.constant 0 : i32
    %c0_i32_0 = arith.constant 0 : i32
    return %arg0, %c0_i32, %arg1 : i32, i32, i32
  }
  func.func @transform_4(%arg0: i32, %arg1: i32) -> (i32, i32, i32) {
    %c0_i32 = arith.constant 0 : i32
    %c0_i32_0 = arith.constant 0 : i32
    return %arg0, %c0_i32, %arg1 : i32, i32, i32
  }
  func.func @transform_5(%arg0: i32, %arg1: i32) -> (i32, i32) {
    %c0_i32 = arith.constant 0 : i32
    %c0_i32_0 = arith.constant 0 : i32
    return %arg0, %c0_i32 : i32, i32
  }
}

module attributes {stable_mosaic.version = 11 : i64} {
  func.func @kernel(%arg0: i32, %arg1: i32, %arg2: memref<18x16xbf16, #tpu.memory_space<vmem>>, %arg3: memref<16x16xbf16, #tpu.memory_space<vmem>>, %arg4: memref<1x16xf32, #tpu.memory_space<vmem>>, %arg5: memref<18x16xbf16, #tpu.memory_space<vmem>>, %arg6: memref<18x16xbf16, #tpu.memory_space<vmem>>) attributes {dimension_semantics = [#tpu.dimension_semantics<parallel>, #tpu.dimension_semantics<parallel>], iteration_bounds = array<i64: 1, 1>, scalar_prefetch = 0 : i64, scratch_operands = 0 : i64, tpu.core_type = #tpu.core_type<tc>, window_params = [{transform_indices = @transform_0, window_bounds = array<i64: 18, 16>}, {transform_indices = @transform_1, window_bounds = array<i64: 16, 16>}, {transform_indices = @transform_2, window_bounds = array<i64: 1, 16>}, {transform_indices = @transform_3, window_bounds = array<i64: 18, 16>}, {transform_indices = @transform_4, window_bounds = array<i64: 18, 16>}]} {
    %c0 = arith.constant 0 : index
    %c0_0 = arith.constant 0 : index
    %0 = vector.load %arg2[%c0, %c0_0] : memref<18x16xbf16, #tpu.memory_space<vmem>>, vector<18x16xbf16>
    %c0_1 = arith.constant 0 : index
    %c0_2 = arith.constant 0 : index
    %1 = vector.load %arg3[%c0_1, %c0_2] : memref<16x16xbf16, #tpu.memory_space<vmem>>, vector<16x16xbf16>
    %cst = arith.constant dense<0.000000e+00> : vector<18x16xf32>
    %2 = tpu.matmul %0, %1, %cst {dimension_numbers = #tpu.dot_dimension_numbers<[1], [0], [0], [1], [0, 0, 1, 1], [], []>} : vector<18x16xbf16>, vector<16x16xbf16>, vector<18x16xf32> -> vector<18x16xf32>
    %c0_3 = arith.constant 0 : index
    %c0_4 = arith.constant 0 : index
    %3 = vector.load %arg4[%c0_3, %c0_4] : memref<1x16xf32, #tpu.memory_space<vmem>>, vector<1x16xf32>
    %4 = vector.broadcast %3 : vector<1x16xf32> to vector<18x16xf32>
    %5 = arith.addf %2, %4 : vector<18x16xf32>
    %c0_5 = arith.constant 0 : index
    %c0_6 = arith.constant 0 : index
    %6 = vector.load %arg5[%c0_5, %c0_6] : memref<18x16xbf16, #tpu.memory_space<vmem>>, vector<18x16xbf16>
    %7 = arith.extf %6 : vector<18x16xbf16> to vector<18x16xf32>
    %8 = arith.addf %5, %7 : vector<18x16xf32>
    %9 = arith.truncf %8 : vector<18x16xf32> to vector<18x16xbf16>
    %c0_7 = arith.constant 0 : index
    %c0_8 = arith.constant 0 : index
    %10 = vector.load %arg6[%c0_7, %c0_8] : memref<18x16xbf16, #tpu.memory_space<vmem>>, vector<18x16xbf16>
    tpu.vector_store %arg6[%c0_7, %c0_8], %9 {strides = array<i32>} : memref<18x16xbf16, #tpu.memory_space<vmem>>, vector<18x16xbf16>,
    return
  }
  func.func @transform_0(%arg0: i32, %arg1: i32) -> (i32, i32) {
    %c0_i32 = arith.constant 0 : i32
    %c0_i32_0 = arith.constant 0 : i32
    return %arg1, %c0_i32 : i32, i32
  }
  func.func @transform_1(%arg0: i32, %arg1: i32) -> (i32, i32) {
    %c0_i32 = arith.constant 0 : i32
    %c0_i32_0 = arith.constant 0 : i32
    return %c0_i32, %arg0 : i32, i32
  }
  func.func @transform_2(%arg0: i32, %arg1: i32) -> (i32, i32) {
    %c0_i32 = arith.constant 0 : i32
    %c0_i32_0 = arith.constant 0 : i32
    return %c0_i32, %arg0 : i32, i32
  }
  func.func @transform_3(%arg0: i32, %arg1: i32) -> (i32, i32) {
    %c0_i32 = arith.constant 0 : i32
    return %arg1, %arg0 : i32, i32
  }
  func.func @transform_4(%arg0: i32, %arg1: i32) -> (i32, i32) {
    %c0_i32 = arith.constant 0 : i32
    return %arg1, %arg0 : i32, i32
  }
}

module attributes {stable_mosaic.version = 11 : i64} {
  func.func @kernel(%arg0: i32, %arg1: i32, %arg2: memref<18x16xbf16, #tpu.memory_space<vmem>>, %arg3: memref<1x16xf32, #tpu.memory_space<vmem>>, %arg4: memref<1x16xf32, #tpu.memory_space<vmem>>, %arg5: memref<16x64xbf16, #tpu.memory_space<vmem>>, %arg6: memref<1x64xf32, #tpu.memory_space<vmem>>, %arg7: memref<18x64xbf16, #tpu.memory_space<vmem>>) attributes {dimension_semantics = [#tpu.dimension_semantics<parallel>, #tpu.dimension_semantics<parallel>], iteration_bounds = array<i64: 1, 1>, scalar_prefetch = 0 : i64, scratch_operands = 0 : i64, tpu.core_type = #tpu.core_type<tc>, window_params = [{transform_indices = @transform_0, window_bounds = array<i64: 18, 16>}, {pipeline_mode = #tpu.pipeline_mode<synchronous>, transform_indices = @transform_1, window_bounds = array<i64: 1, 16>}, {pipeline_mode = #tpu.pipeline_mode<synchronous>, transform_indices = @transform_2, window_bounds = array<i64: 1, 16>}, {transform_indices = @transform_3, window_bounds = array<i64: 16, 64>}, {transform_indices = @transform_4, window_bounds = array<i64: 1, 64>}, {transform_indices = @transform_5, window_bounds = array<i64: 18, 64>}]} {
    %c0 = arith.constant 0 : index
    %c0_0 = arith.constant 0 : index
    %0 = vector.load %arg2[%c0, %c0_0] : memref<18x16xbf16, #tpu.memory_space<vmem>>, vector<18x16xbf16>
    %1 = arith.extf %0 : vector<18x16xbf16> to vector<18x16xf32>
    %cst = arith.constant dense<0.000000e+00> : vector<18xf32>
    %2 = vector.multi_reduction <add>, %1, %cst [1] : vector<18x16xf32> to vector<18xf32>
    %3 = vector.shape_cast %2 : vector<18xf32> to vector<18x1xf32>
    %cst_1 = arith.constant 1.600000e+01 : f32
    %4 = vector.broadcast %cst_1 : f32 to vector<18x1xf32>
    %5 = arith.divf %3, %4 : vector<18x1xf32>
    %6 = vector.broadcast %5 : vector<18x1xf32> to vector<18x16xf32>
    %7 = arith.subf %1, %6 : vector<18x16xf32>
    %8 = arith.mulf %7, %7 : vector<18x16xf32>
    %cst_2 = arith.constant dense<0.000000e+00> : vector<18xf32>
    %9 = vector.multi_reduction <add>, %8, %cst_2 [1] : vector<18x16xf32> to vector<18xf32>
    %10 = vector.shape_cast %9 : vector<18xf32> to vector<18x1xf32>
    %cst_3 = arith.constant 1.600000e+01 : f32
    %11 = vector.broadcast %cst_3 : f32 to vector<18x1xf32>
    %12 = arith.divf %10, %11 : vector<18x1xf32>
    %cst_4 = arith.constant 9.99999974E-6 : f32
    %13 = vector.broadcast %cst_4 : f32 to vector<18x1xf32>
    %14 = arith.addf %12, %13 : vector<18x1xf32>
    %15 = math.rsqrt %14 : vector<18x1xf32>
    %16 = vector.broadcast %15 : vector<18x1xf32> to vector<18x16xf32>
    %17 = arith.mulf %7, %16 : vector<18x16xf32>
    %c0_5 = arith.constant 0 : index
    %c0_6 = arith.constant 0 : index
    %18 = vector.load %arg3[%c0_5, %c0_6] : memref<1x16xf32, #tpu.memory_space<vmem>>, vector<1x16xf32>
    %19 = vector.broadcast %18 : vector<1x16xf32> to vector<18x16xf32>
    %20 = arith.mulf %17, %19 : vector<18x16xf32>
    %c0_7 = arith.constant 0 : index
    %c0_8 = arith.constant 0 : index
    %21 = vector.load %arg4[%c0_7, %c0_8] : memref<1x16xf32, #tpu.memory_space<vmem>>, vector<1x16xf32>
    %22 = vector.broadcast %21 : vector<1x16xf32> to vector<18x16xf32>
    %23 = arith.addf %20, %22 : vector<18x16xf32>
    %24 = arith.truncf %23 : vector<18x16xf32> to vector<18x16xbf16>
    %c0_9 = arith.constant 0 : index
    %c0_10 = arith.constant 0 : index
    %25 = vector.load %arg5[%c0_9, %c0_10] : memref<16x64xbf16, #tpu.memory_space<vmem>>, vector<16x64xbf16>
    %cst_11 = arith.constant dense<0.000000e+00> : vector<18x64xf32>
    %26 = tpu.matmul %24, %25, %cst_11 {dimension_numbers = #tpu.dot_dimension_numbers<[1], [0], [0], [1], [0, 0, 1, 1], [], []>} : vector<18x16xbf16>, vector<16x64xbf16>, vector<18x64xf32> -> vector<18x64xf32>
    %c0_12 = arith.constant 0 : index
    %c0_13 = arith.constant 0 : index
    %27 = vector.load %arg6[%c0_12, %c0_13] : memref<1x64xf32, #tpu.memory_space<vmem>>, vector<1x64xf32>
    %28 = vector.broadcast %27 : vector<1x64xf32> to vector<18x64xf32>
    %29 = arith.addf %26, %28 : vector<18x64xf32>
    %30 = arith.mulf %29, %29 : vector<18x64xf32>
    %31 = arith.mulf %29, %30 : vector<18x64xf32>
    %cst_14 = arith.constant 4.471500e-02 : f32
    %32 = vector.broadcast %cst_14 : f32 to vector<18x64xf32>
    %33 = arith.mulf %32, %31 : vector<18x64xf32>
    %34 = arith.addf %29, %33 : vector<18x64xf32>
    %cst_15 = arith.constant 0.797884583 : f32
    %35 = vector.broadcast %cst_15 : f32 to vector<18x64xf32>
    %36 = arith.mulf %35, %34 : vector<18x64xf32>
    %37 = math.tanh %36 : vector<18x64xf32>
    %cst_16 = arith.constant 1.000000e+00 : f32
    %38 = vector.broadcast %cst_16 : f32 to vector<18x64xf32>
    %39 = arith.addf %38, %37 : vector<18x64xf32>
    %cst_17 = arith.constant 5.000000e-01 : f32
    %40 = vector.broadcast %cst_17 : f32 to vector<18x64xf32>
    %41 = arith.mulf %40, %39 : vector<18x64xf32>
    %42 = arith.mulf %29, %41 : vector<18x64xf32>
    %43 = arith.truncf %42 : vector<18x64xf32> to vector<18x64xbf16>
    %c0_18 = arith.constant 0 : index
    %c0_19 = arith.constant 0 : index
    %44 = vector.load %arg7[%c0_18, %c0_19] : memref<18x64xbf16, #tpu.memory_space<vmem>>, vector<18x64xbf16>
    tpu.vector_store %arg7[%c0_18, %c0_19], %43 {strides = array<i32>} : memref<18x64xbf16, #tpu.memory_space<vmem>>, vector<18x64xbf16>,
    return
  }
  func.func @transform_0(%arg0: i32, %arg1: i32) -> (i32, i32) {
    %c0_i32 = arith.constant 0 : i32
    %c0_i32_0 = arith.constant 0 : i32
    return %arg1, %c0_i32 : i32, i32
  }
  func.func @transform_1(%arg0: i32, %arg1: i32) -> (i32, i32) {
    %c0_i32 = arith.constant 0 : i32
    %c0_i32_0 = arith.constant 0 : i32
    %c0_i32_1 = arith.constant 0 : i32
    return %c0_i32, %c0_i32_0 : i32, i32
  }
  func.func @transform_2(%arg0: i32, %arg1: i32) -> (i32, i32) {
    %c0_i32 = arith.constant 0 : i32
    %c0_i32_0 = arith.constant 0 : i32
    %c0_i32_1 = arith.constant 0 : i32
    return %c0_i32, %c0_i32_0 : i32, i32
  }
  func.func @transform_3(%arg0: i32, %arg1: i32) -> (i32, i32) {
    %c0_i32 = arith.constant 0 : i32
    %c0_i32_0 = arith.constant 0 : i32
    return %c0_i32, %arg0 : i32, i32
  }
  func.func @transform_4(%arg0: i32, %arg1: i32) -> (i32, i32) {
    %c0_i32 = arith.constant 0 : i32
    %c0_i32_0 = arith.constant 0 : i32
    return %c0_i32, %arg0 : i32, i32
  }
  func.func @transform_5(%arg0: i32, %arg1: i32) -> (i32, i32) {
    %c0_i32 = arith.constant 0 : i32
    return %arg1, %arg0 : i32, i32
  }
}

module attributes {stable_mosaic.version = 11 : i64} {
  func.func @kernel(%arg0: i32, %arg1: i32, %arg2: memref<18x64xbf16, #tpu.memory_space<vmem>>, %arg3: memref<64x16xbf16, #tpu.memory_space<vmem>>, %arg4: memref<1x16xf32, #tpu.memory_space<vmem>>, %arg5: memref<18x16xbf16, #tpu.memory_space<vmem>>, %arg6: memref<18x16xbf16, #tpu.memory_space<vmem>>) attributes {dimension_semantics = [#tpu.dimension_semantics<parallel>, #tpu.dimension_semantics<parallel>], iteration_bounds = array<i64: 1, 1>, scalar_prefetch = 0 : i64, scratch_operands = 0 : i64, tpu.core_type = #tpu.core_type<tc>, window_params = [{transform_indices = @transform_0, window_bounds = array<i64: 18, 64>}, {transform_indices = @transform_1, window_bounds = array<i64: 64, 16>}, {transform_indices = @transform_2, window_bounds = array<i64: 1, 16>}, {transform_indices = @transform_3, window_bounds = array<i64: 18, 16>}, {transform_indices = @transform_4, window_bounds = array<i64: 18, 16>}]} {
    %c0 = arith.constant 0 : index
    %c0_0 = arith.constant 0 : index
    %0 = vector.load %arg2[%c0, %c0_0] : memref<18x64xbf16, #tpu.memory_space<vmem>>, vector<18x64xbf16>
    %c0_1 = arith.constant 0 : index
    %c0_2 = arith.constant 0 : index
    %1 = vector.load %arg3[%c0_1, %c0_2] : memref<64x16xbf16, #tpu.memory_space<vmem>>, vector<64x16xbf16>
    %cst = arith.constant dense<0.000000e+00> : vector<18x16xf32>
    %2 = tpu.matmul %0, %1, %cst {dimension_numbers = #tpu.dot_dimension_numbers<[1], [0], [0], [1], [0, 0, 1, 1], [], []>} : vector<18x64xbf16>, vector<64x16xbf16>, vector<18x16xf32> -> vector<18x16xf32>
    %c0_3 = arith.constant 0 : index
    %c0_4 = arith.constant 0 : index
    %3 = vector.load %arg4[%c0_3, %c0_4] : memref<1x16xf32, #tpu.memory_space<vmem>>, vector<1x16xf32>
    %4 = vector.broadcast %3 : vector<1x16xf32> to vector<18x16xf32>
    %5 = arith.addf %2, %4 : vector<18x16xf32>
    %c0_5 = arith.constant 0 : index
    %c0_6 = arith.constant 0 : index
    %6 = vector.load %arg5[%c0_5, %c0_6] : memref<18x16xbf16, #tpu.memory_space<vmem>>, vector<18x16xbf16>
    %7 = arith.extf %6 : vector<18x16xbf16> to vector<18x16xf32>
    %8 = arith.addf %5, %7 : vector<18x16xf32>
    %9 = arith.truncf %8 : vector<18x16xf32> to vector<18x16xbf16>
    %c0_7 = arith.constant 0 : index
    %c0_8 = arith.constant 0 : index
    %10 = vector.load %arg6[%c0_7, %c0_8] : memref<18x16xbf16, #tpu.memory_space<vmem>>, vector<18x16xbf16>
    tpu.vector_store %arg6[%c0_7, %c0_8], %9 {strides = array<i32>} : memref<18x16xbf16, #tpu.memory_space<vmem>>, vector<18x16xbf16>,
    return
  }
  func.func @transform_0(%arg0: i32, %arg1: i32) -> (i32, i32) {
    %c0_i32 = arith.constant 0 : i32
    %c0_i32_0 = arith.constant 0 : i32
    return %arg1, %c0_i32 : i32, i32
  }
  func.func @transform_1(%arg0: i32, %arg1: i32) -> (i32, i32) {
    %c0_i32 = arith.constant 0 : i32
    %c0_i32_0 = arith.constant 0 : i32
    return %c0_i32, %arg0 : i32, i32
  }
  func.func @transform_2(%arg0: i32, %arg1: i32) -> (i32, i32) {
    %c0_i32 = arith.constant 0 : i32
    %c0_i32_0 = arith.constant 0 : i32
    return %c0_i32, %arg0 : i32, i32
  }
  func.func @transform_3(%arg0: i32, %arg1: i32) -> (i32, i32) {
    %c0_i32 = arith.constant 0 : i32
    return %arg1, %arg0 : i32, i32
  }
  func.func @transform_4(%arg0: i32, %arg1: i32) -> (i32, i32) {
    %c0_i32 = arith.constant 0 : i32
    return %arg1, %arg0 : i32, i32
  }
}

module attributes {stable_mosaic.version = 11 : i64} {
  func.func @kernel(%arg0: i32, %arg1: i32, %arg2: memref<2x16xbf16, #tpu.memory_space<vmem>>, %arg3: memref<1x16xf32, #tpu.memory_space<vmem>>, %arg4: memref<1x16xf32, #tpu.memory_space<vmem>>, %arg5: memref<16x3xbf16, #tpu.memory_space<vmem>>, %arg6: memref<1x3xf32, #tpu.memory_space<vmem>>, %arg7: memref<2x3xf32, #tpu.memory_space<vmem>>) attributes {dimension_semantics = [#tpu.dimension_semantics<parallel>, #tpu.dimension_semantics<parallel>], iteration_bounds = array<i64: 1, 1>, scalar_prefetch = 0 : i64, scratch_operands = 0 : i64, tpu.core_type = #tpu.core_type<tc>, window_params = [{transform_indices = @transform_0, window_bounds = array<i64: 2, 16>}, {pipeline_mode = #tpu.pipeline_mode<synchronous>, transform_indices = @transform_1, window_bounds = array<i64: 1, 16>}, {pipeline_mode = #tpu.pipeline_mode<synchronous>, transform_indices = @transform_2, window_bounds = array<i64: 1, 16>}, {transform_indices = @transform_3, window_bounds = array<i64: 16, 3>}, {transform_indices = @transform_4, window_bounds = array<i64: 1, 3>}, {transform_indices = @transform_5, window_bounds = array<i64: 2, 3>}]} {
    %c0 = arith.constant 0 : index
    %c0_0 = arith.constant 0 : index
    %0 = vector.load %arg2[%c0, %c0_0] : memref<2x16xbf16, #tpu.memory_space<vmem>>, vector<2x16xbf16>
    %1 = arith.extf %0 : vector<2x16xbf16> to vector<2x16xf32>
    %cst = arith.constant dense<0.000000e+00> : vector<2xf32>
    %2 = vector.multi_reduction <add>, %1, %cst [1] : vector<2x16xf32> to vector<2xf32>
    %3 = vector.shape_cast %2 : vector<2xf32> to vector<2x1xf32>
    %cst_1 = arith.constant 1.600000e+01 : f32
    %4 = vector.broadcast %cst_1 : f32 to vector<2x1xf32>
    %5 = arith.divf %3, %4 : vector<2x1xf32>
    %6 = vector.broadcast %5 : vector<2x1xf32> to vector<2x16xf32>
    %7 = arith.subf %1, %6 : vector<2x16xf32>
    %8 = arith.mulf %7, %7 : vector<2x16xf32>
    %cst_2 = arith.constant dense<0.000000e+00> : vector<2xf32>
    %9 = vector.multi_reduction <add>, %8, %cst_2 [1] : vector<2x16xf32> to vector<2xf32>
    %10 = vector.shape_cast %9 : vector<2xf32> to vector<2x1xf32>
    %cst_3 = arith.constant 1.600000e+01 : f32
    %11 = vector.broadcast %cst_3 : f32 to vector<2x1xf32>
    %12 = arith.divf %10, %11 : vector<2x1xf32>
    %cst_4 = arith.constant 9.99999997E-7 : f32
    %13 = vector.broadcast %cst_4 : f32 to vector<2x1xf32>
    %14 = arith.addf %12, %13 : vector<2x1xf32>
    %15 = math.rsqrt %14 : vector<2x1xf32>
    %16 = vector.broadcast %15 : vector<2x1xf32> to vector<2x16xf32>
    %17 = arith.mulf %7, %16 : vector<2x16xf32>
    %c0_5 = arith.constant 0 : index
    %c0_6 = arith.constant 0 : index
    %18 = vector.load %arg3[%c0_5, %c0_6] : memref<1x16xf32, #tpu.memory_space<vmem>>, vector<1x16xf32>
    %19 = vector.broadcast %18 : vector<1x16xf32> to vector<2x16xf32>
    %20 = arith.mulf %17, %19 : vector<2x16xf32>
    %c0_7 = arith.constant 0 : index
    %c0_8 = arith.constant 0 : index
    %21 = vector.load %arg4[%c0_7, %c0_8] : memref<1x16xf32, #tpu.memory_space<vmem>>, vector<1x16xf32>
    %22 = vector.broadcast %21 : vector<1x16xf32> to vector<2x16xf32>
    %23 = arith.addf %20, %22 : vector<2x16xf32>
    %24 = arith.truncf %23 : vector<2x16xf32> to vector<2x16xbf16>
    %c0_9 = arith.constant 0 : index
    %c0_10 = arith.constant 0 : index
    %25 = vector.load %arg5[%c0_9, %c0_10] : memref<16x3xbf16, #tpu.memory_space<vmem>>, vector<16x3xbf16>
    %cst_11 = arith.constant dense<0.000000e+00> : vector<2x3xf32>
    %26 = tpu.matmul %24, %25, %cst_11 {dimension_numbers = #tpu.dot_dimension_numbers<[1], [0], [0], [1], [0, 0, 1, 1], [], []>} : vector<2x16xbf16>, vector<16x3xbf16>, vector<2x3xf32> -> vector<2x3xf32>
    %c0_12 = arith.constant 0 : index
    %c0_13 = arith.constant 0 : index
    %27 = vector.load %arg6[%c0_12, %c0_13] : memref<1x3xf32, #tpu.memory_space<vmem>>, vector<1x3xf32>
    %28 = vector.broadcast %27 : vector<1x3xf32> to vector<2x3xf32>
    %29 = arith.addf %26, %28 : vector<2x3xf32>
    %c0_14 = arith.constant 0 : index
    %c0_15 = arith.constant 0 : index
    %30 = vector.load %arg7[%c0_14, %c0_15] : memref<2x3xf32, #tpu.memory_space<vmem>>, vector<2x3xf32>
    tpu.vector_store %arg7[%c0_14, %c0_15], %29 {strides = array<i32>} : memref<2x3xf32, #tpu.memory_space<vmem>>, vector<2x3xf32>,
    return
  }
  func.func @transform_0(%arg0: i32, %arg1: i32) -> (i32, i32) {
    %c0_i32 = arith.constant 0 : i32
    %c0_i32_0 = arith.constant 0 : i32
    return %arg1, %c0_i32 : i32, i32
  }
  func.func @transform_1(%arg0: i32, %arg1: i32) -> (i32, i32) {
    %c0_i32 = arith.constant 0 : i32
    %c0_i32_0 = arith.constant 0 : i32
    %c0_i32_1 = arith.constant 0 : i32
    return %c0_i32, %c0_i32_0 : i32, i32
  }
  func.func @transform_2(%arg0: i32, %arg1: i32) -> (i32, i32) {
    %c0_i32 = arith.constant 0 : i32
    %c0_i32_0 = arith.constant 0 : i32
    %c0_i32_1 = arith.constant 0 : i32
    return %c0_i32, %c0_i32_0 : i32, i32
  }
  func.func @transform_3(%arg0: i32, %arg1: i32) -> (i32, i32) {
    %c0_i32 = arith.constant 0 : i32
    %c0_i32_0 = arith.constant 0 : i32
    return %c0_i32, %arg0 : i32, i32
  }
  func.func @transform_4(%arg0: i32, %arg1: i32) -> (i32, i32) {
    %c0_i32 = arith.constant 0 : i32
    %c0_i32_0 = arith.constant 0 : i32
    return %c0_i32, %arg0 : i32, i32
  }
  func.func @transform_5(%arg0: i32, %arg1: i32) -> (i32, i32) {
    %c0_i32 = arith.constant 0 : i32
    return %arg1, %arg0 : i32, i32
  }
}

</mosaic_0001>

<llo_original>
// kernel: _lambda_.14
$region0: #{_lambda_.14}
  #allocation0 [shape = 'u32[]', space=smem, size = 0x4, offset = 0x4, fixed_abs, tag = 'smem constant byte address 0x4 - core index']
  #allocation1 [shape = 'u32[72,128]{1,0:T(1,128)}', space=vmem, size = 0x9000, scoped, tag = 'internal scratch']
  %s0 = inlined_call_operand.vmem [shape: bf16[16,16], index: 0, kind: input, shape index: {}, may-alias: {0,3}]
  %s1 = inlined_call_operand.vmem [shape: bf16[16,16], index: 1, kind: input, shape index: {}]
  %s2 = inlined_call_operand.vmem [shape: f32[1,16], index: 2, kind: input, shape index: {}]
  %s3 = inlined_call_operand.vmem [shape: bf16[16,16], index: 3, kind: input, shape index: {}, may-alias: {0,3}]
  %s4 = inlined_call_operand.vmem [shape: bf16[16,16], index: 4, kind: output, shape index: {}]
  %s5 = sld [smem:[#allocation0]]
  $region26: #{_lambda_.14} parent=0
    _
  %s7 = ssub.s32 1, %s5
  %s8 = scalar_select 0, %s7, %s5
  // Predicated region
  $region2: #{_lambda_.14} parent=0 // pred_check
    _
  $region3: #{_lambda_.14} parent=0 // pred_check_branch
    %10 = sbr.rel (0) target = $region5
  $region4: #{_lambda_.14} parent=0 // pred_region
    _
  $region5: #{_lambda_.14} parent=0 // pred_fallthru
    _
  // Predicated region
  $region6: #{_lambda_.14} parent=0 // pred_check
    _
  $region7: #{_lambda_.14} parent=0 // pred_check_branch
    %12 = sbr.rel (0) target = $region9
  $region8: #{_lambda_.14} parent=0 // pred_region
    _
  $region9: #{_lambda_.14} parent=0 // pred_fallthru
    _
  // Predicated region
  $region10: #{_lambda_.14} parent=0 // pred_check
    _
  $region11: #{_lambda_.14} parent=0 // pred_check_branch
    %14 = sbr.rel (0) target = $region13
  $region12: #{_lambda_.14} parent=0 // pred_region
    _
  $region13: #{_lambda_.14} parent=0 // pred_fallthru
    _
  // Predicated region
  $region14: #{_lambda_.14} parent=0 // pred_check
    _
  $region15: #{_lambda_.14} parent=0 // pred_check_branch
    %16 = sbr.rel (0) target = $region17
  $region16: #{_lambda_.14} parent=0 // pred_region
    _
  $region17: #{_lambda_.14} parent=0 // pred_fallthru
    _
  %v18 = vld [vmem:[%s0] sm:$0xf]
  %v19 = vld [vmem:[%s0 + $0x4] sm:$0xf]
  %v20 = vld [vmem:[%s1] sm:$0xf]
  %v21 = vld [vmem:[%s1 + $0x4] sm:$0xf]
  %v22 = vld [vmem:[%s2] sm:$0x1]
  %v24 = vperm.slane %v22, 0
  %v28 = vunpack.c.l.b16 %v18
  %v29 = vunpack.c.l.b16 %v19
  %v30 = vpack.c.b16 %v29, %v28
  %v33 = vunpack.c.l.b16 %v20
  %v34 = vunpack.c.l.b16 %v21
  %v35 = vpack.c.b16 %v34, %v33
  %vm37 = vcmask 130048
  %v39 = vsel %vm37, %v30, 0
  %41 = vmatpush.bf16.msra.mxu0 0
  %42 = vmatpush.bf16.msra.mxu0 0
  %43 = vmatpush.bf16.msra.mxu0 0
  %44 = vmatpush.bf16.msra.mxu0 0
  %45 = vmatpush.bf16.msra.mxu0 0
  %46 = vmatpush.bf16.msra.mxu0 0
  %47 = vmatpush.bf16.msra.mxu0 0
  %48 = vmatpush.bf16.msra.mxu0 %v35
  %49 = vmatmul.bf16.gmra.mxu0 %v39
  %v50 = vpop.f32.mrf.mxu0
  %v51 = vadd.f32 %v24, %v50
  %v52 = vpop.f32.mrf.mxu0
  %v53 = vadd.f32 %v24, %v52
  %54 = vdwg.mxu0
  %v55 = vmax.f32 %v51, 0.0
  %v56 = vmax.f32 %v53, 0.0
  %v57 = vld [vmem:[%s3] sm:$0xf]
  %v58 = vld [vmem:[%s3 + $0x4] sm:$0xf]
  %v59 = vunpack.c.l.bf16 %v57
  %v60 = vunpack.c.l.bf16 %v58
  %v61 = vadd.f32 %v55, %v59
  %v62 = vadd.f32 %v56, %v60
  %v63 = vpack.c.bf16 %v61, %v61
  %v64 = vpack.c.bf16 %v62, %v62
  %vm65 = vcmask 125952
  %66 = vst.msk [vmem:[%s4] sm:$0xf] %vm65, %v63
  %67 = vst.msk [vmem:[%s4 + $0x4] sm:$0xf] %vm65, %v64
  // Predicated region
  $region18: #{_lambda_.14} parent=0 // pred_check
    _
  $region19: #{_lambda_.14} parent=0 // pred_check_branch
    %69 = sbr.rel (0) target = $region21
  $region20: #{_lambda_.14} parent=0 // pred_region
    _
  $region21: #{_lambda_.14} parent=0 // pred_fallthru
    _
  // Predicated region
  $region22: #{_lambda_.14} parent=0 // pred_check
    _
  $region23: #{_lambda_.14} parent=0 // pred_check_branch
    %71 = sbr.rel (0) target = $region25
  $region24: #{_lambda_.14} parent=0 // pred_region
    _
  $region25: #{_lambda_.14} parent=0 // pred_fallthru
    _

// kernel: _lambda_.13
$region0: #{_lambda_.13}
  #allocation0 [shape = 'u32[]', space=smem, size = 0x4, offset = 0x4, fixed_abs, tag = 'smem constant byte address 0x4 - core index']
  #allocation1 [shape = 'u32[72,128]{1,0:T(1,128)}', space=vmem, size = 0x9000, scoped, tag = 'internal scratch']
  %s0 = inlined_call_operand.hbm [shape: f32[16,16], index: 0, kind: input, shape index: {}]
  %s1 = inlined_call_operand.vmem [shape: bf16[16,16], index: 1, kind: input, shape index: {}]
  %s2 = inlined_call_operand.vmem [shape: f32[1,16], index: 2, kind: input, shape index: {}]
  %s3 = inlined_call_operand.vmem [shape: bf16[16,16], index: 3, kind: output, shape index: {}]
  %s4 = sld [smem:[#allocation0]]
  $region26: #{_lambda_.13} parent=0
    _
  %s6 = ssub.s32 1, %s4
  %s7 = scalar_select 0, %s6, %s4
  $region1: #{_lambda_.13} parent=0
    #allocation2 [shape = 'u8[8192]{0}', space=vmem, size = 0x2000, scoped, tag = 'input window, operand 0, single buffered']
    #allocation3 [shape = 's32[1]{0}', space=sflag, size = 0x4, scoped, tag = 'scoped memory for _lambda_.13']
    %8 = vsyncpa [#allocation3], 0
    // Predicated region
    $region2: #{_lambda_.13} parent=1 // pred_check
      _
    $region3: #{_lambda_.13} parent=1 // pred_check_branch
      %10 = sbr.rel (0) target = $region5
    $region4: #{_lambda_.13} parent=1 // pred_region
      %12 = vsyncadd [#allocation3], 0
      %s13 = sshll.u32 %s0, 4
      %s14 = int_to_ptr.hbm [resolvable:$true] %s13
      %s15 = sshll.u32 [#allocation2], 4
      %s16 = int_to_ptr.vmem [resolvable:$true] %s15
      %21 = dma.hbm_to_vmem [thread:$0]  %s14, 256, %s16, [#allocation3], 128, 128, 8
    $region5: #{_lambda_.13} parent=1 // pred_fallthru
      _
    // Predicated region
    $region6: #{_lambda_.13} parent=1 // pred_check
      _
    $region7: #{_lambda_.13} parent=1 // pred_check_branch
      %23 = sbr.rel (0) target = $region9
    $region8: #{_lambda_.13} parent=1 // pred_region
      _
    $region9: #{_lambda_.13} parent=1 // pred_fallthru
      _
    // Predicated region
    $region10: #{_lambda_.13} parent=1 // pred_check
      _
    $region11: #{_lambda_.13} parent=1 // pred_check_branch
      %25 = sbr.rel (0) target = $region13
    $region12: #{_lambda_.13} parent=1 // pred_region
      _
    $region13: #{_lambda_.13} parent=1 // pred_fallthru
      _
    // Predicated region
    $region14: #{_lambda_.13} parent=1 // pred_check
      _
    $region15: #{_lambda_.13} parent=1 // pred_check_branch
      %27 = sbr.rel (0) target = $region17
    $region16: #{_lambda_.13} parent=1 // pred_region
      %29 = dma.done [#allocation3], 256
    $region17: #{_lambda_.13} parent=1 // pred_fallthru
      _
    %v31 = vld [vmem:[#allocation2] sm:$0xff]
    %v32 = vld [vmem:[#allocation2 + $0x8] sm:$0xff]
    %v33 = vpack.c.bf16 %v32, %v31
    %v34 = vld [vmem:[%s1] sm:$0xf]
    %v35 = vld [vmem:[%s1 + $0x4] sm:$0xf]
    %v36 = vld [vmem:[%s2] sm:$0x1]
    %v38 = vperm.slane %v36, 0
    %v42 = vunpack.c.l.b16 %v34
    %v43 = vunpack.c.l.b16 %v35
    %v44 = vpack.c.b16 %v43, %v42
    %vm46 = vcmask 130048
    %v48 = vsel %vm46, %v33, 0
    %50 = vmatpush.bf16.msra.mxu0 0
    %51 = vmatpush.bf16.msra.mxu0 0
    %52 = vmatpush.bf16.msra.mxu0 0
    %53 = vmatpush.bf16.msra.mxu0 0
    %54 = vmatpush.bf16.msra.mxu0 0
    %55 = vmatpush.bf16.msra.mxu0 0
    %56 = vmatpush.bf16.msra.mxu0 0
    %57 = vmatpush.bf16.msra.mxu0 %v44
    %58 = vmatmul.bf16.gmra.mxu0 %v48
    %v59 = vpop.f32.mrf.mxu0
    %v60 = vadd.f32 %v38, %v59
    %v61 = vpop.f32.mrf.mxu0
    %v62 = vadd.f32 %v38, %v61
    %63 = vdwg.mxu0
    %v64 = vmax.f32 %v60, 0.0
    %v65 = vmax.f32 %v62, 0.0
    %v66 = vpack.c.bf16 %v64, %v64
    %v67 = vpack.c.bf16 %v65, %v65
    %vm68 = vcmask 125952
    %69 = vst.msk [vmem:[%s3] sm:$0xf] %vm68, %v66
    %70 = vst.msk [vmem:[%s3 + $0x4] sm:$0xf] %vm68, %v67
    // Predicated region
    $region18: #{_lambda_.13} parent=1 // pred_check
      _
    $region19: #{_lambda_.13} parent=1 // pred_check_branch
      %72 = sbr.rel (0) target = $region21
    $region20: #{_lambda_.13} parent=1 // pred_region
      _
    $region21: #{_lambda_.13} parent=1 // pred_fallthru
      _
    // Predicated region
    $region22: #{_lambda_.13} parent=1 // pred_check
      _
    $region23: #{_lambda_.13} parent=1 // pred_check_branch
      %74 = sbr.rel (0) target = $region25
    $region24: #{_lambda_.13} parent=1 // pred_region
      _
    $region25: #{_lambda_.13} parent=1 // pred_fallthru
      _
    %75 = vsyncpa [#allocation3], 1

// kernel: _lambda_.15
$region0: #{_lambda_.15}
  #allocation0 [shape = 'u32[]', space=smem, size = 0x4, offset = 0x4, fixed_abs, tag = 'smem constant byte address 0x4 - core index']
  #allocation1 [shape = 'u32[72,128]{1,0:T(1,128)}', space=vmem, size = 0x9000, scoped, tag = 'internal scratch']
  %s0 = inlined_call_operand.vmem [shape: bf16[18,16], index: 0, kind: input, shape index: {}]
  %s1 = inlined_call_operand.vmem [shape: f32[1,16], index: 1, kind: input, shape index: {}]
  %s2 = inlined_call_operand.vmem [shape: f32[1,16], index: 2, kind: input, shape index: {}]
  %s3 = inlined_call_operand.vmem [shape: bf16[16,48], index: 3, kind: input, shape index: {}]
  %s4 = inlined_call_operand.vmem [shape: f32[1,48], index: 4, kind: input, shape index: {}]
  %s5 = inlined_call_operand.vmem [shape: bf16[18,48], index: 5, kind: output, shape index: {}]
  %s6 = sld [smem:[#allocation0]]
  $region30: #{_lambda_.15} parent=0
    _
  %s8 = ssub.s32 1, %s6
  %s9 = scalar_select 0, %s8, %s6
  // Predicated region
  $region2: #{_lambda_.15} parent=0 // pred_check
    _
  $region3: #{_lambda_.15} parent=0 // pred_check_branch
    %11 = sbr.rel (0) target = $region5
  $region4: #{_lambda_.15} parent=0 // pred_region
    _
  $region5: #{_lambda_.15} parent=0 // pred_fallthru
    _
  // Predicated region
  $region6: #{_lambda_.15} parent=0 // pred_check
    _
  $region7: #{_lambda_.15} parent=0 // pred_check_branch
    %13 = sbr.rel (0) target = $region9
  $region8: #{_lambda_.15} parent=0 // pred_region
    _
  $region9: #{_lambda_.15} parent=0 // pred_fallthru
    _
  // Predicated region
  $region10: #{_lambda_.15} parent=0 // pred_check
    _
  $region11: #{_lambda_.15} parent=0 // pred_check_branch
    %15 = sbr.rel (0) target = $region13
  $region12: #{_lambda_.15} parent=0 // pred_region
    _
  $region13: #{_lambda_.15} parent=0 // pred_fallthru
    _
  // Predicated region
  $region14: #{_lambda_.15} parent=0 // pred_check
    _
  $region15: #{_lambda_.15} parent=0 // pred_check_branch
    %17 = sbr.rel (0) target = $region17
  $region16: #{_lambda_.15} parent=0 // pred_region
    _
  $region17: #{_lambda_.15} parent=0 // pred_fallthru
    _
  // Predicated region
  $region18: #{_lambda_.15} parent=0 // pred_check
    _
  $region19: #{_lambda_.15} parent=0 // pred_check_branch
    %19 = sbr.rel (0) target = $region21
  $region20: #{_lambda_.15} parent=0 // pred_region
    _
  $region21: #{_lambda_.15} parent=0 // pred_fallthru
    _
  %v21 = vld [vmem:[%s0] sm:$0xf]
  %v22 = vld [vmem:[%s0 + $0x4] sm:$0xf]
  %v23 = vld [vmem:[%s0 + $0x8] sm:$0x1]
  %v24 = vunpack.c.l.bf16 %v21
  %v25 = vunpack.c.l.bf16 %v22
  %v26 = vunpack.c.l.bf16 %v23
  %vm27 = vcmask 130048
  %v28 = vsel %vm27, %v24, 0.0
  %29 = vadd.xlane.f32.xlu0 %v28
  %v30 = vpop.xlane.xlu0 %29
  %v31 = vsel %vm27, %v25, 0.0
  %32 = vadd.xlane.f32.xlu0 %v31
  %v33 = vpop.xlane.xlu0 %32
  %vm34 = vcmask 123904
  %v35 = vsel %vm34, %v26, 0.0
  %36 = vadd.xlane.f32.xlu0 %v35
  %v37 = vpop.xlane.xlu0 %36
  %v38 = vrcp.pop 16.0
  %v39 = vmul.f32 16.0, %v38
  %v40 = vsub.f32 1.0, %v39
  %v41 = vmul.f32 %v38, %v40
  %v42 = vadd.f32 %v38, %v41
  %vm43 = vweird.f32 %v38
  %v44 = vsel %vm43, %v38, %v42
  %v45 = vmul.f32 %v30, %v44
  %v46 = vmul.f32 %v33, %v44
  %v47 = vmul.f32 %v37, %v44
  %v48 = vsub.f32 %v24, %v45
  %v49 = vsub.f32 %v25, %v46
  %v50 = vsub.f32 %v26, %v47
  %v51 = vmul.f32 %v48, %v48
  %v52 = vmul.f32 %v49, %v49
  %v53 = vmul.f32 %v50, %v50
  %v54 = vsel %vm27, %v51, 0.0
  %55 = vadd.xlane.f32.xlu0 %v54
  %v56 = vpop.xlane.xlu0 %55
  %v57 = vsel %vm27, %v52, 0.0
  %58 = vadd.xlane.f32.xlu0 %v57
  %v59 = vpop.xlane.xlu0 %58
  %v60 = vsel %vm34, %v53, 0.0
  %61 = vadd.xlane.f32.xlu0 %v60
  %v62 = vpop.xlane.xlu0 %61
  %v63 = vmul.f32 %v56, %v44
  %v64 = vmul.f32 %v59, %v44
  %v65 = vmul.f32 %v62, %v44
  %v66 = vadd.f32 %v63, 1e-05
  %v67 = vadd.f32 %v64, 1e-05
  %v68 = vadd.f32 %v65, 1e-05
  %v69 = vrsqrt.pop %v66
  %v70 = vmul.f32 %v69, %v66
  %v71 = vmul.f32 %v70, %v69
  %v72 = vmul.f32 0.5, %v71
  %v73 = vsub.f32 1.5, %v72
  %v74 = vmul.f32 %v69, %v73
  %vm75 = vweird.f32 %v66
  %vm76 = vweird.f32 %v69
  %vm77 = vmor %vm75, %vm76
  %v78 = vsel %vm77, %v69, %v74
  %v79 = vrsqrt.pop %v67
  %v80 = vmul.f32 %v79, %v67
  %v81 = vmul.f32 %v80, %v79
  %v82 = vmul.f32 0.5, %v81
  %v83 = vsub.f32 1.5, %v82
  %v84 = vmul.f32 %v79, %v83
  %vm85 = vweird.f32 %v67
  %vm86 = vweird.f32 %v79
  %vm87 = vmor %vm85, %vm86
  %v88 = vsel %vm87, %v79, %v84
  %v89 = vrsqrt.pop %v68
  %v90 = vmul.f32 %v89, %v68
  %v91 = vmul.f32 %v90, %v89
  %v92 = vmul.f32 0.5, %v91
  %v93 = vsub.f32 1.5, %v92
  %v94 = vmul.f32 %v89, %v93
  %vm95 = vweird.f32 %v68
  %vm96 = vweird.f32 %v89
  %vm97 = vmor %vm95, %vm96
  %v98 = vsel %vm97, %v89, %v94
  %v99 = vmul.f32 %v48, %v78
  %v100 = vmul.f32 %v49, %v88
  %v101 = vmul.f32 %v50, %v98
  %v102 = vld [vmem:[%s1] sm:$0x1]
  %v104 = vperm.slane %v102, 0
  %v106 = vmul.f32 %v99, %v104
  %v107 = vmul.f32 %v100, %v104
  %v108 = vmul.f32 %v101, %v104
  %v109 = vld [vmem:[%s2] sm:$0x1]
  %v111 = vperm.slane %v109, 0
  %v113 = vadd.f32 %v106, %v111
  %v114 = vadd.f32 %v107, %v111
  %v115 = vadd.f32 %v108, %v111
  %v116 = vpack.c.bf16 %v114, %v113
  %v117 = vpack.c.bf16 %v115, %v115
  %v118 = vld [vmem:[%s3] sm:$0xf]
  %v119 = vld [vmem:[%s3 + $0x4] sm:$0xf]
  %v120 = vld [vmem:[%s4] sm:$0x1]
  %v122 = vperm.slane %v120, 0
  %v126 = vunpack.c.l.b16 %v118
  %v127 = vunpack.c.l.b16 %v119
  %v128 = vpack.c.b16 %v127, %v126
  %v131 = vsel %vm27, %v116, 0
  %v134 = vsel %vm27, %v117, 0
  %136 = vmatpush.bf16.msra.mxu0 0
  %137 = vmatpush.bf16.msra.mxu0 0
  %138 = vmatpush.bf16.msra.mxu0 0
  %139 = vmatpush.bf16.msra.mxu0 0
  %140 = vmatpush.bf16.msra.mxu0 0
  %141 = vmatpush.bf16.msra.mxu0 0
  %142 = vmatpush.bf16.msra.mxu0 0
  %143 = vmatpush.bf16.msra.mxu0 %v128
  %144 = vmatmul.bf16.gmra.mxu0 %v131
  %v145 = vpop.f32.mrf.mxu0
  %v146 = vadd.f32 %v122, %v145
  %v147 = vpop.f32.mrf.mxu0
  %v148 = vadd.f32 %v122, %v147
  %149 = vmatmul.bf16.gmra.mxu0 %v134
  %v150 = vpop.f32.mrf.mxu0
  %v151 = vadd.f32 %v122, %v150
  %v152 = vpop.f32.mrf.mxu0
  %153 = vdwg.mxu0
  %v154 = vpack.c.bf16 %v146, %v146
  %v155 = vpack.c.bf16 %v148, %v148
  %v156 = vpack.c.bf16 %v151, %v151
  %vm157 = vcmask 388096
  %158 = vst.msk [vmem:[%s5] sm:$0xf] %vm157, %v154
  %159 = vst.msk [vmem:[%s5 + $0x4] sm:$0xf] %vm157, %v155
  %vm160 = vcmask 385024
  %161 = vst.msk [vmem:[%s5 + $0x8] sm:$0x1] %vm160, %v156
  // Predicated region
  $region22: #{_lambda_.15} parent=0 // pred_check
    _
  $region23: #{_lambda_.15} parent=0 // pred_check_branch
    %163 = sbr.rel (0) target = $region25
  $region24: #{_lambda_.15} parent=0 // pred_region
    _
  $region25: #{_lambda_.15} parent=0 // pred_fallthru
    _
  // Predicated region
  $region26: #{_lambda_.15} parent=0 // pred_check
    _
  $region27: #{_lambda_.15} parent=0 // pred_check_branch
    %165 = sbr.rel (0) target = $region29
  $region28: #{_lambda_.15} parent=0 // pred_region
    _
  $region29: #{_lambda_.15} parent=0 // pred_fallthru
    _

// kernel: _lambda_.17
$region0: #{_lambda_.17}
  #allocation0 [shape = 'u32[]', space=smem, size = 0x4, offset = 0x4, fixed_abs, tag = 'smem constant byte address 0x4 - core index']
  #allocation1 [shape = 'u32[72,128]{1,0:T(1,128)}', space=vmem, size = 0x9000, scoped, tag = 'internal scratch']
  %s0 = inlined_call_operand.vmem [shape: bf16[18,16], index: 0, kind: input, shape index: {}]
  %s1 = inlined_call_operand.vmem [shape: bf16[16,16], index: 1, kind: input, shape index: {}]
  %s2 = inlined_call_operand.vmem [shape: f32[1,16], index: 2, kind: input, shape index: {}]
  %s3 = inlined_call_operand.vmem [shape: bf16[18,16], index: 3, kind: input, shape index: {}]
  %s4 = inlined_call_operand.vmem [shape: bf16[18,16], index: 4, kind: output, shape index: {}]
  %s5 = sld [smem:[#allocation0]]
  $region26: #{_lambda_.17} parent=0
    _
  %s7 = ssub.s32 1, %s5
  %s8 = scalar_select 0, %s7, %s5
  // Predicated region
  $region2: #{_lambda_.17} parent=0 // pred_check
    _
  $region3: #{_lambda_.17} parent=0 // pred_check_branch
    %10 = sbr.rel (0) target = $region5
  $region4: #{_lambda_.17} parent=0 // pred_region
    _
  $region5: #{_lambda_.17} parent=0 // pred_fallthru
    _
  // Predicated region
  $region6: #{_lambda_.17} parent=0 // pred_check
    _
  $region7: #{_lambda_.17} parent=0 // pred_check_branch
    %12 = sbr.rel (0) target = $region9
  $region8: #{_lambda_.17} parent=0 // pred_region
    _
  $region9: #{_lambda_.17} parent=0 // pred_fallthru
    _
  // Predicated region
  $region10: #{_lambda_.17} parent=0 // pred_check
    _
  $region11: #{_lambda_.17} parent=0 // pred_check_branch
    %14 = sbr.rel (0) target = $region13
  $region12: #{_lambda_.17} parent=0 // pred_region
    _
  $region13: #{_lambda_.17} parent=0 // pred_fallthru
    _
  // Predicated region
  $region14: #{_lambda_.17} parent=0 // pred_check
    _
  $region15: #{_lambda_.17} parent=0 // pred_check_branch
    %16 = sbr.rel (0) target = $region17
  $region16: #{_lambda_.17} parent=0 // pred_region
    _
  $region17: #{_lambda_.17} parent=0 // pred_fallthru
    _
  %v18 = vld [vmem:[%s0] sm:$0xf]
  %v19 = vld [vmem:[%s0 + $0x4] sm:$0xf]
  %v20 = vld [vmem:[%s0 + $0x8] sm:$0x1]
  %v21 = vld [vmem:[%s1] sm:$0xf]
  %v22 = vld [vmem:[%s1 + $0x4] sm:$0xf]
  %v23 = vld [vmem:[%s2] sm:$0x1]
  %v25 = vperm.slane %v23, 0
  %v30 = vunpack.c.l.b16 %v18
  %v31 = vunpack.c.l.b16 %v19
  %v32 = vunpack.c.l.b16 %v20
  %v33 = vpack.c.b16 %v31, %v30
  %v34 = vpack.c.b16 %v32, %v32
  %v37 = vunpack.c.l.b16 %v21
  %v38 = vunpack.c.l.b16 %v22
  %v39 = vpack.c.b16 %v38, %v37
  %vm41 = vcmask 130048
  %v43 = vsel %vm41, %v33, 0
  %v46 = vsel %vm41, %v34, 0
  %48 = vmatpush.bf16.msra.mxu0 0
  %49 = vmatpush.bf16.msra.mxu0 0
  %50 = vmatpush.bf16.msra.mxu0 0
  %51 = vmatpush.bf16.msra.mxu0 0
  %52 = vmatpush.bf16.msra.mxu0 0
  %53 = vmatpush.bf16.msra.mxu0 0
  %54 = vmatpush.bf16.msra.mxu0 0
  %55 = vmatpush.bf16.msra.mxu0 %v39
  %56 = vmatmul.bf16.gmra.mxu0 %v43
  %v57 = vpop.f32.mrf.mxu0
  %v58 = vadd.f32 %v25, %v57
  %v59 = vpop.f32.mrf.mxu0
  %v60 = vadd.f32 %v25, %v59
  %61 = vmatmul.bf16.gmra.mxu0 %v46
  %v62 = vpop.f32.mrf.mxu0
  %v63 = vadd.f32 %v25, %v62
  %v64 = vpop.f32.mrf.mxu0
  %65 = vdwg.mxu0
  %v66 = vld [vmem:[%s3] sm:$0xf]
  %v67 = vld [vmem:[%s3 + $0x4] sm:$0xf]
  %v68 = vld [vmem:[%s3 + $0x8] sm:$0x1]
  %v69 = vunpack.c.l.bf16 %v66
  %v70 = vunpack.c.l.bf16 %v67
  %v71 = vunpack.c.l.bf16 %v68
  %v72 = vadd.f32 %v58, %v69
  %v73 = vadd.f32 %v60, %v70
  %v74 = vadd.f32 %v63, %v71
  %v75 = vpack.c.bf16 %v72, %v72
  %v76 = vpack.c.bf16 %v73, %v73
  %v77 = vpack.c.bf16 %v74, %v74
  %vm78 = vcmask 125952
  %79 = vst.msk [vmem:[%s4] sm:$0xf] %vm78, %v75
  %80 = vst.msk [vmem:[%s4 + $0x4] sm:$0xf] %vm78, %v76
  %vm81 = vcmask 122880
  %82 = vst.msk [vmem:[%s4 + $0x8] sm:$0x1] %vm81, %v77
  // Predicated region
  $region18: #{_lambda_.17} parent=0 // pred_check
    _
  $region19: #{_lambda_.17} parent=0 // pred_check_branch
    %84 = sbr.rel (0) target = $region21
  $region20: #{_lambda_.17} parent=0 // pred_region
    _
  $region21: #{_lambda_.17} parent=0 // pred_fallthru
    _
  // Predicated region
  $region22: #{_lambda_.17} parent=0 // pred_check
    _
  $region23: #{_lambda_.17} parent=0 // pred_check_branch
    %86 = sbr.rel (0) target = $region25
  $region24: #{_lambda_.17} parent=0 // pred_region
    _
  $region25: #{_lambda_.17} parent=0 // pred_fallthru
    _

// kernel: _lambda_.16
$region0: #{_lambda_.16}
  #allocation0 [shape = 'u32[]', space=smem, size = 0x4, offset = 0x4, fixed_abs, tag = 'smem constant byte address 0x4 - core index']
  #allocation1 [shape = 'u32[72,128]{1,0:T(1,128)}', space=vmem, size = 0x9000, scoped, tag = 'internal scratch']
  #allocation2 [shape = 'f32[18,2]{1,0:T(8,128)}', space=vmem, size = 0x3000, scoped, tag = 'scratch operand']
  #allocation3 [shape = 'f32[18,2]{1,0:T(8,128)}', space=vmem, size = 0x3000, scoped, tag = 'scratch operand']
  #allocation4 [shape = 'f32[18,16]{1,0:T(8,128)}', space=vmem, size = 0x3000, scoped, tag = 'scratch operand']
  %s0 = inlined_call_operand.vmem [shape: bf16[18,16], index: 0, kind: input, shape index: {}]
  %s1 = inlined_call_operand.vmem [shape: bf16[18,8,16], index: 1, kind: input, shape index: {}]
  %s2 = inlined_call_operand.vmem [shape: bf16[18,8,16], index: 2, kind: input, shape index: {}]
  %s3 = inlined_call_operand.vmem [shape: f32[18,2,8], index: 3, kind: input, shape index: {}]
  %s4 = inlined_call_operand.vmem [shape: f32[18,2,8], index: 4, kind: input, shape index: {}]
  %s5 = inlined_call_operand.vmem [shape: bf16[18,16], index: 5, kind: output, shape index: {}]
  %s6 = sld [smem:[#allocation0]]
  $region38: #{_lambda_.16} parent=0
    _
  %s8 = ssub.s32 1, %s6
  %s9 = scalar_select 0, %s8, %s6
  // Predicated region
  $region2: #{_lambda_.16} parent=0 // pred_check
    _
  $region3: #{_lambda_.16} parent=0 // pred_check_branch
    %11 = sbr.rel (0) target = $region5
  $region4: #{_lambda_.16} parent=0 // pred_region
    _
  $region5: #{_lambda_.16} parent=0 // pred_fallthru
    _
  // Predicated region
  $region6: #{_lambda_.16} parent=0 // pred_check
    _
  $region7: #{_lambda_.16} parent=0 // pred_check_branch
    %13 = sbr.rel (0) target = $region9
  $region8: #{_lambda_.16} parent=0 // pred_region
    _
  $region9: #{_lambda_.16} parent=0 // pred_fallthru
    _
  // Predicated region
  $region10: #{_lambda_.16} parent=0 // pred_check
    _
  $region11: #{_lambda_.16} parent=0 // pred_check_branch
    %15 = sbr.rel (0) target = $region13
  $region12: #{_lambda_.16} parent=0 // pred_region
    _
  $region13: #{_lambda_.16} parent=0 // pred_fallthru
    _
  // Predicated region
  $region14: #{_lambda_.16} parent=0 // pred_check
    _
  $region15: #{_lambda_.16} parent=0 // pred_check_branch
    %17 = sbr.rel (0) target = $region17
  $region16: #{_lambda_.16} parent=0 // pred_region
    _
  $region17: #{_lambda_.16} parent=0 // pred_fallthru
    _
  // Predicated region
  $region18: #{_lambda_.16} parent=0 // pred_check
    _
  $region19: #{_lambda_.16} parent=0 // pred_check_branch
    %19 = sbr.rel (0) target = $region21
  $region20: #{_lambda_.16} parent=0 // pred_region
    _
  $region21: #{_lambda_.16} parent=0 // pred_fallthru
    _
  %p20 = scmp.eq.s32.totalorder 0, 0
  // Predicated region
  $region22: #{_lambda_.16} parent=0 // pred_check
    %p21 = pneg %p20
  $region23: #{_lambda_.16} parent=0 // pred_check_branch
    %23 = sbr.rel (%p21) target = $region25
  $region24: #{_lambda_.16} parent=0 // pred_region
    %vm24 = vcmask 15360
    %25 = vst.msk [vmem:[#allocation2] sm:$0xff] %vm24, -1e+30
    %26 = vst.msk [vmem:[#allocation2 + $0x8] sm:$0xff] %vm24, -1e+30
    %vm27 = vcmask 9216
    %28 = vst.msk [vmem:[#allocation2 + $0x10] sm:$0x3] %vm27, -1e+30
    %29 = vst.msk [vmem:[#allocation3] sm:$0xff] %vm24, 0.0
    %30 = vst.msk [vmem:[#allocation3 + $0x8] sm:$0xff] %vm24, 0.0
    %31 = vst.msk [vmem:[#allocation3 + $0x10] sm:$0x3] %vm27, 0.0
    %vm32 = vcmask 130048
    %33 = vst.msk [vmem:[#allocation4] sm:$0xff] %vm32, 0.0
    %34 = vst.msk [vmem:[#allocation4 + $0x8] sm:$0xff] %vm32, 0.0
    %vm35 = vcmask 123904
    %36 = vst.msk [vmem:[#allocation4 + $0x10] sm:$0x3] %vm35, 0.0
  $region25: #{_lambda_.16} parent=0 // pred_fallthru
    _
  %v37 = vld [vmem:[%s0] sm:$0xf]
  %v38 = vld [vmem:[%s0 + $0x4] sm:$0xf]
  %v39 = vld [vmem:[%s0 + $0x8] sm:$0x1]
  %v40 = vld [vmem:[%s1] sm:$0xf]
  %v41 = vld [vmem:[%s1 + $0x4] sm:$0xf]
  %v42 = vld [vmem:[%s1 + $0x8] sm:$0xf]
  %v43 = vld [vmem:[%s1 + $0xc] sm:$0xf]
  %v44 = vld [vmem:[%s1 + $0x10] sm:$0xf]
  %v45 = vld [vmem:[%s1 + $0x14] sm:$0xf]
  %v46 = vld [vmem:[%s1 + $0x18] sm:$0xf]
  %v47 = vld [vmem:[%s1 + $0x1c] sm:$0xf]
  %v48 = vld [vmem:[%s1 + $0x20] sm:$0xf]
  %v49 = vld [vmem:[%s1 + $0x24] sm:$0xf]
  %v50 = vld [vmem:[%s1 + $0x28] sm:$0xf]
  %v51 = vld [vmem:[%s1 + $0x2c] sm:$0xf]
  %v52 = vld [vmem:[%s1 + $0x30] sm:$0xf]
  %v53 = vld [vmem:[%s1 + $0x34] sm:$0xf]
  %v54 = vld [vmem:[%s1 + $0x38] sm:$0xf]
  %v55 = vld [vmem:[%s1 + $0x3c] sm:$0xf]
  %v56 = vld [vmem:[%s1 + $0x40] sm:$0xf]
  %v57 = vld [vmem:[%s1 + $0x44] sm:$0xf]
  %v58 = vld [vmem:[%s2] sm:$0xf]
  %v59 = vld [vmem:[%s2 + $0x4] sm:$0xf]
  %v60 = vld [vmem:[%s2 + $0x8] sm:$0xf]
  %v61 = vld [vmem:[%s2 + $0xc] sm:$0xf]
  %v62 = vld [vmem:[%s2 + $0x10] sm:$0xf]
  %v63 = vld [vmem:[%s2 + $0x14] sm:$0xf]
  %v64 = vld [vmem:[%s2 + $0x18] sm:$0xf]
  %v65 = vld [vmem:[%s2 + $0x1c] sm:$0xf]
  %v66 = vld [vmem:[%s2 + $0x20] sm:$0xf]
  %v67 = vld [vmem:[%s2 + $0x24] sm:$0xf]
  %v68 = vld [vmem:[%s2 + $0x28] sm:$0xf]
  %v69 = vld [vmem:[%s2 + $0x2c] sm:$0xf]
  %v70 = vld [vmem:[%s2 + $0x30] sm:$0xf]
  %v71 = vld [vmem:[%s2 + $0x34] sm:$0xf]
  %v72 = vld [vmem:[%s2 + $0x38] sm:$0xf]
  %v73 = vld [vmem:[%s2 + $0x3c] sm:$0xf]
  %v74 = vld [vmem:[%s2 + $0x40] sm:$0xf]
  %v75 = vld [vmem:[%s2 + $0x44] sm:$0xf]
  %v76 = vld [vmem:[%s3] sm:$0x3]
  %v77 = vld [vmem:[%s3 + $0x2] sm:$0x3]
  %v78 = vld [vmem:[%s3 + $0x4] sm:$0x3]
  %v79 = vld [vmem:[%s3 + $0x6] sm:$0x3]
  %v80 = vld [vmem:[%s3 + $0x8] sm:$0x3]
  %v81 = vld [vmem:[%s3 + $0xa] sm:$0x3]
  %v82 = vld [vmem:[%s3 + $0xc] sm:$0x3]
  %v83 = vld [vmem:[%s3 + $0xe] sm:$0x3]
  %v84 = vld [vmem:[%s3 + $0x10] sm:$0x3]
  %v85 = vld [vmem:[%s3 + $0x12] sm:$0x3]
  %v86 = vld [vmem:[%s3 + $0x14] sm:$0x3]
  %v87 = vld [vmem:[%s3 + $0x16] sm:$0x3]
  %v88 = vld [vmem:[%s3 + $0x18] sm:$0x3]
  %v89 = vld [vmem:[%s3 + $0x1a] sm:$0x3]
  %v90 = vld [vmem:[%s3 + $0x1c] sm:$0x3]
  %v91 = vld [vmem:[%s3 + $0x1e] sm:$0x3]
  %v92 = vld [vmem:[%s3 + $0x20] sm:$0x3]
  %v93 = vld [vmem:[%s3 + $0x22] sm:$0x3]
  %v94 = vld [vmem:[%s4] sm:$0x3]
  %v95 = vld [vmem:[%s4 + $0x2] sm:$0x3]
  %v96 = vld [vmem:[%s4 + $0x4] sm:$0x3]
  %v97 = vld [vmem:[%s4 + $0x6] sm:$0x3]
  %v98 = vld [vmem:[%s4 + $0x8] sm:$0x3]
  %v99 = vld [vmem:[%s4 + $0xa] sm:$0x3]
  %v100 = vld [vmem:[%s4 + $0xc] sm:$0x3]
  %v101 = vld [vmem:[%s4 + $0xe] sm:$0x3]
  %v102 = vld [vmem:[%s4 + $0x10] sm:$0x3]
  %v103 = vld [vmem:[%s4 + $0x12] sm:$0x3]
  %v104 = vld [vmem:[%s4 + $0x14] sm:$0x3]
  %v105 = vld [vmem:[%s4 + $0x16] sm:$0x3]
  %v106 = vld [vmem:[%s4 + $0x18] sm:$0x3]
  %v107 = vld [vmem:[%s4 + $0x1a] sm:$0x3]
  %v108 = vld [vmem:[%s4 + $0x1c] sm:$0x3]
  %v109 = vld [vmem:[%s4 + $0x1e] sm:$0x3]
  %v110 = vld [vmem:[%s4 + $0x20] sm:$0x3]
  %v111 = vld [vmem:[%s4 + $0x22] sm:$0x3]
  %s112 = smul.u32 0, 8
  %v113 = vlaneseq
  %v114 = vand.u32 %v113, 127
  %v115 = vstv %s112
  %v116 = vadd.s32 %v115, %v114
  %v117 = vld [vmem:[#allocation2] sm:$0xff]
  %v118 = vld [vmem:[#allocation2 + $0x8] sm:$0xff]
  %v119 = vld [vmem:[#allocation2 + $0x10] sm:$0x3]
  %v120 = vld [vmem:[#allocation3] sm:$0xff]
  %v121 = vld [vmem:[#allocation3 + $0x8] sm:$0xff]
  %v122 = vld [vmem:[#allocation3 + $0x10] sm:$0x3]
  %v123 = vld [vmem:[#allocation4] sm:$0xff]
  %v124 = vld [vmem:[#allocation4 + $0x8] sm:$0xff]
  %v125 = vld [vmem:[#allocation4 + $0x10] sm:$0x3]
  %v126 = vunpack.c.l.bf16 %v37
  %v127 = vunpack.c.l.bf16 %v38
  %v128 = vunpack.c.l.bf16 %v39
  %v129 = vunpack.c.l.bf16 %v40
  %v130 = vunpack.c.l.bf16 %v41
  %v131 = vunpack.c.l.bf16 %v42
  %v132 = vunpack.c.l.bf16 %v43
  %v133 = vunpack.c.l.bf16 %v44
  %v134 = vunpack.c.l.bf16 %v45
  %v135 = vunpack.c.l.bf16 %v46
  %v136 = vunpack.c.l.bf16 %v47
  %v137 = vunpack.c.l.bf16 %v48
  %v138 = vunpack.c.l.bf16 %v49
  %v139 = vunpack.c.l.bf16 %v50
  %v140 = vunpack.c.l.bf16 %v51
  %v141 = vunpack.c.l.bf16 %v52
  %v142 = vunpack.c.l.bf16 %v53
  %v143 = vunpack.c.l.bf16 %v54
  %v144 = vunpack.c.l.bf16 %v55
  %v145 = vunpack.c.l.bf16 %v56
  %v146 = vunpack.c.l.bf16 %v57
  %v147 = vunpack.c.l.bf16 %v58
  %v148 = vunpack.c.l.bf16 %v59
  %v149 = vunpack.c.l.bf16 %v60
  %v150 = vunpack.c.l.bf16 %v61
  %v151 = vunpack.c.l.bf16 %v62
  %v152 = vunpack.c.l.bf16 %v63
  %v153 = vunpack.c.l.bf16 %v64
  %v154 = vunpack.c.l.bf16 %v65
  %v155 = vunpack.c.l.bf16 %v66
  %v156 = vunpack.c.l.bf16 %v67
  %v157 = vunpack.c.l.bf16 %v68
  %v158 = vunpack.c.l.bf16 %v69
  %v159 = vunpack.c.l.bf16 %v70
  %v160 = vunpack.c.l.bf16 %v71
  %v161 = vunpack.c.l.bf16 %v72
  %v162 = vunpack.c.l.bf16 %v73
  %v163 = vunpack.c.l.bf16 %v74
  %v164 = vunpack.c.l.bf16 %v75
  %v168 = vrot.slane %v126, 1
  %v169 = vrot.slane %v126, 2
  %v170 = vrot.slane %v126, 3
  %v171 = vrot.slane %v126, 4
  %v172 = vrot.slane %v126, 5
  %v173 = vrot.slane %v126, 6
  %v174 = vrot.slane %v126, 7
  %v175 = vrot.slane %v127, 1
  %v176 = vrot.slane %v127, 2
  %v177 = vrot.slane %v127, 3
  %v178 = vrot.slane %v127, 4
  %v179 = vrot.slane %v127, 5
  %v180 = vrot.slane %v127, 6
  %v181 = vrot.slane %v127, 7
  %v182 = vrot.slane %v128, 1
  %v183 = vperm.slane %v126, 0
  %v184 = vperm.slane %v168, 0
  %v185 = vperm.slane %v169, 0
  %v186 = vperm.slane %v170, 0
  %v187 = vperm.slane %v171, 0
  %v188 = vperm.slane %v172, 0
  %v189 = vperm.slane %v173, 0
  %v190 = vperm.slane %v174, 0
  %v191 = vperm.slane %v127, 0
  %v192 = vperm.slane %v175, 0
  %v193 = vperm.slane %v176, 0
  %v194 = vperm.slane %v177, 0
  %v195 = vperm.slane %v178, 0
  %v196 = vperm.slane %v179, 0
  %v197 = vperm.slane %v180, 0
  %v198 = vperm.slane %v181, 0
  %v199 = vperm.slane %v128, 0
  %v200 = vperm.slane %v182, 0
  %v219 = vmul.f32 %v183, %v129
  %v220 = vmul.f32 %v184, %v130
  %v221 = vmul.f32 %v185, %v131
  %v222 = vmul.f32 %v186, %v132
  %v223 = vmul.f32 %v187, %v133
  %v224 = vmul.f32 %v188, %v134
  %v225 = vmul.f32 %v189, %v135
  %v226 = vmul.f32 %v190, %v136
  %v227 = vmul.f32 %v191, %v137
  %v228 = vmul.f32 %v192, %v138
  %v229 = vmul.f32 %v193, %v139
  %v230 = vmul.f32 %v194, %v140
  %v231 = vmul.f32 %v195, %v141
  %v232 = vmul.f32 %v196, %v142
  %v233 = vmul.f32 %v197, %v143
  %v234 = vmul.f32 %v198, %v144
  %v235 = vmul.f32 %v199, %v145
  %v236 = vmul.f32 %v200, %v146
  %vm237 = vcmask 64512
  %v238 = vsel %vm237, %v219, 0.0
  %239 = vadd.xlane.f32.xlu0 %v238
  %v240 = vpop.xlane.xlu0 %239
  %v241 = vsel %vm237, %v220, 0.0
  %242 = vadd.xlane.f32.xlu0 %v241
  %v243 = vpop.xlane.xlu0 %242
  %v244 = vsel %vm237, %v221, 0.0
  %245 = vadd.xlane.f32.xlu0 %v244
  %v246 = vpop.xlane.xlu0 %245
  %v247 = vsel %vm237, %v222, 0.0
  %248 = vadd.xlane.f32.xlu0 %v247
  %v249 = vpop.xlane.xlu0 %248
  %v250 = vsel %vm237, %v223, 0.0
  %251 = vadd.xlane.f32.xlu0 %v250
  %v252 = vpop.xlane.xlu0 %251
  %v253 = vsel %vm237, %v224, 0.0
  %254 = vadd.xlane.f32.xlu0 %v253
  %v255 = vpop.xlane.xlu0 %254
  %v256 = vsel %vm237, %v225, 0.0
  %257 = vadd.xlane.f32.xlu0 %v256
  %v258 = vpop.xlane.xlu0 %257
  %v259 = vsel %vm237, %v226, 0.0
  %260 = vadd.xlane.f32.xlu0 %v259
  %v261 = vpop.xlane.xlu0 %260
  %v262 = vsel %vm237, %v227, 0.0
  %263 = vadd.xlane.f32.xlu0 %v262
  %v264 = vpop.xlane.xlu0 %263
  %v265 = vsel %vm237, %v228, 0.0
  %266 = vadd.xlane.f32.xlu0 %v265
  %v267 = vpop.xlane.xlu0 %266
  %v268 = vsel %vm237, %v229, 0.0
  %269 = vadd.xlane.f32.xlu0 %v268
  %v270 = vpop.xlane.xlu0 %269
  %v271 = vsel %vm237, %v230, 0.0
  %272 = vadd.xlane.f32.xlu0 %v271
  %v273 = vpop.xlane.xlu0 %272
  %v274 = vsel %vm237, %v231, 0.0
  %275 = vadd.xlane.f32.xlu0 %v274
  %v276 = vpop.xlane.xlu0 %275
  %v277 = vsel %vm237, %v232, 0.0
  %278 = vadd.xlane.f32.xlu0 %v277
  %v279 = vpop.xlane.xlu0 %278
  %v280 = vsel %vm237, %v233, 0.0
  %281 = vadd.xlane.f32.xlu0 %v280
  %v282 = vpop.xlane.xlu0 %281
  %v283 = vsel %vm237, %v234, 0.0
  %284 = vadd.xlane.f32.xlu0 %v283
  %v285 = vpop.xlane.xlu0 %284
  %v286 = vsel %vm237, %v235, 0.0
  %287 = vadd.xlane.f32.xlu0 %v286
  %v288 = vpop.xlane.xlu0 %287
  %v289 = vsel %vm237, %v236, 0.0
  %290 = vadd.xlane.f32.xlu0 %v289
  %v291 = vpop.xlane.xlu0 %290
  %v292 = vmul.f32 %v240, 0.35355338
  %v293 = vmul.f32 %v243, 0.35355338
  %v294 = vmul.f32 %v246, 0.35355338
  %v295 = vmul.f32 %v249, 0.35355338
  %v296 = vmul.f32 %v252, 0.35355338
  %v297 = vmul.f32 %v255, 0.35355338
  %v298 = vmul.f32 %v258, 0.35355338
  %v299 = vmul.f32 %v261, 0.35355338
  %v300 = vmul.f32 %v264, 0.35355338
  %v301 = vmul.f32 %v267, 0.35355338
  %v302 = vmul.f32 %v270, 0.35355338
  %v303 = vmul.f32 %v273, 0.35355338
  %v304 = vmul.f32 %v276, 0.35355338
  %v305 = vmul.f32 %v279, 0.35355338
  %v306 = vmul.f32 %v282, 0.35355338
  %v307 = vmul.f32 %v285, 0.35355338
  %v308 = vmul.f32 %v288, 0.35355338
  %v309 = vmul.f32 %v291, 0.35355338
  %v310 = vmul.f32 %v76, 0.17677669
  %v311 = vmul.f32 %v77, 0.17677669
  %v312 = vmul.f32 %v78, 0.17677669
  %v313 = vmul.f32 %v79, 0.17677669
  %v314 = vmul.f32 %v80, 0.17677669
  %v315 = vmul.f32 %v81, 0.17677669
  %v316 = vmul.f32 %v82, 0.17677669
  %v317 = vmul.f32 %v83, 0.17677669
  %v318 = vmul.f32 %v84, 0.17677669
  %v319 = vmul.f32 %v85, 0.17677669
  %v320 = vmul.f32 %v86, 0.17677669
  %v321 = vmul.f32 %v87, 0.17677669
  %v322 = vmul.f32 %v88, 0.17677669
  %v323 = vmul.f32 %v89, 0.17677669
  %v324 = vmul.f32 %v90, 0.17677669
  %v325 = vmul.f32 %v91, 0.17677669
  %v326 = vmul.f32 %v92, 0.17677669
  %v327 = vmul.f32 %v93, 0.17677669
  %v346 = vperm.slane %v310, 0
  %v347 = vlaneseq
  %v348 = vshrl.u32 %v347, 7
  %350 = vset.pattern.permute.xlu0 %v348
  %351 = vperm.xlu0 %350, %v346
  %v352 = vpop.permute.xlu0 %351
  %v353 = vperm.slane %v311, 0
  %v354 = vlaneseq
  %v355 = vshrl.u32 %v354, 7
  %357 = vset.pattern.permute.xlu0 %v355
  %358 = vperm.xlu0 %357, %v353
  %v359 = vpop.permute.xlu0 %358
  %v360 = vperm.slane %v312, 0
  %v361 = vlaneseq
  %v362 = vshrl.u32 %v361, 7
  %364 = vset.pattern.permute.xlu0 %v362
  %365 = vperm.xlu0 %364, %v360
  %v366 = vpop.permute.xlu0 %365
  %v367 = vperm.slane %v313, 0
  %v368 = vlaneseq
  %v369 = vshrl.u32 %v368, 7
  %371 = vset.pattern.permute.xlu0 %v369
  %372 = vperm.xlu0 %371, %v367
  %v373 = vpop.permute.xlu0 %372
  %v374 = vperm.slane %v314, 0
  %v375 = vlaneseq
  %v376 = vshrl.u32 %v375, 7
  %378 = vset.pattern.permute.xlu0 %v376
  %379 = vperm.xlu0 %378, %v374
  %v380 = vpop.permute.xlu0 %379
  %v381 = vperm.slane %v315, 0
  %v382 = vlaneseq
  %v383 = vshrl.u32 %v382, 7
  %385 = vset.pattern.permute.xlu0 %v383
  %386 = vperm.xlu0 %385, %v381
  %v387 = vpop.permute.xlu0 %386
  %v388 = vperm.slane %v316, 0
  %v389 = vlaneseq
  %v390 = vshrl.u32 %v389, 7
  %392 = vset.pattern.permute.xlu0 %v390
  %393 = vperm.xlu0 %392, %v388
  %v394 = vpop.permute.xlu0 %393
  %v395 = vperm.slane %v317, 0
  %v396 = vlaneseq
  %v397 = vshrl.u32 %v396, 7
  %399 = vset.pattern.permute.xlu0 %v397
  %400 = vperm.xlu0 %399, %v395
  %v401 = vpop.permute.xlu0 %400
  %v402 = vperm.slane %v318, 0
  %v403 = vlaneseq
  %v404 = vshrl.u32 %v403, 7
  %406 = vset.pattern.permute.xlu0 %v404
  %407 = vperm.xlu0 %406, %v402
  %v408 = vpop.permute.xlu0 %407
  %v409 = vperm.slane %v319, 0
  %v410 = vlaneseq
  %v411 = vshrl.u32 %v410, 7
  %413 = vset.pattern.permute.xlu0 %v411
  %414 = vperm.xlu0 %413, %v409
  %v415 = vpop.permute.xlu0 %414
  %v416 = vperm.slane %v320, 0
  %v417 = vlaneseq
  %v418 = vshrl.u32 %v417, 7
  %420 = vset.pattern.permute.xlu0 %v418
  %421 = vperm.xlu0 %420, %v416
  %v422 = vpop.permute.xlu0 %421
  %v423 = vperm.slane %v321, 0
  %v424 = vlaneseq
  %v425 = vshrl.u32 %v424, 7
  %427 = vset.pattern.permute.xlu0 %v425
  %428 = vperm.xlu0 %427, %v423
  %v429 = vpop.permute.xlu0 %428
  %v430 = vperm.slane %v322, 0
  %v431 = vlaneseq
  %v432 = vshrl.u32 %v431, 7
  %434 = vset.pattern.permute.xlu0 %v432
  %435 = vperm.xlu0 %434, %v430
  %v436 = vpop.permute.xlu0 %435
  %v437 = vperm.slane %v323, 0
  %v438 = vlaneseq
  %v439 = vshrl.u32 %v438, 7
  %441 = vset.pattern.permute.xlu0 %v439
  %442 = vperm.xlu0 %441, %v437
  %v443 = vpop.permute.xlu0 %442
  %v444 = vperm.slane %v324, 0
  %v445 = vlaneseq
  %v446 = vshrl.u32 %v445, 7
  %448 = vset.pattern.permute.xlu0 %v446
  %449 = vperm.xlu0 %448, %v444
  %v450 = vpop.permute.xlu0 %449
  %v451 = vperm.slane %v325, 0
  %v452 = vlaneseq
  %v453 = vshrl.u32 %v452, 7
  %455 = vset.pattern.permute.xlu0 %v453
  %456 = vperm.xlu0 %455, %v451
  %v457 = vpop.permute.xlu0 %456
  %v458 = vperm.slane %v326, 0
  %v459 = vlaneseq
  %v460 = vshrl.u32 %v459, 7
  %462 = vset.pattern.permute.xlu0 %v460
  %463 = vperm.xlu0 %462, %v458
  %v464 = vpop.permute.xlu0 %463
  %v465 = vperm.slane %v327, 0
  %v466 = vlaneseq
  %v467 = vshrl.u32 %v466, 7
  %469 = vset.pattern.permute.xlu0 %v467
  %470 = vperm.xlu0 %469, %v465
  %v471 = vpop.permute.xlu0 %470
  %v490 = vsub.f32 %v292, %v352
  %v491 = vsub.f32 %v293, %v359
  %v492 = vsub.f32 %v294, %v366
  %v493 = vsub.f32 %v295, %v373
  %v494 = vsub.f32 %v296, %v380
  %v495 = vsub.f32 %v297, %v387
  %v496 = vsub.f32 %v298, %v394
  %v497 = vsub.f32 %v299, %v401
  %v498 = vsub.f32 %v300, %v408
  %v499 = vsub.f32 %v301, %v415
  %v500 = vsub.f32 %v302, %v422
  %v501 = vsub.f32 %v303, %v429
  %v502 = vsub.f32 %v304, %v436
  %v503 = vsub.f32 %v305, %v443
  %v504 = vsub.f32 %v306, %v450
  %v505 = vsub.f32 %v307, %v457
  %v506 = vsub.f32 %v308, %v464
  %v507 = vsub.f32 %v309, %v471
  %v526 = vperm.slane %v94, 0
  %v527 = vlaneseq
  %v528 = vshrl.u32 %v527, 7
  %530 = vset.pattern.permute.xlu0 %v528
  %531 = vperm.xlu0 %530, %v526
  %v532 = vpop.permute.xlu0 %531
  %v533 = vperm.slane %v95, 0
  %v534 = vlaneseq
  %v535 = vshrl.u32 %v534, 7
  %537 = vset.pattern.permute.xlu0 %v535
  %538 = vperm.xlu0 %537, %v533
  %v539 = vpop.permute.xlu0 %538
  %v540 = vperm.slane %v96, 0
  %v541 = vlaneseq
  %v542 = vshrl.u32 %v541, 7
  %544 = vset.pattern.permute.xlu0 %v542
  %545 = vperm.xlu0 %544, %v540
  %v546 = vpop.permute.xlu0 %545
  %v547 = vperm.slane %v97, 0
  %v548 = vlaneseq
  %v549 = vshrl.u32 %v548, 7
  %551 = vset.pattern.permute.xlu0 %v549
  %552 = vperm.xlu0 %551, %v547
  %v553 = vpop.permute.xlu0 %552
  %v554 = vperm.slane %v98, 0
  %v555 = vlaneseq
  %v556 = vshrl.u32 %v555, 7
  %558 = vset.pattern.permute.xlu0 %v556
  %559 = vperm.xlu0 %558, %v554
  %v560 = vpop.permute.xlu0 %559
  %v561 = vperm.slane %v99, 0
  %v562 = vlaneseq
  %v563 = vshrl.u32 %v562, 7
  %565 = vset.pattern.permute.xlu0 %v563
  %566 = vperm.xlu0 %565, %v561
  %v567 = vpop.permute.xlu0 %566
  %v568 = vperm.slane %v100, 0
  %v569 = vlaneseq
  %v570 = vshrl.u32 %v569, 7
  %572 = vset.pattern.permute.xlu0 %v570
  %573 = vperm.xlu0 %572, %v568
  %v574 = vpop.permute.xlu0 %573
  %v575 = vperm.slane %v101, 0
  %v576 = vlaneseq
  %v577 = vshrl.u32 %v576, 7
  %579 = vset.pattern.permute.xlu0 %v577
  %580 = vperm.xlu0 %579, %v575
  %v581 = vpop.permute.xlu0 %580
  %v582 = vperm.slane %v102, 0
  %v583 = vlaneseq
  %v584 = vshrl.u32 %v583, 7
  %586 = vset.pattern.permute.xlu0 %v584
  %587 = vperm.xlu0 %586, %v582
  %v588 = vpop.permute.xlu0 %587
  %v589 = vperm.slane %v103, 0
  %v590 = vlaneseq
  %v591 = vshrl.u32 %v590, 7
  %593 = vset.pattern.permute.xlu0 %v591
  %594 = vperm.xlu0 %593, %v589
  %v595 = vpop.permute.xlu0 %594
  %v596 = vperm.slane %v104, 0
  %v597 = vlaneseq
  %v598 = vshrl.u32 %v597, 7
  %600 = vset.pattern.permute.xlu0 %v598
  %601 = vperm.xlu0 %600, %v596
  %v602 = vpop.permute.xlu0 %601
  %v603 = vperm.slane %v105, 0
  %v604 = vlaneseq
  %v605 = vshrl.u32 %v604, 7
  %607 = vset.pattern.permute.xlu0 %v605
  %608 = vperm.xlu0 %607, %v603
  %v609 = vpop.permute.xlu0 %608
  %v610 = vperm.slane %v106, 0
  %v611 = vlaneseq
  %v612 = vshrl.u32 %v611, 7
  %614 = vset.pattern.permute.xlu0 %v612
  %615 = vperm.xlu0 %614, %v610
  %v616 = vpop.permute.xlu0 %615
  %v617 = vperm.slane %v107, 0
  %v618 = vlaneseq
  %v619 = vshrl.u32 %v618, 7
  %621 = vset.pattern.permute.xlu0 %v619
  %622 = vperm.xlu0 %621, %v617
  %v623 = vpop.permute.xlu0 %622
  %v624 = vperm.slane %v108, 0
  %v625 = vlaneseq
  %v626 = vshrl.u32 %v625, 7
  %628 = vset.pattern.permute.xlu0 %v626
  %629 = vperm.xlu0 %628, %v624
  %v630 = vpop.permute.xlu0 %629
  %v631 = vperm.slane %v109, 0
  %v632 = vlaneseq
  %v633 = vshrl.u32 %v632, 7
  %635 = vset.pattern.permute.xlu0 %v633
  %636 = vperm.xlu0 %635, %v631
  %v637 = vpop.permute.xlu0 %636
  %v638 = vperm.slane %v110, 0
  %v639 = vlaneseq
  %v640 = vshrl.u32 %v639, 7
  %642 = vset.pattern.permute.xlu0 %v640
  %643 = vperm.xlu0 %642, %v638
  %v644 = vpop.permute.xlu0 %643
  %v645 = vperm.slane %v111, 0
  %v646 = vlaneseq
  %v647 = vshrl.u32 %v646, 7
  %649 = vset.pattern.permute.xlu0 %v647
  %650 = vperm.xlu0 %649, %v645
  %v651 = vpop.permute.xlu0 %650
  %v670 = vadd.f32 %v490, %v532
  %v671 = vadd.f32 %v491, %v539
  %v672 = vadd.f32 %v492, %v546
  %v673 = vadd.f32 %v493, %v553
  %v674 = vadd.f32 %v494, %v560
  %v675 = vadd.f32 %v495, %v567
  %v676 = vadd.f32 %v496, %v574
  %v677 = vadd.f32 %v497, %v581
  %v678 = vadd.f32 %v498, %v588
  %v679 = vadd.f32 %v499, %v595
  %v680 = vadd.f32 %v500, %v602
  %v681 = vadd.f32 %v501, %v609
  %v682 = vadd.f32 %v502, %v616
  %v683 = vadd.f32 %v503, %v623
  %v684 = vadd.f32 %v504, %v630
  %v685 = vadd.f32 %v505, %v637
  %v686 = vadd.f32 %v506, %v644
  %v687 = vadd.f32 %v507, %v651
  %vm688 = vcmp.lt.s32.totalorder %v116, 6
  %707 = vset.pattern.permute.xlu0 0
  %708 = vperm.xlu0 %707, %v670
  %v709 = vpop.permute.xlu0 %708
  %710 = vset.pattern.permute.xlu0 0
  %711 = vperm.xlu0 %710, %v671
  %v712 = vpop.permute.xlu0 %711
  %713 = vset.pattern.permute.xlu0 0
  %714 = vperm.xlu0 %713, %v672
  %v715 = vpop.permute.xlu0 %714
  %716 = vset.pattern.permute.xlu0 0
  %717 = vperm.xlu0 %716, %v673
  %v718 = vpop.permute.xlu0 %717
  %719 = vset.pattern.permute.xlu0 0
  %720 = vperm.xlu0 %719, %v674
  %v721 = vpop.permute.xlu0 %720
  %722 = vset.pattern.permute.xlu0 0
  %723 = vperm.xlu0 %722, %v675
  %v724 = vpop.permute.xlu0 %723
  %725 = vset.pattern.permute.xlu0 0
  %726 = vperm.xlu0 %725, %v676
  %v727 = vpop.permute.xlu0 %726
  %728 = vset.pattern.permute.xlu0 0
  %729 = vperm.xlu0 %728, %v677
  %v730 = vpop.permute.xlu0 %729
  %731 = vset.pattern.permute.xlu0 0
  %732 = vperm.xlu0 %731, %v678
  %v733 = vpop.permute.xlu0 %732
  %734 = vset.pattern.permute.xlu0 0
  %735 = vperm.xlu0 %734, %v679
  %v736 = vpop.permute.xlu0 %735
  %737 = vset.pattern.permute.xlu0 0
  %738 = vperm.xlu0 %737, %v680
  %v739 = vpop.permute.xlu0 %738
  %740 = vset.pattern.permute.xlu0 0
  %741 = vperm.xlu0 %740, %v681
  %v742 = vpop.permute.xlu0 %741
  %743 = vset.pattern.permute.xlu0 0
  %744 = vperm.xlu0 %743, %v682
  %v745 = vpop.permute.xlu0 %744
  %746 = vset.pattern.permute.xlu0 0
  %747 = vperm.xlu0 %746, %v683
  %v748 = vpop.permute.xlu0 %747
  %749 = vset.pattern.permute.xlu0 0
  %750 = vperm.xlu0 %749, %v684
  %v751 = vpop.permute.xlu0 %750
  %752 = vset.pattern.permute.xlu0 0
  %753 = vperm.xlu0 %752, %v685
  %v754 = vpop.permute.xlu0 %753
  %755 = vset.pattern.permute.xlu0 0
  %756 = vperm.xlu0 %755, %v686
  %v757 = vpop.permute.xlu0 %756
  %758 = vset.pattern.permute.xlu0 0
  %759 = vperm.xlu0 %758, %v687
  %v760 = vpop.permute.xlu0 %759
  %v761 = vperm.slane %v709, %v114
  %v762 = vperm.slane %v712, %v114
  %v763 = vperm.slane %v715, %v114
  %v764 = vperm.slane %v718, %v114
  %v765 = vperm.slane %v721, %v114
  %v766 = vperm.slane %v724, %v114
  %v767 = vperm.slane %v727, %v114
  %v768 = vperm.slane %v730, %v114
  %v769 = vperm.slane %v733, %v114
  %v770 = vperm.slane %v736, %v114
  %v771 = vperm.slane %v739, %v114
  %v772 = vperm.slane %v742, %v114
  %v773 = vperm.slane %v745, %v114
  %v774 = vperm.slane %v748, %v114
  %v775 = vperm.slane %v751, %v114
  %v776 = vperm.slane %v754, %v114
  %v777 = vperm.slane %v757, %v114
  %v778 = vperm.slane %v760, %v114
  %vm779 = vcmask 1041409
  %v780 = vsel %vm779, %v762, %v761
  %vm781 = vcmask 1042434
  %v782 = vsel %vm781, %v763, %v780
  %vm783 = vcmask 1043459
  %v784 = vsel %vm783, %v764, %v782
  %vm785 = vcmask 1044484
  %v786 = vsel %vm785, %v765, %v784
  %vm787 = vcmask 1045509
  %v788 = vsel %vm787, %v766, %v786
  %vm789 = vcmask 1046534
  %v790 = vsel %vm789, %v767, %v788
  %vm791 = vcmask 1047559
  %v792 = vsel %vm791, %v768, %v790
  %v793 = vsel %vm779, %v770, %v769
  %v794 = vsel %vm781, %v771, %v793
  %v795 = vsel %vm783, %v772, %v794
  %v796 = vsel %vm785, %v773, %v795
  %v797 = vsel %vm787, %v774, %v796
  %v798 = vsel %vm789, %v775, %v797
  %v799 = vsel %vm791, %v776, %v798
  %v800 = vsel %vm779, %v778, %v777
  %v804 = vsel %vm688, %v792, -1e+30
  %v805 = vsel %vm688, %v799, -1e+30
  %v806 = vsel %vm688, %v800, -1e+30
  %v807 = vsel %vm237, %v804, -inf
  %808 = vmax.xlane.f32.xlu0 %v807
  %v809 = vpop.xlane.xlu0 %808
  %v810 = vsel %vm237, %v805, -inf
  %811 = vmax.xlane.f32.xlu0 %v810
  %v812 = vpop.xlane.xlu0 %811
  %vm813 = vcmask 58368
  %v814 = vsel %vm813, %v806, -inf
  %815 = vmax.xlane.f32.xlu0 %v814
  %v816 = vpop.xlane.xlu0 %815
  %v817 = vmax.f32 %v117, %v809
  %v818 = vmax.f32 %v118, %v812
  %v819 = vmax.f32 %v119, %v816
  %v820 = vsub.f32 %v117, %v817
  %v821 = vsub.f32 %v118, %v818
  %v822 = vsub.f32 %v119, %v819
  %v823 = vmul.f32 %v820, 1.442695
  %v824 = vpow.pop %v823
  %v825 = vmul.f32 %v821, 1.442695
  %v826 = vpow.pop %v825
  %v827 = vmul.f32 %v822, 1.442695
  %v828 = vpow.pop %v827
  %830 = vset.pattern.permute.xlu0 0
  %831 = vperm.xlu0 %830, %v817
  %v832 = vpop.permute.xlu0 %831
  %835 = vset.pattern.permute.xlu0 0
  %836 = vperm.xlu0 %835, %v818
  %v837 = vpop.permute.xlu0 %836
  %840 = vset.pattern.permute.xlu0 0
  %841 = vperm.xlu0 %840, %v819
  %v842 = vpop.permute.xlu0 %841
  %v844 = vsub.f32 %v804, %v832
  %v845 = vsub.f32 %v805, %v837
  %v846 = vsub.f32 %v806, %v842
  %v847 = vmul.f32 %v844, 1.442695
  %v848 = vpow.pop %v847
  %v849 = vmul.f32 %v845, 1.442695
  %v850 = vpow.pop %v849
  %v851 = vmul.f32 %v846, 1.442695
  %v852 = vpow.pop %v851
  %v853 = vmul.f32 %v824, %v120
  %v854 = vmul.f32 %v826, %v121
  %v855 = vmul.f32 %v828, %v122
  %v856 = vsel %vm237, %v848, 0.0
  %857 = vadd.xlane.f32.xlu0 %v856
  %v858 = vpop.xlane.xlu0 %857
  %v859 = vsel %vm237, %v850, 0.0
  %860 = vadd.xlane.f32.xlu0 %v859
  %v861 = vpop.xlane.xlu0 %860
  %v862 = vsel %vm813, %v852, 0.0
  %863 = vadd.xlane.f32.xlu0 %v862
  %v864 = vpop.xlane.xlu0 %863
  %v865 = vadd.f32 %v853, %v858
  %v866 = vadd.f32 %v854, %v861
  %v867 = vadd.f32 %v855, %v864
  %869 = vset.pattern.permute.xlu0 0
  %870 = vperm.xlu0 %869, %v824
  %v871 = vpop.permute.xlu0 %870
  %874 = vset.pattern.permute.xlu0 0
  %875 = vperm.xlu0 %874, %v826
  %v876 = vpop.permute.xlu0 %875
  %879 = vset.pattern.permute.xlu0 0
  %880 = vperm.xlu0 %879, %v828
  %v881 = vpop.permute.xlu0 %880
  %v883 = vmul.f32 %v871, %v123
  %v884 = vmul.f32 %v876, %v124
  %v885 = vmul.f32 %v881, %v125
  %v886 = vperm.slane %v848, 0
  %v887 = vlaneseq
  %v888 = vshrl.u32 %v887, 7
  %890 = vset.pattern.permute.xlu0 %v888
  %891 = vperm.xlu0 %890, %v886
  %v892 = vpop.permute.xlu0 %891
  %v893 = vperm.slane %v848, 1
  %v894 = vlaneseq
  %v895 = vshrl.u32 %v894, 7
  %897 = vset.pattern.permute.xlu0 %v895
  %898 = vperm.xlu0 %897, %v893
  %v899 = vpop.permute.xlu0 %898
  %v900 = vperm.slane %v848, 2
  %v901 = vlaneseq
  %v902 = vshrl.u32 %v901, 7
  %904 = vset.pattern.permute.xlu0 %v902
  %905 = vperm.xlu0 %904, %v900
  %v906 = vpop.permute.xlu0 %905
  %v907 = vperm.slane %v848, 3
  %v908 = vlaneseq
  %v909 = vshrl.u32 %v908, 7
  %911 = vset.pattern.permute.xlu0 %v909
  %912 = vperm.xlu0 %911, %v907
  %v913 = vpop.permute.xlu0 %912
  %v914 = vperm.slane %v848, 4
  %v915 = vlaneseq
  %v916 = vshrl.u32 %v915, 7
  %918 = vset.pattern.permute.xlu0 %v916
  %919 = vperm.xlu0 %918, %v914
  %v920 = vpop.permute.xlu0 %919
  %v921 = vperm.slane %v848, 5
  %v922 = vlaneseq
  %v923 = vshrl.u32 %v922, 7
  %925 = vset.pattern.permute.xlu0 %v923
  %926 = vperm.xlu0 %925, %v921
  %v927 = vpop.permute.xlu0 %926
  %v928 = vperm.slane %v848, 6
  %v929 = vlaneseq
  %v930 = vshrl.u32 %v929, 7
  %932 = vset.pattern.permute.xlu0 %v930
  %933 = vperm.xlu0 %932, %v928
  %v934 = vpop.permute.xlu0 %933
  %v935 = vperm.slane %v848, 7
  %v936 = vlaneseq
  %v937 = vshrl.u32 %v936, 7
  %939 = vset.pattern.permute.xlu0 %v937
  %940 = vperm.xlu0 %939, %v935
  %v941 = vpop.permute.xlu0 %940
  %v942 = vperm.slane %v850, 0
  %v943 = vlaneseq
  %v944 = vshrl.u32 %v943, 7
  %946 = vset.pattern.permute.xlu0 %v944
  %947 = vperm.xlu0 %946, %v942
  %v948 = vpop.permute.xlu0 %947
  %v949 = vperm.slane %v850, 1
  %v950 = vlaneseq
  %v951 = vshrl.u32 %v950, 7
  %953 = vset.pattern.permute.xlu0 %v951
  %954 = vperm.xlu0 %953, %v949
  %v955 = vpop.permute.xlu0 %954
  %v956 = vperm.slane %v850, 2
  %v957 = vlaneseq
  %v958 = vshrl.u32 %v957, 7
  %960 = vset.pattern.permute.xlu0 %v958
  %961 = vperm.xlu0 %960, %v956
  %v962 = vpop.permute.xlu0 %961
  %v963 = vperm.slane %v850, 3
  %v964 = vlaneseq
  %v965 = vshrl.u32 %v964, 7
  %967 = vset.pattern.permute.xlu0 %v965
  %968 = vperm.xlu0 %967, %v963
  %v969 = vpop.permute.xlu0 %968
  %v970 = vperm.slane %v850, 4
  %v971 = vlaneseq
  %v972 = vshrl.u32 %v971, 7
  %974 = vset.pattern.permute.xlu0 %v972
  %975 = vperm.xlu0 %974, %v970
  %v976 = vpop.permute.xlu0 %975
  %v977 = vperm.slane %v850, 5
  %v978 = vlaneseq
  %v979 = vshrl.u32 %v978, 7
  %981 = vset.pattern.permute.xlu0 %v979
  %982 = vperm.xlu0 %981, %v977
  %v983 = vpop.permute.xlu0 %982
  %v984 = vperm.slane %v850, 6
  %v985 = vlaneseq
  %v986 = vshrl.u32 %v985, 7
  %988 = vset.pattern.permute.xlu0 %v986
  %989 = vperm.xlu0 %988, %v984
  %v990 = vpop.permute.xlu0 %989
  %v991 = vperm.slane %v850, 7
  %v992 = vlaneseq
  %v993 = vshrl.u32 %v992, 7
  %995 = vset.pattern.permute.xlu0 %v993
  %996 = vperm.xlu0 %995, %v991
  %v997 = vpop.permute.xlu0 %996
  %v998 = vperm.slane %v852, 0
  %v999 = vlaneseq
  %v1000 = vshrl.u32 %v999, 7
  %1002 = vset.pattern.permute.xlu0 %v1000
  %1003 = vperm.xlu0 %1002, %v998
  %v1004 = vpop.permute.xlu0 %1003
  %v1005 = vperm.slane %v852, 1
  %v1006 = vlaneseq
  %v1007 = vshrl.u32 %v1006, 7
  %1009 = vset.pattern.permute.xlu0 %v1007
  %1010 = vperm.xlu0 %1009, %v1005
  %v1011 = vpop.permute.xlu0 %1010
  %v1012 = vmul.f32 %v892, %v147
  %v1013 = vmul.f32 %v899, %v148
  %v1014 = vmul.f32 %v906, %v149
  %v1015 = vmul.f32 %v913, %v150
  %v1016 = vmul.f32 %v920, %v151
  %v1017 = vmul.f32 %v927, %v152
  %v1018 = vmul.f32 %v934, %v153
  %v1019 = vmul.f32 %v941, %v154
  %v1020 = vmul.f32 %v948, %v155
  %v1021 = vmul.f32 %v955, %v156
  %v1022 = vmul.f32 %v962, %v157
  %v1023 = vmul.f32 %v969, %v158
  %v1024 = vmul.f32 %v976, %v159
  %v1025 = vmul.f32 %v983, %v160
  %v1026 = vmul.f32 %v990, %v161
  %v1027 = vmul.f32 %v997, %v162
  %v1028 = vmul.f32 %v1004, %v163
  %v1029 = vmul.f32 %v1011, %v164
  %v1030 = vsel %vm237, %v1012, 0.0
  %v1031 = vrot.slane %v1030, 4
  %v1032 = vadd.f32 %v1030, %v1031
  %v1033 = vrot.slane %v1032, 2
  %v1034 = vadd.f32 %v1032, %v1033
  %v1035 = vrot.slane %v1034, 1
  %v1036 = vadd.f32 %v1034, %v1035
  %v1037 = vsel %vm237, %v1013, 0.0
  %v1038 = vrot.slane %v1037, 4
  %v1039 = vadd.f32 %v1037, %v1038
  %v1040 = vrot.slane %v1039, 2
  %v1041 = vadd.f32 %v1039, %v1040
  %v1042 = vrot.slane %v1041, 1
  %v1043 = vadd.f32 %v1041, %v1042
  %v1044 = vsel %vm237, %v1014, 0.0
  %v1045 = vrot.slane %v1044, 4
  %v1046 = vadd.f32 %v1044, %v1045
  %v1047 = vrot.slane %v1046, 2
  %v1048 = vadd.f32 %v1046, %v1047
  %v1049 = vrot.slane %v1048, 1
  %v1050 = vadd.f32 %v1048, %v1049
  %v1051 = vsel %vm237, %v1015, 0.0
  %v1052 = vrot.slane %v1051, 4
  %v1053 = vadd.f32 %v1051, %v1052
  %v1054 = vrot.slane %v1053, 2
  %v1055 = vadd.f32 %v1053, %v1054
  %v1056 = vrot.slane %v1055, 1
  %v1057 = vadd.f32 %v1055, %v1056
  %v1058 = vsel %vm237, %v1016, 0.0
  %v1059 = vrot.slane %v1058, 4
  %v1060 = vadd.f32 %v1058, %v1059
  %v1061 = vrot.slane %v1060, 2
  %v1062 = vadd.f32 %v1060, %v1061
  %v1063 = vrot.slane %v1062, 1
  %v1064 = vadd.f32 %v1062, %v1063
  %v1065 = vsel %vm237, %v1017, 0.0
  %v1066 = vrot.slane %v1065, 4
  %v1067 = vadd.f32 %v1065, %v1066
  %v1068 = vrot.slane %v1067, 2
  %v1069 = vadd.f32 %v1067, %v1068
  %v1070 = vrot.slane %v1069, 1
  %v1071 = vadd.f32 %v1069, %v1070
  %v1072 = vsel %vm237, %v1018, 0.0
  %v1073 = vrot.slane %v1072, 4
  %v1074 = vadd.f32 %v1072, %v1073
  %v1075 = vrot.slane %v1074, 2
  %v1076 = vadd.f32 %v1074, %v1075
  %v1077 = vrot.slane %v1076, 1
  %v1078 = vadd.f32 %v1076, %v1077
  %v1079 = vsel %vm237, %v1019, 0.0
  %v1080 = vrot.slane %v1079, 4
  %v1081 = vadd.f32 %v1079, %v1080
  %v1082 = vrot.slane %v1081, 2
  %v1083 = vadd.f32 %v1081, %v1082
  %v1084 = vrot.slane %v1083, 1
  %v1085 = vadd.f32 %v1083, %v1084
  %v1086 = vsel %vm237, %v1020, 0.0
  %v1087 = vrot.slane %v1086, 4
  %v1088 = vadd.f32 %v1086, %v1087
  %v1089 = vrot.slane %v1088, 2
  %v1090 = vadd.f32 %v1088, %v1089
  %v1091 = vrot.slane %v1090, 1
  %v1092 = vadd.f32 %v1090, %v1091
  %v1093 = vsel %vm237, %v1021, 0.0
  %v1094 = vrot.slane %v1093, 4
  %v1095 = vadd.f32 %v1093, %v1094
  %v1096 = vrot.slane %v1095, 2
  %v1097 = vadd.f32 %v1095, %v1096
  %v1098 = vrot.slane %v1097, 1
  %v1099 = vadd.f32 %v1097, %v1098
  %v1100 = vsel %vm237, %v1022, 0.0
  %v1101 = vrot.slane %v1100, 4
  %v1102 = vadd.f32 %v1100, %v1101
  %v1103 = vrot.slane %v1102, 2
  %v1104 = vadd.f32 %v1102, %v1103
  %v1105 = vrot.slane %v1104, 1
  %v1106 = vadd.f32 %v1104, %v1105
  %v1107 = vsel %vm237, %v1023, 0.0
  %v1108 = vrot.slane %v1107, 4
  %v1109 = vadd.f32 %v1107, %v1108
  %v1110 = vrot.slane %v1109, 2
  %v1111 = vadd.f32 %v1109, %v1110
  %v1112 = vrot.slane %v1111, 1
  %v1113 = vadd.f32 %v1111, %v1112
  %v1114 = vsel %vm237, %v1024, 0.0
  %v1115 = vrot.slane %v1114, 4
  %v1116 = vadd.f32 %v1114, %v1115
  %v1117 = vrot.slane %v1116, 2
  %v1118 = vadd.f32 %v1116, %v1117
  %v1119 = vrot.slane %v1118, 1
  %v1120 = vadd.f32 %v1118, %v1119
  %v1121 = vsel %vm237, %v1025, 0.0
  %v1122 = vrot.slane %v1121, 4
  %v1123 = vadd.f32 %v1121, %v1122
  %v1124 = vrot.slane %v1123, 2
  %v1125 = vadd.f32 %v1123, %v1124
  %v1126 = vrot.slane %v1125, 1
  %v1127 = vadd.f32 %v1125, %v1126
  %v1128 = vsel %vm237, %v1026, 0.0
  %v1129 = vrot.slane %v1128, 4
  %v1130 = vadd.f32 %v1128, %v1129
  %v1131 = vrot.slane %v1130, 2
  %v1132 = vadd.f32 %v1130, %v1131
  %v1133 = vrot.slane %v1132, 1
  %v1134 = vadd.f32 %v1132, %v1133
  %v1135 = vsel %vm237, %v1027, 0.0
  %v1136 = vrot.slane %v1135, 4
  %v1137 = vadd.f32 %v1135, %v1136
  %v1138 = vrot.slane %v1137, 2
  %v1139 = vadd.f32 %v1137, %v1138
  %v1140 = vrot.slane %v1139, 1
  %v1141 = vadd.f32 %v1139, %v1140
  %v1142 = vsel %vm237, %v1028, 0.0
  %v1143 = vrot.slane %v1142, 4
  %v1144 = vadd.f32 %v1142, %v1143
  %v1145 = vrot.slane %v1144, 2
  %v1146 = vadd.f32 %v1144, %v1145
  %v1147 = vrot.slane %v1146, 1
  %v1148 = vadd.f32 %v1146, %v1147
  %v1149 = vsel %vm237, %v1029, 0.0
  %v1150 = vrot.slane %v1149, 4
  %v1151 = vadd.f32 %v1149, %v1150
  %v1152 = vrot.slane %v1151, 2
  %v1153 = vadd.f32 %v1151, %v1152
  %v1154 = vrot.slane %v1153, 1
  %v1155 = vadd.f32 %v1153, %v1154
  %v1174 = vsel %vm779, %v1043, %v1036
  %v1175 = vsel %vm781, %v1050, %v1174
  %v1176 = vsel %vm783, %v1057, %v1175
  %v1177 = vsel %vm785, %v1064, %v1176
  %v1178 = vsel %vm787, %v1071, %v1177
  %v1179 = vsel %vm789, %v1078, %v1178
  %v1180 = vsel %vm791, %v1085, %v1179
  %v1181 = vsel %vm779, %v1099, %v1092
  %v1182 = vsel %vm781, %v1106, %v1181
  %v1183 = vsel %vm783, %v1113, %v1182
  %v1184 = vsel %vm785, %v1120, %v1183
  %v1185 = vsel %vm787, %v1127, %v1184
  %v1186 = vsel %vm789, %v1134, %v1185
  %v1187 = vsel %vm791, %v1141, %v1186
  %v1188 = vsel %vm779, %v1155, %v1148
  %v1192 = vadd.f32 %v883, %v1180
  %v1193 = vadd.f32 %v884, %v1187
  %v1194 = vadd.f32 %v885, %v1188
  %1213 = vrot.lane.b32.xlu0 %v219, 120
  %v1214 = vpop.permute.xlu0 %1213
  %1215 = vrot.lane.b32.xlu0 %v220, 120
  %v1216 = vpop.permute.xlu0 %1215
  %1217 = vrot.lane.b32.xlu0 %v221, 120
  %v1218 = vpop.permute.xlu0 %1217
  %1219 = vrot.lane.b32.xlu0 %v222, 120
  %v1220 = vpop.permute.xlu0 %1219
  %1221 = vrot.lane.b32.xlu0 %v223, 120
  %v1222 = vpop.permute.xlu0 %1221
  %1223 = vrot.lane.b32.xlu0 %v224, 120
  %v1224 = vpop.permute.xlu0 %1223
  %1225 = vrot.lane.b32.xlu0 %v225, 120
  %v1226 = vpop.permute.xlu0 %1225
  %1227 = vrot.lane.b32.xlu0 %v226, 120
  %v1228 = vpop.permute.xlu0 %1227
  %1229 = vrot.lane.b32.xlu0 %v227, 120
  %v1230 = vpop.permute.xlu0 %1229
  %1231 = vrot.lane.b32.xlu0 %v228, 120
  %v1232 = vpop.permute.xlu0 %1231
  %1233 = vrot.lane.b32.xlu0 %v229, 120
  %v1234 = vpop.permute.xlu0 %1233
  %1235 = vrot.lane.b32.xlu0 %v230, 120
  %v1236 = vpop.permute.xlu0 %1235
  %1237 = vrot.lane.b32.xlu0 %v231, 120
  %v1238 = vpop.permute.xlu0 %1237
  %1239 = vrot.lane.b32.xlu0 %v232, 120
  %v1240 = vpop.permute.xlu0 %1239
  %1241 = vrot.lane.b32.xlu0 %v233, 120
  %v1242 = vpop.permute.xlu0 %1241
  %1243 = vrot.lane.b32.xlu0 %v234, 120
  %v1244 = vpop.permute.xlu0 %1243
  %1245 = vrot.lane.b32.xlu0 %v235, 120
  %v1246 = vpop.permute.xlu0 %1245
  %1247 = vrot.lane.b32.xlu0 %v236, 120
  %v1248 = vpop.permute.xlu0 %1247
  %v1267 = vsel %vm237, %v1214, 0.0
  %1268 = vadd.xlane.f32.xlu0 %v1267
  %v1269 = vpop.xlane.xlu0 %1268
  %v1270 = vsel %vm237, %v1216, 0.0
  %1271 = vadd.xlane.f32.xlu0 %v1270
  %v1272 = vpop.xlane.xlu0 %1271
  %v1273 = vsel %vm237, %v1218, 0.0
  %1274 = vadd.xlane.f32.xlu0 %v1273
  %v1275 = vpop.xlane.xlu0 %1274
  %v1276 = vsel %vm237, %v1220, 0.0
  %1277 = vadd.xlane.f32.xlu0 %v1276
  %v1278 = vpop.xlane.xlu0 %1277
  %v1279 = vsel %vm237, %v1222, 0.0
  %1280 = vadd.xlane.f32.xlu0 %v1279
  %v1281 = vpop.xlane.xlu0 %1280
  %v1282 = vsel %vm237, %v1224, 0.0
  %1283 = vadd.xlane.f32.xlu0 %v1282
  %v1284 = vpop.xlane.xlu0 %1283
  %v1285 = vsel %vm237, %v1226, 0.0
  %1286 = vadd.xlane.f32.xlu0 %v1285
  %v1287 = vpop.xlane.xlu0 %1286
  %v1288 = vsel %vm237, %v1228, 0.0
  %1289 = vadd.xlane.f32.xlu0 %v1288
  %v1290 = vpop.xlane.xlu0 %1289
  %v1291 = vsel %vm237, %v1230, 0.0
  %1292 = vadd.xlane.f32.xlu0 %v1291
  %v1293 = vpop.xlane.xlu0 %1292
  %v1294 = vsel %vm237, %v1232, 0.0
  %1295 = vadd.xlane.f32.xlu0 %v1294
  %v1296 = vpop.xlane.xlu0 %1295
  %v1297 = vsel %vm237, %v1234, 0.0
  %1298 = vadd.xlane.f32.xlu0 %v1297
  %v1299 = vpop.xlane.xlu0 %1298
  %v1300 = vsel %vm237, %v1236, 0.0
  %1301 = vadd.xlane.f32.xlu0 %v1300
  %v1302 = vpop.xlane.xlu0 %1301
  %v1303 = vsel %vm237, %v1238, 0.0
  %1304 = vadd.xlane.f32.xlu0 %v1303
  %v1305 = vpop.xlane.xlu0 %1304
  %v1306 = vsel %vm237, %v1240, 0.0
  %1307 = vadd.xlane.f32.xlu0 %v1306
  %v1308 = vpop.xlane.xlu0 %1307
  %v1309 = vsel %vm237, %v1242, 0.0
  %1310 = vadd.xlane.f32.xlu0 %v1309
  %v1311 = vpop.xlane.xlu0 %1310
  %v1312 = vsel %vm237, %v1244, 0.0
  %1313 = vadd.xlane.f32.xlu0 %v1312
  %v1314 = vpop.xlane.xlu0 %1313
  %v1315 = vsel %vm237, %v1246, 0.0
  %1316 = vadd.xlane.f32.xlu0 %v1315
  %v1317 = vpop.xlane.xlu0 %1316
  %v1318 = vsel %vm237, %v1248, 0.0
  %1319 = vadd.xlane.f32.xlu0 %v1318
  %v1320 = vpop.xlane.xlu0 %1319
  %v1321 = vmul.f32 %v1269, 0.35355338
  %v1322 = vmul.f32 %v1272, 0.35355338
  %v1323 = vmul.f32 %v1275, 0.35355338
  %v1324 = vmul.f32 %v1278, 0.35355338
  %v1325 = vmul.f32 %v1281, 0.35355338
  %v1326 = vmul.f32 %v1284, 0.35355338
  %v1327 = vmul.f32 %v1287, 0.35355338
  %v1328 = vmul.f32 %v1290, 0.35355338
  %v1329 = vmul.f32 %v1293, 0.35355338
  %v1330 = vmul.f32 %v1296, 0.35355338
  %v1331 = vmul.f32 %v1299, 0.35355338
  %v1332 = vmul.f32 %v1302, 0.35355338
  %v1333 = vmul.f32 %v1305, 0.35355338
  %v1334 = vmul.f32 %v1308, 0.35355338
  %v1335 = vmul.f32 %v1311, 0.35355338
  %v1336 = vmul.f32 %v1314, 0.35355338
  %v1337 = vmul.f32 %v1317, 0.35355338
  %v1338 = vmul.f32 %v1320, 0.35355338
  %v1339 = vperm.slane %v310, 1
  %v1340 = vlaneseq
  %v1341 = vshrl.u32 %v1340, 7
  %1343 = vset.pattern.permute.xlu0 %v1341
  %1344 = vperm.xlu0 %1343, %v1339
  %v1345 = vpop.permute.xlu0 %1344
  %v1346 = vperm.slane %v311, 1
  %v1347 = vlaneseq
  %v1348 = vshrl.u32 %v1347, 7
  %1350 = vset.pattern.permute.xlu0 %v1348
  %1351 = vperm.xlu0 %1350, %v1346
  %v1352 = vpop.permute.xlu0 %1351
  %v1353 = vperm.slane %v312, 1
  %v1354 = vlaneseq
  %v1355 = vshrl.u32 %v1354, 7
  %1357 = vset.pattern.permute.xlu0 %v1355
  %1358 = vperm.xlu0 %1357, %v1353
  %v1359 = vpop.permute.xlu0 %1358
  %v1360 = vperm.slane %v313, 1
  %v1361 = vlaneseq
  %v1362 = vshrl.u32 %v1361, 7
  %1364 = vset.pattern.permute.xlu0 %v1362
  %1365 = vperm.xlu0 %1364, %v1360
  %v1366 = vpop.permute.xlu0 %1365
  %v1367 = vperm.slane %v314, 1
  %v1368 = vlaneseq
  %v1369 = vshrl.u32 %v1368, 7
  %1371 = vset.pattern.permute.xlu0 %v1369
  %1372 = vperm.xlu0 %1371, %v1367
  %v1373 = vpop.permute.xlu0 %1372
  %v1374 = vperm.slane %v315, 1
  %v1375 = vlaneseq
  %v1376 = vshrl.u32 %v1375, 7
  %1378 = vset.pattern.permute.xlu0 %v1376
  %1379 = vperm.xlu0 %1378, %v1374
  %v1380 = vpop.permute.xlu0 %1379
  %v1381 = vperm.slane %v316, 1
  %v1382 = vlaneseq
  %v1383 = vshrl.u32 %v1382, 7
  %1385 = vset.pattern.permute.xlu0 %v1383
  %1386 = vperm.xlu0 %1385, %v1381
  %v1387 = vpop.permute.xlu0 %1386
  %v1388 = vperm.slane %v317, 1
  %v1389 = vlaneseq
  %v1390 = vshrl.u32 %v1389, 7
  %1392 = vset.pattern.permute.xlu0 %v1390
  %1393 = vperm.xlu0 %1392, %v1388
  %v1394 = vpop.permute.xlu0 %1393
  %v1395 = vperm.slane %v318, 1
  %v1396 = vlaneseq
  %v1397 = vshrl.u32 %v1396, 7
  %1399 = vset.pattern.permute.xlu0 %v1397
  %1400 = vperm.xlu0 %1399, %v1395
  %v1401 = vpop.permute.xlu0 %1400
  %v1402 = vperm.slane %v319, 1
  %v1403 = vlaneseq
  %v1404 = vshrl.u32 %v1403, 7
  %1406 = vset.pattern.permute.xlu0 %v1404
  %1407 = vperm.xlu0 %1406, %v1402
  %v1408 = vpop.permute.xlu0 %1407
  %v1409 = vperm.slane %v320, 1
  %v1410 = vlaneseq
  %v1411 = vshrl.u32 %v1410, 7
  %1413 = vset.pattern.permute.xlu0 %v1411
  %1414 = vperm.xlu0 %1413, %v1409
  %v1415 = vpop.permute.xlu0 %1414
  %v1416 = vperm.slane %v321, 1
  %v1417 = vlaneseq
  %v1418 = vshrl.u32 %v1417, 7
  %1420 = vset.pattern.permute.xlu0 %v1418
  %1421 = vperm.xlu0 %1420, %v1416
  %v1422 = vpop.permute.xlu0 %1421
  %v1423 = vperm.slane %v322, 1
  %v1424 = vlaneseq
  %v1425 = vshrl.u32 %v1424, 7
  %1427 = vset.pattern.permute.xlu0 %v1425
  %1428 = vperm.xlu0 %1427, %v1423
  %v1429 = vpop.permute.xlu0 %1428
  %v1430 = vperm.slane %v323, 1
  %v1431 = vlaneseq
  %v1432 = vshrl.u32 %v1431, 7
  %1434 = vset.pattern.permute.xlu0 %v1432
  %1435 = vperm.xlu0 %1434, %v1430
  %v1436 = vpop.permute.xlu0 %1435
  %v1437 = vperm.slane %v324, 1
  %v1438 = vlaneseq
  %v1439 = vshrl.u32 %v1438, 7
  %1441 = vset.pattern.permute.xlu0 %v1439
  %1442 = vperm.xlu0 %1441, %v1437
  %v1443 = vpop.permute.xlu0 %1442
  %v1444 = vperm.slane %v325, 1
  %v1445 = vlaneseq
  %v1446 = vshrl.u32 %v1445, 7
  %1448 = vset.pattern.permute.xlu0 %v1446
  %1449 = vperm.xlu0 %1448, %v1444
  %v1450 = vpop.permute.xlu0 %1449
  %v1451 = vperm.slane %v326, 1
  %v1452 = vlaneseq
  %v1453 = vshrl.u32 %v1452, 7
  %1455 = vset.pattern.permute.xlu0 %v1453
  %1456 = vperm.xlu0 %1455, %v1451
  %v1457 = vpop.permute.xlu0 %1456
  %v1458 = vperm.slane %v327, 1
  %v1459 = vlaneseq
  %v1460 = vshrl.u32 %v1459, 7
  %1462 = vset.pattern.permute.xlu0 %v1460
  %1463 = vperm.xlu0 %1462, %v1458
  %v1464 = vpop.permute.xlu0 %1463
  %v1483 = vsub.f32 %v1321, %v1345
  %v1484 = vsub.f32 %v1322, %v1352
  %v1485 = vsub.f32 %v1323, %v1359
  %v1486 = vsub.f32 %v1324, %v1366
  %v1487 = vsub.f32 %v1325, %v1373
  %v1488 = vsub.f32 %v1326, %v1380
  %v1489 = vsub.f32 %v1327, %v1387
  %v1490 = vsub.f32 %v1328, %v1394
  %v1491 = vsub.f32 %v1329, %v1401
  %v1492 = vsub.f32 %v1330, %v1408
  %v1493 = vsub.f32 %v1331, %v1415
  %v1494 = vsub.f32 %v1332, %v1422
  %v1495 = vsub.f32 %v1333, %v1429
  %v1496 = vsub.f32 %v1334, %v1436
  %v1497 = vsub.f32 %v1335, %v1443
  %v1498 = vsub.f32 %v1336, %v1450
  %v1499 = vsub.f32 %v1337, %v1457
  %v1500 = vsub.f32 %v1338, %v1464
  %v1501 = vperm.slane %v94, 1
  %v1502 = vlaneseq
  %v1503 = vshrl.u32 %v1502, 7
  %1505 = vset.pattern.permute.xlu0 %v1503
  %1506 = vperm.xlu0 %1505, %v1501
  %v1507 = vpop.permute.xlu0 %1506
  %v1508 = vperm.slane %v95, 1
  %v1509 = vlaneseq
  %v1510 = vshrl.u32 %v1509, 7
  %1512 = vset.pattern.permute.xlu0 %v1510
  %1513 = vperm.xlu0 %1512, %v1508
  %v1514 = vpop.permute.xlu0 %1513
  %v1515 = vperm.slane %v96, 1
  %v1516 = vlaneseq
  %v1517 = vshrl.u32 %v1516, 7
  %1519 = vset.pattern.permute.xlu0 %v1517
  %1520 = vperm.xlu0 %1519, %v1515
  %v1521 = vpop.permute.xlu0 %1520
  %v1522 = vperm.slane %v97, 1
  %v1523 = vlaneseq
  %v1524 = vshrl.u32 %v1523, 7
  %1526 = vset.pattern.permute.xlu0 %v1524
  %1527 = vperm.xlu0 %1526, %v1522
  %v1528 = vpop.permute.xlu0 %1527
  %v1529 = vperm.slane %v98, 1
  %v1530 = vlaneseq
  %v1531 = vshrl.u32 %v1530, 7
  %1533 = vset.pattern.permute.xlu0 %v1531
  %1534 = vperm.xlu0 %1533, %v1529
  %v1535 = vpop.permute.xlu0 %1534
  %v1536 = vperm.slane %v99, 1
  %v1537 = vlaneseq
  %v1538 = vshrl.u32 %v1537, 7
  %1540 = vset.pattern.permute.xlu0 %v1538
  %1541 = vperm.xlu0 %1540, %v1536
  %v1542 = vpop.permute.xlu0 %1541
  %v1543 = vperm.slane %v100, 1
  %v1544 = vlaneseq
  %v1545 = vshrl.u32 %v1544, 7
  %1547 = vset.pattern.permute.xlu0 %v1545
  %1548 = vperm.xlu0 %1547, %v1543
  %v1549 = vpop.permute.xlu0 %1548
  %v1550 = vperm.slane %v101, 1
  %v1551 = vlaneseq
  %v1552 = vshrl.u32 %v1551, 7
  %1554 = vset.pattern.permute.xlu0 %v1552
  %1555 = vperm.xlu0 %1554, %v1550
  %v1556 = vpop.permute.xlu0 %1555
  %v1557 = vperm.slane %v102, 1
  %v1558 = vlaneseq
  %v1559 = vshrl.u32 %v1558, 7
  %1561 = vset.pattern.permute.xlu0 %v1559
  %1562 = vperm.xlu0 %1561, %v1557
  %v1563 = vpop.permute.xlu0 %1562
  %v1564 = vperm.slane %v103, 1
  %v1565 = vlaneseq
  %v1566 = vshrl.u32 %v1565, 7
  %1568 = vset.pattern.permute.xlu0 %v1566
  %1569 = vperm.xlu0 %1568, %v1564
  %v1570 = vpop.permute.xlu0 %1569
  %v1571 = vperm.slane %v104, 1
  %v1572 = vlaneseq
  %v1573 = vshrl.u32 %v1572, 7
  %1575 = vset.pattern.permute.xlu0 %v1573
  %1576 = vperm.xlu0 %1575, %v1571
  %v1577 = vpop.permute.xlu0 %1576
  %v1578 = vperm.slane %v105, 1
  %v1579 = vlaneseq
  %v1580 = vshrl.u32 %v1579, 7
  %1582 = vset.pattern.permute.xlu0 %v1580
  %1583 = vperm.xlu0 %1582, %v1578
  %v1584 = vpop.permute.xlu0 %1583
  %v1585 = vperm.slane %v106, 1
  %v1586 = vlaneseq
  %v1587 = vshrl.u32 %v1586, 7
  %1589 = vset.pattern.permute.xlu0 %v1587
  %1590 = vperm.xlu0 %1589, %v1585
  %v1591 = vpop.permute.xlu0 %1590
  %v1592 = vperm.slane %v107, 1
  %v1593 = vlaneseq
  %v1594 = vshrl.u32 %v1593, 7
  %1596 = vset.pattern.permute.xlu0 %v1594
  %1597 = vperm.xlu0 %1596, %v1592
  %v1598 = vpop.permute.xlu0 %1597
  %v1599 = vperm.slane %v108, 1
  %v1600 = vlaneseq
  %v1601 = vshrl.u32 %v1600, 7
  %1603 = vset.pattern.permute.xlu0 %v1601
  %1604 = vperm.xlu0 %1603, %v1599
  %v1605 = vpop.permute.xlu0 %1604
  %v1606 = vperm.slane %v109, 1
  %v1607 = vlaneseq
  %v1608 = vshrl.u32 %v1607, 7
  %1610 = vset.pattern.permute.xlu0 %v1608
  %1611 = vperm.xlu0 %1610, %v1606
  %v1612 = vpop.permute.xlu0 %1611
  %v1613 = vperm.slane %v110, 1
  %v1614 = vlaneseq
  %v1615 = vshrl.u32 %v1614, 7
  %1617 = vset.pattern.permute.xlu0 %v1615
  %1618 = vperm.xlu0 %1617, %v1613
  %v1619 = vpop.permute.xlu0 %1618
  %v1620 = vperm.slane %v111, 1
  %v1621 = vlaneseq
  %v1622 = vshrl.u32 %v1621, 7
  %1624 = vset.pattern.permute.xlu0 %v1622
  %1625 = vperm.xlu0 %1624, %v1620
  %v1626 = vpop.permute.xlu0 %1625
  %v1645 = vadd.f32 %v1483, %v1507
  %v1646 = vadd.f32 %v1484, %v1514
  %v1647 = vadd.f32 %v1485, %v1521
  %v1648 = vadd.f32 %v1486, %v1528
  %v1649 = vadd.f32 %v1487, %v1535
  %v1650 = vadd.f32 %v1488, %v1542
  %v1651 = vadd.f32 %v1489, %v1549
  %v1652 = vadd.f32 %v1490, %v1556
  %v1653 = vadd.f32 %v1491, %v1563
  %v1654 = vadd.f32 %v1492, %v1570
  %v1655 = vadd.f32 %v1493, %v1577
  %v1656 = vadd.f32 %v1494, %v1584
  %v1657 = vadd.f32 %v1495, %v1591
  %v1658 = vadd.f32 %v1496, %v1598
  %v1659 = vadd.f32 %v1497, %v1605
  %v1660 = vadd.f32 %v1498, %v1612
  %v1661 = vadd.f32 %v1499, %v1619
  %v1662 = vadd.f32 %v1500, %v1626
  %vm1663 = vcmp.lt.s32.totalorder %v116, 2
  %1682 = vset.pattern.permute.xlu0 0
  %1683 = vperm.xlu0 %1682, %v1645
  %v1684 = vpop.permute.xlu0 %1683
  %1685 = vset.pattern.permute.xlu0 0
  %1686 = vperm.xlu0 %1685, %v1646
  %v1687 = vpop.permute.xlu0 %1686
  %1688 = vset.pattern.permute.xlu0 0
  %1689 = vperm.xlu0 %1688, %v1647
  %v1690 = vpop.permute.xlu0 %1689
  %1691 = vset.pattern.permute.xlu0 0
  %1692 = vperm.xlu0 %1691, %v1648
  %v1693 = vpop.permute.xlu0 %1692
  %1694 = vset.pattern.permute.xlu0 0
  %1695 = vperm.xlu0 %1694, %v1649
  %v1696 = vpop.permute.xlu0 %1695
  %1697 = vset.pattern.permute.xlu0 0
  %1698 = vperm.xlu0 %1697, %v1650
  %v1699 = vpop.permute.xlu0 %1698
  %1700 = vset.pattern.permute.xlu0 0
  %1701 = vperm.xlu0 %1700, %v1651
  %v1702 = vpop.permute.xlu0 %1701
  %1703 = vset.pattern.permute.xlu0 0
  %1704 = vperm.xlu0 %1703, %v1652
  %v1705 = vpop.permute.xlu0 %1704
  %1706 = vset.pattern.permute.xlu0 0
  %1707 = vperm.xlu0 %1706, %v1653
  %v1708 = vpop.permute.xlu0 %1707
  %1709 = vset.pattern.permute.xlu0 0
  %1710 = vperm.xlu0 %1709, %v1654
  %v1711 = vpop.permute.xlu0 %1710
  %1712 = vset.pattern.permute.xlu0 0
  %1713 = vperm.xlu0 %1712, %v1655
  %v1714 = vpop.permute.xlu0 %1713
  %1715 = vset.pattern.permute.xlu0 0
  %1716 = vperm.xlu0 %1715, %v1656
  %v1717 = vpop.permute.xlu0 %1716
  %1718 = vset.pattern.permute.xlu0 0
  %1719 = vperm.xlu0 %1718, %v1657
  %v1720 = vpop.permute.xlu0 %1719
  %1721 = vset.pattern.permute.xlu0 0
  %1722 = vperm.xlu0 %1721, %v1658
  %v1723 = vpop.permute.xlu0 %1722
  %1724 = vset.pattern.permute.xlu0 0
  %1725 = vperm.xlu0 %1724, %v1659
  %v1726 = vpop.permute.xlu0 %1725
  %1727 = vset.pattern.permute.xlu0 0
  %1728 = vperm.xlu0 %1727, %v1660
  %v1729 = vpop.permute.xlu0 %1728
  %1730 = vset.pattern.permute.xlu0 0
  %1731 = vperm.xlu0 %1730, %v1661
  %v1732 = vpop.permute.xlu0 %1731
  %1733 = vset.pattern.permute.xlu0 0
  %1734 = vperm.xlu0 %1733, %v1662
  %v1735 = vpop.permute.xlu0 %1734
  %v1736 = vperm.slane %v1684, %v114
  %v1737 = vperm.slane %v1687, %v114
  %v1738 = vperm.slane %v1690, %v114
  %v1739 = vperm.slane %v1693, %v114
  %v1740 = vperm.slane %v1696, %v114
  %v1741 = vperm.slane %v1699, %v114
  %v1742 = vperm.slane %v1702, %v114
  %v1743 = vperm.slane %v1705, %v114
  %v1744 = vperm.slane %v1708, %v114
  %v1745 = vperm.slane %v1711, %v114
  %v1746 = vperm.slane %v1714, %v114
  %v1747 = vperm.slane %v1717, %v114
  %v1748 = vperm.slane %v1720, %v114
  %v1749 = vperm.slane %v1723, %v114
  %v1750 = vperm.slane %v1726, %v114
  %v1751 = vperm.slane %v1729, %v114
  %v1752 = vperm.slane %v1732, %v114
  %v1753 = vperm.slane %v1735, %v114
  %v1754 = vsel %vm779, %v1737, %v1736
  %v1755 = vsel %vm781, %v1738, %v1754
  %v1756 = vsel %vm783, %v1739, %v1755
  %v1757 = vsel %vm785, %v1740, %v1756
  %v1758 = vsel %vm787, %v1741, %v1757
  %v1759 = vsel %vm789, %v1742, %v1758
  %v1760 = vsel %vm791, %v1743, %v1759
  %v1761 = vsel %vm779, %v1745, %v1744
  %v1762 = vsel %vm781, %v1746, %v1761
  %v1763 = vsel %vm783, %v1747, %v1762
  %v1764 = vsel %vm785, %v1748, %v1763
  %v1765 = vsel %vm787, %v1749, %v1764
  %v1766 = vsel %vm789, %v1750, %v1765
  %v1767 = vsel %vm791, %v1751, %v1766
  %v1768 = vsel %vm779, %v1753, %v1752
  %v1772 = vsel %vm1663, %v1760, -1e+30
  %v1773 = vsel %vm1663, %v1767, -1e+30
  %v1774 = vsel %vm1663, %v1768, -1e+30
  %v1775 = vsel %vm237, %v1772, -inf
  %1776 = vmax.xlane.f32.xlu0 %v1775
  %v1777 = vpop.xlane.xlu0 %1776
  %v1778 = vsel %vm237, %v1773, -inf
  %1779 = vmax.xlane.f32.xlu0 %v1778
  %v1780 = vpop.xlane.xlu0 %1779
  %v1781 = vsel %vm813, %v1774, -inf
  %1782 = vmax.xlane.f32.xlu0 %v1781
  %v1783 = vpop.xlane.xlu0 %1782
  %v1784 = vmax.f32 %v117, %v1777
  %v1785 = vmax.f32 %v118, %v1780
  %v1786 = vmax.f32 %v119, %v1783
  %v1787 = vsub.f32 %v117, %v1784
  %v1788 = vsub.f32 %v118, %v1785
  %v1789 = vsub.f32 %v119, %v1786
  %v1790 = vmul.f32 %v1787, 1.442695
  %v1791 = vpow.pop %v1790
  %v1792 = vmul.f32 %v1788, 1.442695
  %v1793 = vpow.pop %v1792
  %v1794 = vmul.f32 %v1789, 1.442695
  %v1795 = vpow.pop %v1794
  %1797 = vset.pattern.permute.xlu0 1
  %1798 = vperm.xlu0 %1797, %v1784
  %v1799 = vpop.permute.xlu0 %1798
  %1802 = vset.pattern.permute.xlu0 1
  %1803 = vperm.xlu0 %1802, %v1785
  %v1804 = vpop.permute.xlu0 %1803
  %1807 = vset.pattern.permute.xlu0 1
  %1808 = vperm.xlu0 %1807, %v1786
  %v1809 = vpop.permute.xlu0 %1808
  %v1811 = vsub.f32 %v1772, %v1799
  %v1812 = vsub.f32 %v1773, %v1804
  %v1813 = vsub.f32 %v1774, %v1809
  %v1814 = vmul.f32 %v1811, 1.442695
  %v1815 = vpow.pop %v1814
  %v1816 = vmul.f32 %v1812, 1.442695
  %v1817 = vpow.pop %v1816
  %v1818 = vmul.f32 %v1813, 1.442695
  %v1819 = vpow.pop %v1818
  %v1820 = vmul.f32 %v1791, %v120
  %v1821 = vmul.f32 %v1793, %v121
  %v1822 = vmul.f32 %v1795, %v122
  %v1823 = vsel %vm237, %v1815, 0.0
  %1824 = vadd.xlane.f32.xlu0 %v1823
  %v1825 = vpop.xlane.xlu0 %1824
  %v1826 = vsel %vm237, %v1817, 0.0
  %1827 = vadd.xlane.f32.xlu0 %v1826
  %v1828 = vpop.xlane.xlu0 %1827
  %v1829 = vsel %vm813, %v1819, 0.0
  %1830 = vadd.xlane.f32.xlu0 %v1829
  %v1831 = vpop.xlane.xlu0 %1830
  %v1832 = vadd.f32 %v1820, %v1825
  %v1833 = vadd.f32 %v1821, %v1828
  %v1834 = vadd.f32 %v1822, %v1831
  %1836 = vset.pattern.permute.xlu0 1
  %1837 = vperm.xlu0 %1836, %v1791
  %v1838 = vpop.permute.xlu0 %1837
  %1841 = vset.pattern.permute.xlu0 1
  %1842 = vperm.xlu0 %1841, %v1793
  %v1843 = vpop.permute.xlu0 %1842
  %1846 = vset.pattern.permute.xlu0 1
  %1847 = vperm.xlu0 %1846, %v1795
  %v1848 = vpop.permute.xlu0 %1847
  %v1850 = vmul.f32 %v1838, %v123
  %v1851 = vmul.f32 %v1843, %v124
  %v1852 = vmul.f32 %v1848, %v125
  %v1853 = vperm.slane %v1815, 0
  %v1854 = vlaneseq
  %v1855 = vshrl.u32 %v1854, 7
  %1857 = vset.pattern.permute.xlu0 %v1855
  %1858 = vperm.xlu0 %1857, %v1853
  %v1859 = vpop.permute.xlu0 %1858
  %v1860 = vperm.slane %v1815, 1
  %v1861 = vlaneseq
  %v1862 = vshrl.u32 %v1861, 7
  %1864 = vset.pattern.permute.xlu0 %v1862
  %1865 = vperm.xlu0 %1864, %v1860
  %v1866 = vpop.permute.xlu0 %1865
  %v1867 = vperm.slane %v1815, 2
  %v1868 = vlaneseq
  %v1869 = vshrl.u32 %v1868, 7
  %1871 = vset.pattern.permute.xlu0 %v1869
  %1872 = vperm.xlu0 %1871, %v1867
  %v1873 = vpop.permute.xlu0 %1872
  %v1874 = vperm.slane %v1815, 3
  %v1875 = vlaneseq
  %v1876 = vshrl.u32 %v1875, 7
  %1878 = vset.pattern.permute.xlu0 %v1876
  %1879 = vperm.xlu0 %1878, %v1874
  %v1880 = vpop.permute.xlu0 %1879
  %v1881 = vperm.slane %v1815, 4
  %v1882 = vlaneseq
  %v1883 = vshrl.u32 %v1882, 7
  %1885 = vset.pattern.permute.xlu0 %v1883
  %1886 = vperm.xlu0 %1885, %v1881
  %v1887 = vpop.permute.xlu0 %1886
  %v1888 = vperm.slane %v1815, 5
  %v1889 = vlaneseq
  %v1890 = vshrl.u32 %v1889, 7
  %1892 = vset.pattern.permute.xlu0 %v1890
  %1893 = vperm.xlu0 %1892, %v1888
  %v1894 = vpop.permute.xlu0 %1893
  %v1895 = vperm.slane %v1815, 6
  %v1896 = vlaneseq
  %v1897 = vshrl.u32 %v1896, 7
  %1899 = vset.pattern.permute.xlu0 %v1897
  %1900 = vperm.xlu0 %1899, %v1895
  %v1901 = vpop.permute.xlu0 %1900
  %v1902 = vperm.slane %v1815, 7
  %v1903 = vlaneseq
  %v1904 = vshrl.u32 %v1903, 7
  %1906 = vset.pattern.permute.xlu0 %v1904
  %1907 = vperm.xlu0 %1906, %v1902
  %v1908 = vpop.permute.xlu0 %1907
  %v1909 = vperm.slane %v1817, 0
  %v1910 = vlaneseq
  %v1911 = vshrl.u32 %v1910, 7
  %1913 = vset.pattern.permute.xlu0 %v1911
  %1914 = vperm.xlu0 %1913, %v1909
  %v1915 = vpop.permute.xlu0 %1914
  %v1916 = vperm.slane %v1817, 1
  %v1917 = vlaneseq
  %v1918 = vshrl.u32 %v1917, 7
  %1920 = vset.pattern.permute.xlu0 %v1918
  %1921 = vperm.xlu0 %1920, %v1916
  %v1922 = vpop.permute.xlu0 %1921
  %v1923 = vperm.slane %v1817, 2
  %v1924 = vlaneseq
  %v1925 = vshrl.u32 %v1924, 7
  %1927 = vset.pattern.permute.xlu0 %v1925
  %1928 = vperm.xlu0 %1927, %v1923
  %v1929 = vpop.permute.xlu0 %1928
  %v1930 = vperm.slane %v1817, 3
  %v1931 = vlaneseq
  %v1932 = vshrl.u32 %v1931, 7
  %1934 = vset.pattern.permute.xlu0 %v1932
  %1935 = vperm.xlu0 %1934, %v1930
  %v1936 = vpop.permute.xlu0 %1935
  %v1937 = vperm.slane %v1817, 4
  %v1938 = vlaneseq
  %v1939 = vshrl.u32 %v1938, 7
  %1941 = vset.pattern.permute.xlu0 %v1939
  %1942 = vperm.xlu0 %1941, %v1937
  %v1943 = vpop.permute.xlu0 %1942
  %v1944 = vperm.slane %v1817, 5
  %v1945 = vlaneseq
  %v1946 = vshrl.u32 %v1945, 7
  %1948 = vset.pattern.permute.xlu0 %v1946
  %1949 = vperm.xlu0 %1948, %v1944
  %v1950 = vpop.permute.xlu0 %1949
  %v1951 = vperm.slane %v1817, 6
  %v1952 = vlaneseq
  %v1953 = vshrl.u32 %v1952, 7
  %1955 = vset.pattern.permute.xlu0 %v1953
  %1956 = vperm.xlu0 %1955, %v1951
  %v1957 = vpop.permute.xlu0 %1956
  %v1958 = vperm.slane %v1817, 7
  %v1959 = vlaneseq
  %v1960 = vshrl.u32 %v1959, 7
  %1962 = vset.pattern.permute.xlu0 %v1960
  %1963 = vperm.xlu0 %1962, %v1958
  %v1964 = vpop.permute.xlu0 %1963
  %v1965 = vperm.slane %v1819, 0
  %v1966 = vlaneseq
  %v1967 = vshrl.u32 %v1966, 7
  %1969 = vset.pattern.permute.xlu0 %v1967
  %1970 = vperm.xlu0 %1969, %v1965
  %v1971 = vpop.permute.xlu0 %1970
  %v1972 = vperm.slane %v1819, 1
  %v1973 = vlaneseq
  %v1974 = vshrl.u32 %v1973, 7
  %1976 = vset.pattern.permute.xlu0 %v1974
  %1977 = vperm.xlu0 %1976, %v1972
  %v1978 = vpop.permute.xlu0 %1977
  %v1979 = vmul.f32 %v1859, %v147
  %v1980 = vmul.f32 %v1866, %v148
  %v1981 = vmul.f32 %v1873, %v149
  %v1982 = vmul.f32 %v1880, %v150
  %v1983 = vmul.f32 %v1887, %v151
  %v1984 = vmul.f32 %v1894, %v152
  %v1985 = vmul.f32 %v1901, %v153
  %v1986 = vmul.f32 %v1908, %v154
  %v1987 = vmul.f32 %v1915, %v155
  %v1988 = vmul.f32 %v1922, %v156
  %v1989 = vmul.f32 %v1929, %v157
  %v1990 = vmul.f32 %v1936, %v158
  %v1991 = vmul.f32 %v1943, %v159
  %v1992 = vmul.f32 %v1950, %v160
  %v1993 = vmul.f32 %v1957, %v161
  %v1994 = vmul.f32 %v1964, %v162
  %v1995 = vmul.f32 %v1971, %v163
  %v1996 = vmul.f32 %v1978, %v164
  %vm1997 = vcmask 130112
  %v1998 = vsel %vm1997, %v1979, 0.0
  %v1999 = vrot.slane %v1998, 4
  %v2000 = vadd.f32 %v1998, %v1999
  %v2001 = vrot.slane %v2000, 2
  %v2002 = vadd.f32 %v2000, %v2001
  %v2003 = vrot.slane %v2002, 1
  %v2004 = vadd.f32 %v2002, %v2003
  %v2005 = vsel %vm1997, %v1980, 0.0
  %v2006 = vrot.slane %v2005, 4
  %v2007 = vadd.f32 %v2005, %v2006
  %v2008 = vrot.slane %v2007, 2
  %v2009 = vadd.f32 %v2007, %v2008
  %v2010 = vrot.slane %v2009, 1
  %v2011 = vadd.f32 %v2009, %v2010
  %v2012 = vsel %vm1997, %v1981, 0.0
  %v2013 = vrot.slane %v2012, 4
  %v2014 = vadd.f32 %v2012, %v2013
  %v2015 = vrot.slane %v2014, 2
  %v2016 = vadd.f32 %v2014, %v2015
  %v2017 = vrot.slane %v2016, 1
  %v2018 = vadd.f32 %v2016, %v2017
  %v2019 = vsel %vm1997, %v1982, 0.0
  %v2020 = vrot.slane %v2019, 4
  %v2021 = vadd.f32 %v2019, %v2020
  %v2022 = vrot.slane %v2021, 2
  %v2023 = vadd.f32 %v2021, %v2022
  %v2024 = vrot.slane %v2023, 1
  %v2025 = vadd.f32 %v2023, %v2024
  %v2026 = vsel %vm1997, %v1983, 0.0
  %v2027 = vrot.slane %v2026, 4
  %v2028 = vadd.f32 %v2026, %v2027
  %v2029 = vrot.slane %v2028, 2
  %v2030 = vadd.f32 %v2028, %v2029
  %v2031 = vrot.slane %v2030, 1
  %v2032 = vadd.f32 %v2030, %v2031
  %v2033 = vsel %vm1997, %v1984, 0.0
  %v2034 = vrot.slane %v2033, 4
  %v2035 = vadd.f32 %v2033, %v2034
  %v2036 = vrot.slane %v2035, 2
  %v2037 = vadd.f32 %v2035, %v2036
  %v2038 = vrot.slane %v2037, 1
  %v2039 = vadd.f32 %v2037, %v2038
  %v2040 = vsel %vm1997, %v1985, 0.0
  %v2041 = vrot.slane %v2040, 4
  %v2042 = vadd.f32 %v2040, %v2041
  %v2043 = vrot.slane %v2042, 2
  %v2044 = vadd.f32 %v2042, %v2043
  %v2045 = vrot.slane %v2044, 1
  %v2046 = vadd.f32 %v2044, %v2045
  %v2047 = vsel %vm1997, %v1986, 0.0
  %v2048 = vrot.slane %v2047, 4
  %v2049 = vadd.f32 %v2047, %v2048
  %v2050 = vrot.slane %v2049, 2
  %v2051 = vadd.f32 %v2049, %v2050
  %v2052 = vrot.slane %v2051, 1
  %v2053 = vadd.f32 %v2051, %v2052
  %v2054 = vsel %vm1997, %v1987, 0.0
  %v2055 = vrot.slane %v2054, 4
  %v2056 = vadd.f32 %v2054, %v2055
  %v2057 = vrot.slane %v2056, 2
  %v2058 = vadd.f32 %v2056, %v2057
  %v2059 = vrot.slane %v2058, 1
  %v2060 = vadd.f32 %v2058, %v2059
  %v2061 = vsel %vm1997, %v1988, 0.0
  %v2062 = vrot.slane %v2061, 4
  %v2063 = vadd.f32 %v2061, %v2062
  %v2064 = vrot.slane %v2063, 2
  %v2065 = vadd.f32 %v2063, %v2064
  %v2066 = vrot.slane %v2065, 1
  %v2067 = vadd.f32 %v2065, %v2066
  %v2068 = vsel %vm1997, %v1989, 0.0
  %v2069 = vrot.slane %v2068, 4
  %v2070 = vadd.f32 %v2068, %v2069
  %v2071 = vrot.slane %v2070, 2
  %v2072 = vadd.f32 %v2070, %v2071
  %v2073 = vrot.slane %v2072, 1
  %v2074 = vadd.f32 %v2072, %v2073
  %v2075 = vsel %vm1997, %v1990, 0.0
  %v2076 = vrot.slane %v2075, 4
  %v2077 = vadd.f32 %v2075, %v2076
  %v2078 = vrot.slane %v2077, 2
  %v2079 = vadd.f32 %v2077, %v2078
  %v2080 = vrot.slane %v2079, 1
  %v2081 = vadd.f32 %v2079, %v2080
  %v2082 = vsel %vm1997, %v1991, 0.0
  %v2083 = vrot.slane %v2082, 4
  %v2084 = vadd.f32 %v2082, %v2083
  %v2085 = vrot.slane %v2084, 2
  %v2086 = vadd.f32 %v2084, %v2085
  %v2087 = vrot.slane %v2086, 1
  %v2088 = vadd.f32 %v2086, %v2087
  %v2089 = vsel %vm1997, %v1992, 0.0
  %v2090 = vrot.slane %v2089, 4
  %v2091 = vadd.f32 %v2089, %v2090
  %v2092 = vrot.slane %v2091, 2
  %v2093 = vadd.f32 %v2091, %v2092
  %v2094 = vrot.slane %v2093, 1
  %v2095 = vadd.f32 %v2093, %v2094
  %v2096 = vsel %vm1997, %v1993, 0.0
  %v2097 = vrot.slane %v2096, 4
  %v2098 = vadd.f32 %v2096, %v2097
  %v2099 = vrot.slane %v2098, 2
  %v2100 = vadd.f32 %v2098, %v2099
  %v2101 = vrot.slane %v2100, 1
  %v2102 = vadd.f32 %v2100, %v2101
  %v2103 = vsel %vm1997, %v1994, 0.0
  %v2104 = vrot.slane %v2103, 4
  %v2105 = vadd.f32 %v2103, %v2104
  %v2106 = vrot.slane %v2105, 2
  %v2107 = vadd.f32 %v2105, %v2106
  %v2108 = vrot.slane %v2107, 1
  %v2109 = vadd.f32 %v2107, %v2108
  %v2110 = vsel %vm1997, %v1995, 0.0
  %v2111 = vrot.slane %v2110, 4
  %v2112 = vadd.f32 %v2110, %v2111
  %v2113 = vrot.slane %v2112, 2
  %v2114 = vadd.f32 %v2112, %v2113
  %v2115 = vrot.slane %v2114, 1
  %v2116 = vadd.f32 %v2114, %v2115
  %v2117 = vsel %vm1997, %v1996, 0.0
  %v2118 = vrot.slane %v2117, 4
  %v2119 = vadd.f32 %v2117, %v2118
  %v2120 = vrot.slane %v2119, 2
  %v2121 = vadd.f32 %v2119, %v2120
  %v2122 = vrot.slane %v2121, 1
  %v2123 = vadd.f32 %v2121, %v2122
  %v2142 = vsel %vm779, %v2011, %v2004
  %v2143 = vsel %vm781, %v2018, %v2142
  %v2144 = vsel %vm783, %v2025, %v2143
  %v2145 = vsel %vm785, %v2032, %v2144
  %v2146 = vsel %vm787, %v2039, %v2145
  %v2147 = vsel %vm789, %v2046, %v2146
  %v2148 = vsel %vm791, %v2053, %v2147
  %v2149 = vsel %vm779, %v2067, %v2060
  %v2150 = vsel %vm781, %v2074, %v2149
  %v2151 = vsel %vm783, %v2081, %v2150
  %v2152 = vsel %vm785, %v2088, %v2151
  %v2153 = vsel %vm787, %v2095, %v2152
  %v2154 = vsel %vm789, %v2102, %v2153
  %v2155 = vsel %vm791, %v2109, %v2154
  %v2156 = vsel %vm779, %v2123, %v2116
  %v2160 = vadd.f32 %v1850, %v2148
  %v2161 = vadd.f32 %v1851, %v2155
  %v2162 = vadd.f32 %v1852, %v2156
  %vm2163 = vcmask 7168
  %v2164 = vsel %vm2163, %v817, %v1784
  %v2165 = vsel %vm2163, %v818, %v1785
  %v2166 = vsel %vm2163, %v819, %v1786
  %vm2167 = vcmask 15360
  %2168 = vst.msk [vmem:[#allocation2] sm:$0xff] %vm2167, %v2164
  %2169 = vst.msk [vmem:[#allocation2 + $0x8] sm:$0xff] %vm2167, %v2165
  %vm2170 = vcmask 9216
  %2171 = vst.msk [vmem:[#allocation2 + $0x10] sm:$0x3] %vm2170, %v2166
  %v2172 = vsel %vm2163, %v865, %v1832
  %v2173 = vsel %vm2163, %v866, %v1833
  %v2174 = vsel %vm2163, %v867, %v1834
  %2175 = vst.msk [vmem:[#allocation3] sm:$0xff] %vm2167, %v2172
  %2176 = vst.msk [vmem:[#allocation3 + $0x8] sm:$0xff] %vm2167, %v2173
  %2177 = vst.msk [vmem:[#allocation3 + $0x10] sm:$0x3] %vm2170, %v2174
  %v2178 = vsel %vm237, %v1192, %v2160
  %v2179 = vsel %vm237, %v1193, %v2161
  %v2180 = vsel %vm237, %v1194, %v2162
  %vm2181 = vcmask 130048
  %2182 = vst.msk [vmem:[#allocation4] sm:$0xff] %vm2181, %v2178
  %2183 = vst.msk [vmem:[#allocation4 + $0x8] sm:$0xff] %vm2181, %v2179
  %vm2184 = vcmask 123904
  %2185 = vst.msk [vmem:[#allocation4 + $0x10] sm:$0x3] %vm2184, %v2180
  // Predicated region
  $region26: #{_lambda_.16} parent=0 // pred_check
    %p2186 = pneg %p20
  $region27: #{_lambda_.16} parent=0 // pred_check_branch
    %2188 = sbr.rel (%p2186) target = $region29
  $region28: #{_lambda_.16} parent=0 // pred_region
    %v2189 = vld [vmem:[#allocation3] sm:$0xff]
    %v2190 = vld [vmem:[#allocation3 + $0x8] sm:$0xff]
    %v2191 = vld [vmem:[#allocation3 + $0x10] sm:$0x3]
    %v2192 = vrcp.pop %v2189
    %v2193 = vrcp.pop %v2190
    %v2194 = vrcp.pop %v2191
    %v2195 = vld [vmem:[#allocation4] sm:$0xff]
    %v2196 = vld [vmem:[#allocation4 + $0x8] sm:$0xff]
    %v2197 = vld [vmem:[#allocation4 + $0x10] sm:$0x3]
    %2199 = vset.pattern.permute.xlu0 0
    %2200 = vperm.xlu0 %2199, %v2192
    %v2201 = vpop.permute.xlu0 %2200
    %2204 = vset.pattern.permute.xlu0 0
    %2205 = vperm.xlu0 %2204, %v2193
    %v2206 = vpop.permute.xlu0 %2205
    %2209 = vset.pattern.permute.xlu0 0
    %2210 = vperm.xlu0 %2209, %v2194
    %v2211 = vpop.permute.xlu0 %2210
    %v2213 = vmul.f32 %v2195, %v2201
    %v2214 = vmul.f32 %v2196, %v2206
    %v2215 = vmul.f32 %v2197, %v2211
    %2216 = vset.pattern.permute.xlu0 1
    %2217 = vperm.xlu0 %2216, %v2192
    %v2218 = vpop.permute.xlu0 %2217
    %2220 = vset.pattern.permute.xlu0 1
    %2221 = vperm.xlu0 %2220, %v2193
    %v2222 = vpop.permute.xlu0 %2221
    %2224 = vset.pattern.permute.xlu0 1
    %2225 = vperm.xlu0 %2224, %v2194
    %v2226 = vpop.permute.xlu0 %2225
    %v2228 = vmul.f32 %v2195, %v2218
    %v2229 = vmul.f32 %v2196, %v2222
    %v2230 = vmul.f32 %v2197, %v2226
    %v2231 = vsel %vm237, %v2213, %v2228
    %v2232 = vsel %vm237, %v2214, %v2229
    %v2233 = vsel %vm237, %v2215, %v2230
    %v2234 = vpack.c.bf16 %v2231, %v2231
    %v2235 = vpack.c.bf16 %v2232, %v2232
    %v2236 = vpack.c.bf16 %v2233, %v2233
    %vm2237 = vcmask 125952
    %2238 = vst.msk [vmem:[%s5] sm:$0xf] %vm2237, %v2234
    %2239 = vst.msk [vmem:[%s5 + $0x4] sm:$0xf] %vm2237, %v2235
    %vm2240 = vcmask 122880
    %2241 = vst.msk [vmem:[%s5 + $0x8] sm:$0x1] %vm2240, %v2236
  $region29: #{_lambda_.16} parent=0 // pred_fallthru
    _
  // Predicated region
  $region30: #{_lambda_.16} parent=0 // pred_check
    _
  $region31: #{_lambda_.16} parent=0 // pred_check_branch
    %2243 = sbr.rel (0) target = $region33
  $region32: #{_lambda_.16} parent=0 // pred_region
    _
  $region33: #{_lambda_.16} parent=0 // pred_fallthru
    _
  // Predicated region
  $region34: #{_lambda_.16} parent=0 // pred_check
    _
  $region35: #{_lambda_.16} parent=0 // pred_check_branch
    %2245 = sbr.rel (0) target = $region37
  $region36: #{_lambda_.16} parent=0 // pred_region
    _
  $region37: #{_lambda_.16} parent=0 // pred_fallthru
    _

// kernel: _lambda_.18
$region0: #{_lambda_.18}
  #allocation0 [shape = 'u32[]', space=smem, size = 0x4, offset = 0x4, fixed_abs, tag = 'smem constant byte address 0x4 - core index']
  #allocation1 [shape = 'u32[72,128]{1,0:T(1,128)}', space=vmem, size = 0x9000, scoped, tag = 'internal scratch']
  %s0 = inlined_call_operand.vmem [shape: bf16[18,16], index: 0, kind: input, shape index: {}]
  %s1 = inlined_call_operand.vmem [shape: f32[1,16], index: 1, kind: input, shape index: {}]
  %s2 = inlined_call_operand.vmem [shape: f32[1,16], index: 2, kind: input, shape index: {}]
  %s3 = inlined_call_operand.vmem [shape: bf16[16,64], index: 3, kind: input, shape index: {}]
  %s4 = inlined_call_operand.vmem [shape: f32[1,64], index: 4, kind: input, shape index: {}]
  %s5 = inlined_call_operand.vmem [shape: bf16[18,64], index: 5, kind: output, shape index: {}]
  %s6 = sld [smem:[#allocation0]]
  $region30: #{_lambda_.18} parent=0
    _
  %s8 = ssub.s32 1, %s6
  %s9 = scalar_select 0, %s8, %s6
  // Predicated region
  $region2: #{_lambda_.18} parent=0 // pred_check
    _
  $region3: #{_lambda_.18} parent=0 // pred_check_branch
    %11 = sbr.rel (0) target = $region5
  $region4: #{_lambda_.18} parent=0 // pred_region
    _
  $region5: #{_lambda_.18} parent=0 // pred_fallthru
    _
  // Predicated region
  $region6: #{_lambda_.18} parent=0 // pred_check
    _
  $region7: #{_lambda_.18} parent=0 // pred_check_branch
    %13 = sbr.rel (0) target = $region9
  $region8: #{_lambda_.18} parent=0 // pred_region
    _
  $region9: #{_lambda_.18} parent=0 // pred_fallthru
    _
  // Predicated region
  $region10: #{_lambda_.18} parent=0 // pred_check
    _
  $region11: #{_lambda_.18} parent=0 // pred_check_branch
    %15 = sbr.rel (0) target = $region13
  $region12: #{_lambda_.18} parent=0 // pred_region
    _
  $region13: #{_lambda_.18} parent=0 // pred_fallthru
    _
  // Predicated region
  $region14: #{_lambda_.18} parent=0 // pred_check
    _
  $region15: #{_lambda_.18} parent=0 // pred_check_branch
    %17 = sbr.rel (0) target = $region17
  $region16: #{_lambda_.18} parent=0 // pred_region
    _
  $region17: #{_lambda_.18} parent=0 // pred_fallthru
    _
  // Predicated region
  $region18: #{_lambda_.18} parent=0 // pred_check
    _
  $region19: #{_lambda_.18} parent=0 // pred_check_branch
    %19 = sbr.rel (0) target = $region21
  $region20: #{_lambda_.18} parent=0 // pred_region
    _
  $region21: #{_lambda_.18} parent=0 // pred_fallthru
    _
  %v21 = vld [vmem:[%s0] sm:$0xf]
  %v22 = vld [vmem:[%s0 + $0x4] sm:$0xf]
  %v23 = vld [vmem:[%s0 + $0x8] sm:$0x1]
  %v24 = vunpack.c.l.bf16 %v21
  %v25 = vunpack.c.l.bf16 %v22
  %v26 = vunpack.c.l.bf16 %v23
  %vm27 = vcmask 130048
  %v28 = vsel %vm27, %v24, 0.0
  %29 = vadd.xlane.f32.xlu0 %v28
  %v30 = vpop.xlane.xlu0 %29
  %v31 = vsel %vm27, %v25, 0.0
  %32 = vadd.xlane.f32.xlu0 %v31
  %v33 = vpop.xlane.xlu0 %32
  %vm34 = vcmask 123904
  %v35 = vsel %vm34, %v26, 0.0
  %36 = vadd.xlane.f32.xlu0 %v35
  %v37 = vpop.xlane.xlu0 %36
  %v38 = vrcp.pop 16.0
  %v39 = vmul.f32 16.0, %v38
  %v40 = vsub.f32 1.0, %v39
  %v41 = vmul.f32 %v38, %v40
  %v42 = vadd.f32 %v38, %v41
  %vm43 = vweird.f32 %v38
  %v44 = vsel %vm43, %v38, %v42
  %v45 = vmul.f32 %v30, %v44
  %v46 = vmul.f32 %v33, %v44
  %v47 = vmul.f32 %v37, %v44
  %v48 = vsub.f32 %v24, %v45
  %v49 = vsub.f32 %v25, %v46
  %v50 = vsub.f32 %v26, %v47
  %v51 = vmul.f32 %v48, %v48
  %v52 = vmul.f32 %v49, %v49
  %v53 = vmul.f32 %v50, %v50
  %v54 = vsel %vm27, %v51, 0.0
  %55 = vadd.xlane.f32.xlu0 %v54
  %v56 = vpop.xlane.xlu0 %55
  %v57 = vsel %vm27, %v52, 0.0
  %58 = vadd.xlane.f32.xlu0 %v57
  %v59 = vpop.xlane.xlu0 %58
  %v60 = vsel %vm34, %v53, 0.0
  %61 = vadd.xlane.f32.xlu0 %v60
  %v62 = vpop.xlane.xlu0 %61
  %v63 = vmul.f32 %v56, %v44
  %v64 = vmul.f32 %v59, %v44
  %v65 = vmul.f32 %v62, %v44
  %v66 = vadd.f32 %v63, 1e-05
  %v67 = vadd.f32 %v64, 1e-05
  %v68 = vadd.f32 %v65, 1e-05
  %v69 = vrsqrt.pop %v66
  %v70 = vmul.f32 %v69, %v66
  %v71 = vmul.f32 %v70, %v69
  %v72 = vmul.f32 0.5, %v71
  %v73 = vsub.f32 1.5, %v72
  %v74 = vmul.f32 %v69, %v73
  %vm75 = vweird.f32 %v66
  %vm76 = vweird.f32 %v69
  %vm77 = vmor %vm75, %vm76
  %v78 = vsel %vm77, %v69, %v74
  %v79 = vrsqrt.pop %v67
  %v80 = vmul.f32 %v79, %v67
  %v81 = vmul.f32 %v80, %v79
  %v82 = vmul.f32 0.5, %v81
  %v83 = vsub.f32 1.5, %v82
  %v84 = vmul.f32 %v79, %v83
  %vm85 = vweird.f32 %v67
  %vm86 = vweird.f32 %v79
  %vm87 = vmor %vm85, %vm86
  %v88 = vsel %vm87, %v79, %v84
  %v89 = vrsqrt.pop %v68
  %v90 = vmul.f32 %v89, %v68
  %v91 = vmul.f32 %v90, %v89
  %v92 = vmul.f32 0.5, %v91
  %v93 = vsub.f32 1.5, %v92
  %v94 = vmul.f32 %v89, %v93
  %vm95 = vweird.f32 %v68
  %vm96 = vweird.f32 %v89
  %vm97 = vmor %vm95, %vm96
  %v98 = vsel %vm97, %v89, %v94
  %v99 = vmul.f32 %v48, %v78
  %v100 = vmul.f32 %v49, %v88
  %v101 = vmul.f32 %v50, %v98
  %v102 = vld [vmem:[%s1] sm:$0x1]
  %v104 = vperm.slane %v102, 0
  %v106 = vmul.f32 %v99, %v104
  %v107 = vmul.f32 %v100, %v104
  %v108 = vmul.f32 %v101, %v104
  %v109 = vld [vmem:[%s2] sm:$0x1]
  %v111 = vperm.slane %v109, 0
  %v113 = vadd.f32 %v106, %v111
  %v114 = vadd.f32 %v107, %v111
  %v115 = vadd.f32 %v108, %v111
  %v116 = vpack.c.bf16 %v114, %v113
  %v117 = vpack.c.bf16 %v115, %v115
  %v118 = vld [vmem:[%s3] sm:$0xf]
  %v119 = vld [vmem:[%s3 + $0x4] sm:$0xf]
  %v120 = vld [vmem:[%s4] sm:$0x1]
  %v122 = vperm.slane %v120, 0
  %v126 = vunpack.c.l.b16 %v118
  %v127 = vunpack.c.l.b16 %v119
  %v128 = vpack.c.b16 %v127, %v126
  %v131 = vsel %vm27, %v116, 0
  %v134 = vsel %vm27, %v117, 0
  %136 = vmatpush.bf16.msra.mxu0 0
  %137 = vmatpush.bf16.msra.mxu0 0
  %138 = vmatpush.bf16.msra.mxu0 0
  %139 = vmatpush.bf16.msra.mxu0 0
  %140 = vmatpush.bf16.msra.mxu0 0
  %141 = vmatpush.bf16.msra.mxu0 0
  %142 = vmatpush.bf16.msra.mxu0 0
  %143 = vmatpush.bf16.msra.mxu0 %v128
  %144 = vmatmul.bf16.gmra.mxu0 %v131
  %v145 = vpop.f32.mrf.mxu0
  %v146 = vadd.f32 %v122, %v145
  %v147 = vpop.f32.mrf.mxu0
  %v148 = vadd.f32 %v122, %v147
  %149 = vmatmul.bf16.gmra.mxu0 %v134
  %v150 = vpop.f32.mrf.mxu0
  %v151 = vadd.f32 %v122, %v150
  %v152 = vpop.f32.mrf.mxu0
  %153 = vdwg.mxu0
  %v154 = vmul.f32 %v146, %v146
  %v155 = vmul.f32 %v148, %v148
  %v156 = vmul.f32 %v151, %v151
  %v157 = vmul.f32 %v146, %v154
  %v158 = vmul.f32 %v148, %v155
  %v159 = vmul.f32 %v151, %v156
  %v160 = vmul.f32 %v157, 0.044715
  %v161 = vmul.f32 %v158, 0.044715
  %v162 = vmul.f32 %v159, 0.044715
  %v163 = vadd.f32 %v146, %v160
  %v164 = vadd.f32 %v148, %v161
  %v165 = vadd.f32 %v151, %v162
  %v166 = vmul.f32 %v163, 0.7978846
  %v167 = vmul.f32 %v164, 0.7978846
  %v168 = vmul.f32 %v165, 0.7978846
  %v169 = vtanh.pop %v166
  %v170 = vtanh.pop %v167
  %v171 = vtanh.pop %v168
  %v172 = vadd.f32 %v169, 1.0
  %v173 = vadd.f32 %v170, 1.0
  %v174 = vadd.f32 %v171, 1.0
  %v175 = vmul.f32 %v172, 0.5
  %v176 = vmul.f32 %v173, 0.5
  %v177 = vmul.f32 %v174, 0.5
  %v178 = vmul.f32 %v146, %v175
  %v179 = vmul.f32 %v148, %v176
  %v180 = vmul.f32 %v151, %v177
  %v181 = vpack.c.bf16 %v178, %v178
  %v182 = vpack.c.bf16 %v179, %v179
  %v183 = vpack.c.bf16 %v180, %v180
  %vm184 = vcmask 519168
  %185 = vst.msk [vmem:[%s5] sm:$0xf] %vm184, %v181
  %186 = vst.msk [vmem:[%s5 + $0x4] sm:$0xf] %vm184, %v182
  %vm187 = vcmask 516096
  %188 = vst.msk [vmem:[%s5 + $0x8] sm:$0x1] %vm187, %v183
  // Predicated region
  $region22: #{_lambda_.18} parent=0 // pred_check
    _
  $region23: #{_lambda_.18} parent=0 // pred_check_branch
    %190 = sbr.rel (0) target = $region25
  $region24: #{_lambda_.18} parent=0 // pred_region
    _
  $region25: #{_lambda_.18} parent=0 // pred_fallthru
    _
  // Predicated region
  $region26: #{_lambda_.18} parent=0 // pred_check
    _
  $region27: #{_lambda_.18} parent=0 // pred_check_branch
    %192 = sbr.rel (0) target = $region29
  $region28: #{_lambda_.18} parent=0 // pred_region
    _
  $region29: #{_lambda_.18} parent=0 // pred_fallthru
    _

// kernel: _lambda_.19
$region0: #{_lambda_.19}
  #allocation0 [shape = 'u32[]', space=smem, size = 0x4, offset = 0x4, fixed_abs, tag = 'smem constant byte address 0x4 - core index']
  #allocation1 [shape = 'u32[72,128]{1,0:T(1,128)}', space=vmem, size = 0x9000, scoped, tag = 'internal scratch']
  %s0 = inlined_call_operand.vmem [shape: bf16[18,64], index: 0, kind: input, shape index: {}]
  %s1 = inlined_call_operand.vmem [shape: bf16[64,16], index: 1, kind: input, shape index: {}]
  %s2 = inlined_call_operand.vmem [shape: f32[1,16], index: 2, kind: input, shape index: {}]
  %s3 = inlined_call_operand.vmem [shape: bf16[18,16], index: 3, kind: input, shape index: {}]
  %s4 = inlined_call_operand.vmem [shape: bf16[18,16], index: 4, kind: output, shape index: {}]
  %s5 = sld [smem:[#allocation0]]
  $region26: #{_lambda_.19} parent=0
    _
  %s7 = ssub.s32 1, %s5
  %s8 = scalar_select 0, %s7, %s5
  // Predicated region
  $region2: #{_lambda_.19} parent=0 // pred_check
    _
  $region3: #{_lambda_.19} parent=0 // pred_check_branch
    %10 = sbr.rel (0) target = $region5
  $region4: #{_lambda_.19} parent=0 // pred_region
    _
  $region5: #{_lambda_.19} parent=0 // pred_fallthru
    _
  // Predicated region
  $region6: #{_lambda_.19} parent=0 // pred_check
    _
  $region7: #{_lambda_.19} parent=0 // pred_check_branch
    %12 = sbr.rel (0) target = $region9
  $region8: #{_lambda_.19} parent=0 // pred_region
    _
  $region9: #{_lambda_.19} parent=0 // pred_fallthru
    _
  // Predicated region
  $region10: #{_lambda_.19} parent=0 // pred_check
    _
  $region11: #{_lambda_.19} parent=0 // pred_check_branch
    %14 = sbr.rel (0) target = $region13
  $region12: #{_lambda_.19} parent=0 // pred_region
    _
  $region13: #{_lambda_.19} parent=0 // pred_fallthru
    _
  // Predicated region
  $region14: #{_lambda_.19} parent=0 // pred_check
    _
  $region15: #{_lambda_.19} parent=0 // pred_check_branch
    %16 = sbr.rel (0) target = $region17
  $region16: #{_lambda_.19} parent=0 // pred_region
    _
  $region17: #{_lambda_.19} parent=0 // pred_fallthru
    _
  %v18 = vld [vmem:[%s0] sm:$0xf]
  %v19 = vld [vmem:[%s0 + $0x4] sm:$0xf]
  %v20 = vld [vmem:[%s0 + $0x8] sm:$0x1]
  %v21 = vld [vmem:[%s1] sm:$0xf]
  %v22 = vld [vmem:[%s1 + $0x4] sm:$0xf]
  %v23 = vld [vmem:[%s1 + $0x8] sm:$0xf]
  %v24 = vld [vmem:[%s1 + $0xc] sm:$0xf]
  %v25 = vld [vmem:[%s1 + $0x10] sm:$0xf]
  %v26 = vld [vmem:[%s1 + $0x14] sm:$0xf]
  %v27 = vld [vmem:[%s1 + $0x18] sm:$0xf]
  %v28 = vld [vmem:[%s1 + $0x1c] sm:$0xf]
  %v29 = vld [vmem:[%s2] sm:$0x1]
  %v31 = vperm.slane %v29, 0
  %v36 = vunpack.c.l.b16 %v18
  %v37 = vunpack.c.l.b16 %v19
  %v38 = vunpack.c.l.b16 %v20
  %v39 = vpack.c.b16 %v37, %v36
  %v40 = vpack.c.b16 %v38, %v38
  %v49 = vunpack.c.l.b16 %v21
  %v50 = vunpack.c.l.b16 %v22
  %v51 = vunpack.c.l.b16 %v23
  %v52 = vunpack.c.l.b16 %v24
  %v53 = vunpack.c.l.b16 %v25
  %v54 = vunpack.c.l.b16 %v26
  %v55 = vunpack.c.l.b16 %v27
  %v56 = vunpack.c.l.b16 %v28
  %v57 = vpack.c.b16 %v50, %v49
  %v58 = vpack.c.b16 %v52, %v51
  %v59 = vpack.c.b16 %v54, %v53
  %v60 = vpack.c.b16 %v56, %v55
  %vm65 = vcmask 523264
  %v67 = vsel %vm65, %v39, 0
  %v70 = vsel %vm65, %v40, 0
  %72 = vmatpush.bf16.msra.mxu0 0
  %73 = vmatpush.bf16.msra.mxu0 0
  %74 = vmatpush.bf16.msra.mxu0 0
  %75 = vmatpush.bf16.msra.mxu0 0
  %76 = vmatpush.bf16.msra.mxu0 %v60
  %77 = vmatpush.bf16.msra.mxu0 %v59
  %78 = vmatpush.bf16.msra.mxu0 %v58
  %79 = vmatpush.bf16.msra.mxu0 %v57
  %80 = vmatmul.bf16.gmra.mxu0 %v67
  %v81 = vpop.f32.mrf.mxu0
  %v82 = vadd.f32 %v31, %v81
  %v83 = vpop.f32.mrf.mxu0
  %v84 = vadd.f32 %v31, %v83
  %85 = vmatmul.bf16.gmra.mxu0 %v70
  %v86 = vpop.f32.mrf.mxu0
  %v87 = vadd.f32 %v31, %v86
  %v88 = vpop.f32.mrf.mxu0
  %89 = vdwg.mxu0
  %v90 = vld [vmem:[%s3] sm:$0xf]
  %v91 = vld [vmem:[%s3 + $0x4] sm:$0xf]
  %v92 = vld [vmem:[%s3 + $0x8] sm:$0x1]
  %v93 = vunpack.c.l.bf16 %v90
  %v94 = vunpack.c.l.bf16 %v91
  %v95 = vunpack.c.l.bf16 %v92
  %v96 = vadd.f32 %v82, %v93
  %v97 = vadd.f32 %v84, %v94
  %v98 = vadd.f32 %v87, %v95
  %v99 = vpack.c.bf16 %v96, %v96
  %v100 = vpack.c.bf16 %v97, %v97
  %v101 = vpack.c.bf16 %v98, %v98
  %vm102 = vcmask 125952
  %103 = vst.msk [vmem:[%s4] sm:$0xf] %vm102, %v99
  %104 = vst.msk [vmem:[%s4 + $0x4] sm:$0xf] %vm102, %v100
  %vm105 = vcmask 122880
  %106 = vst.msk [vmem:[%s4 + $0x8] sm:$0x1] %vm105, %v101
  // Predicated region
  $region18: #{_lambda_.19} parent=0 // pred_check
    _
  $region19: #{_lambda_.19} parent=0 // pred_check_branch
    %108 = sbr.rel (0) target = $region21
  $region20: #{_lambda_.19} parent=0 // pred_region
    _
  $region21: #{_lambda_.19} parent=0 // pred_fallthru
    _
  // Predicated region
  $region22: #{_lambda_.19} parent=0 // pred_check
    _
  $region23: #{_lambda_.19} parent=0 // pred_check_branch
    %110 = sbr.rel (0) target = $region25
  $region24: #{_lambda_.19} parent=0 // pred_region
    _
  $region25: #{_lambda_.19} parent=0 // pred_fallthru
    _

// kernel: _lambda_.25
$region0: #{_lambda_.25}
  #allocation0 [shape = 'u32[]', space=smem, size = 0x4, offset = 0x4, fixed_abs, tag = 'smem constant byte address 0x4 - core index']
  #allocation1 [shape = 'u32[72,128]{1,0:T(1,128)}', space=vmem, size = 0x9000, scoped, tag = 'internal scratch']
  %s0 = inlined_call_operand.vmem [shape: bf16[2,16], index: 0, kind: input, shape index: {}]
  %s1 = inlined_call_operand.vmem [shape: f32[1,16], index: 1, kind: input, shape index: {}]
  %s2 = inlined_call_operand.vmem [shape: f32[1,16], index: 2, kind: input, shape index: {}]
  %s3 = inlined_call_operand.vmem [shape: bf16[16,3], index: 3, kind: input, shape index: {}]
  %s4 = inlined_call_operand.vmem [shape: f32[1,3], index: 4, kind: input, shape index: {}]
  %s5 = inlined_call_operand.hbm [shape: f32[2,3], index: 5, kind: output, shape index: {}]
  %s6 = sld [smem:[#allocation0]]
  $region30: #{_lambda_.25} parent=0
    _
  %s8 = ssub.s32 1, %s6
  %s9 = scalar_select 0, %s8, %s6
  $region1: #{_lambda_.25} parent=0
    #allocation2 [shape = 'u8[1024]{0}', space=vmem, size = 0x400, scoped, tag = 'output window, operand 0, single buffered']
    #allocation3 [shape = 's32[1]{0}', space=sflag, size = 0x4, scoped, tag = 'scoped memory for _lambda_.25']
    %10 = vsyncpa [#allocation3], 0
    // Predicated region
    $region2: #{_lambda_.25} parent=1 // pred_check
      _
    $region3: #{_lambda_.25} parent=1 // pred_check_branch
      %12 = sbr.rel (0) target = $region5
    $region4: #{_lambda_.25} parent=1 // pred_region
      _
    $region5: #{_lambda_.25} parent=1 // pred_fallthru
      _
    // Predicated region
    $region6: #{_lambda_.25} parent=1 // pred_check
      _
    $region7: #{_lambda_.25} parent=1 // pred_check_branch
      %14 = sbr.rel (0) target = $region9
    $region8: #{_lambda_.25} parent=1 // pred_region
      _
    $region9: #{_lambda_.25} parent=1 // pred_fallthru
      _
    // Predicated region
    $region10: #{_lambda_.25} parent=1 // pred_check
      _
    $region11: #{_lambda_.25} parent=1 // pred_check_branch
      %16 = sbr.rel (0) target = $region13
    $region12: #{_lambda_.25} parent=1 // pred_region
      _
    $region13: #{_lambda_.25} parent=1 // pred_fallthru
      _
    // Predicated region
    $region14: #{_lambda_.25} parent=1 // pred_check
      _
    $region15: #{_lambda_.25} parent=1 // pred_check_branch
      %18 = sbr.rel (0) target = $region17
    $region16: #{_lambda_.25} parent=1 // pred_region
      _
    $region17: #{_lambda_.25} parent=1 // pred_fallthru
      _
    // Predicated region
    $region18: #{_lambda_.25} parent=1 // pred_check
      _
    $region19: #{_lambda_.25} parent=1 // pred_check_branch
      %20 = sbr.rel (0) target = $region21
    $region20: #{_lambda_.25} parent=1 // pred_region
      _
    $region21: #{_lambda_.25} parent=1 // pred_fallthru
      _
    %v22 = vld [vmem:[%s0] sm:$0x1]
    %v23 = vunpack.c.l.bf16 %v22
    %vm24 = vcmask 123904
    %v25 = vsel %vm24, %v23, 0.0
    %26 = vadd.xlane.f32.xlu0 %v25
    %v27 = vpop.xlane.xlu0 %26
    %v28 = vrcp.pop 16.0
    %v29 = vmul.f32 16.0, %v28
    %v30 = vsub.f32 1.0, %v29
    %v31 = vmul.f32 %v28, %v30
    %v32 = vadd.f32 %v28, %v31
    %vm33 = vweird.f32 %v28
    %v34 = vsel %vm33, %v28, %v32
    %v35 = vmul.f32 %v27, %v34
    %v36 = vsub.f32 %v23, %v35
    %v37 = vmul.f32 %v36, %v36
    %v38 = vsel %vm24, %v37, 0.0
    %39 = vadd.xlane.f32.xlu0 %v38
    %v40 = vpop.xlane.xlu0 %39
    %v41 = vmul.f32 %v40, %v34
    %v42 = vadd.f32 %v41, 1e-06
    %v43 = vrsqrt.pop %v42
    %v44 = vmul.f32 %v43, %v42
    %v45 = vmul.f32 %v44, %v43
    %v46 = vmul.f32 0.5, %v45
    %v47 = vsub.f32 1.5, %v46
    %v48 = vmul.f32 %v43, %v47
    %vm49 = vweird.f32 %v42
    %vm50 = vweird.f32 %v43
    %vm51 = vmor %vm49, %vm50
    %v52 = vsel %vm51, %v43, %v48
    %v53 = vmul.f32 %v36, %v52
    %v54 = vld [vmem:[%s1] sm:$0x1]
    %v56 = vperm.slane %v54, 0
    %v58 = vmul.f32 %v53, %v56
    %v59 = vld [vmem:[%s2] sm:$0x1]
    %v61 = vperm.slane %v59, 0
    %v63 = vadd.f32 %v58, %v61
    %v64 = vpack.c.bf16 %v63, %v63
    %v65 = vld [vmem:[%s3] sm:$0xf]
    %v66 = vld [vmem:[%s3 + $0x4] sm:$0xf]
    %v67 = vld [vmem:[%s4] sm:$0x1]
    %v69 = vperm.slane %v67, 0
    %v73 = vunpack.c.l.b16 %v65
    %v74 = vunpack.c.l.b16 %v66
    %v75 = vpack.c.b16 %v74, %v73
    %vm77 = vcmask 130048
    %v79 = vsel %vm77, %v64, 0
    %81 = vmatpush.bf16.msra.mxu0 0
    %82 = vmatpush.bf16.msra.mxu0 0
    %83 = vmatpush.bf16.msra.mxu0 0
    %84 = vmatpush.bf16.msra.mxu0 0
    %85 = vmatpush.bf16.msra.mxu0 0
    %86 = vmatpush.bf16.msra.mxu0 0
    %87 = vmatpush.bf16.msra.mxu0 0
    %88 = vmatpush.bf16.msra.mxu0 %v75
    %89 = vmatmul.bf16.gmra.mxu0 %v79
    %v90 = vpop.f32.mrf.mxu0
    %v91 = vadd.f32 %v69, %v90
    %v92 = vpop.f32.mrf.mxu0
    %93 = vdwg.mxu0
    %vm94 = vcmask 17408
    %95 = vst.msk [vmem:[#allocation2] sm:$0x3] %vm94, %v91
    // Predicated region
    $region22: #{_lambda_.25} parent=1 // pred_check
      _
    $region23: #{_lambda_.25} parent=1 // pred_check_branch
      %97 = sbr.rel (0) target = $region25
    $region24: #{_lambda_.25} parent=1 // pred_region
      %99 = vsyncadd [#allocation3], 0
      %s101 = sshll.u32 [#allocation2], 4
      %s102 = int_to_ptr.vmem [resolvable:$true] %s101
      %s103 = sshll.u32 %s5, 4
      %s104 = int_to_ptr.hbm [resolvable:$true] %s103
      %106 = dma.vmem_to_hbm [thread:$0]  %s102, 32, %s104, [#allocation3]
    $region25: #{_lambda_.25} parent=1 // pred_fallthru
      _
    // Predicated region
    $region26: #{_lambda_.25} parent=1 // pred_check
      _
    $region27: #{_lambda_.25} parent=1 // pred_check_branch
      %108 = sbr.rel (0) target = $region29
    $region28: #{_lambda_.25} parent=1 // pred_region
      %110 = dma.done [#allocation3], 32
    $region29: #{_lambda_.25} parent=1 // pred_fallthru
      _
    %111 = vsyncpa [#allocation3], 1

</llo_original>
